<compile_context>
chip_gen: v7x
topology: tpu7x:2x2x1
jax: 0.10.0
libtpu: 0.0.40
codegen_flags: <defaults>
</compile_context>

<pallas_src>
import jax
import jax.numpy as jnp
from jax import lax
from jax.experimental import pallas as pl
from jax.experimental.pallas import tpu as pltpu

ALPHA = 0.2        # LeakyReLU negative slope
NEG = -9e15        # masked-logit fill value


def _leaky_relu(x):
    return jnp.where(x > 0, x, ALPHA * x)


def _elu(x):
    return jnp.where(x > 0, x, jnp.exp(x) - 1.0)


# ---------------------------------------------------------------------------
# Fused DAN layer kernel: op attention + machine attention (+ global pooling)
# for one batch element per grid step, all heads fused.
# ---------------------------------------------------------------------------
def _make_dan_layer_kernel(N, M, J, Dj, Dm, Ho, Hm, Dout, concat, compute_global):

    def kernel(cand_ref, fj_ref, opm_ref, fm_ref, mmask_ref, comp_ref,
               Wop_ref, Wa1o_ref, Wa2o_ref, Wm_ref, Wa1m_ref, Wa2mT_ref, WeA_ref,
               *out_refs):
        if compute_global:
            oj_ref, om_ref, gj_ref, gm_ref = out_refs
        else:
            oj_ref, om_ref = out_refs

        b = pl.program_id(0)
        f32 = jnp.float32

        hj = fj_ref[0]            # (N, Dj)
        hm = fm_ref[0]            # (M, Dm)
        opm = opm_ref[0]          # (N, 3)
        mmask = mmask_ref[0]      # (M, M)
        comp = comp_ref[0]        # (M, M*J)

        # ---------------- operation attention (all Ho heads fused) ----------------
        Wh = jnp.dot(hj, Wop_ref[...], preferred_element_type=f32)      # (N, Ho*Dout)
        Wh1 = jnp.dot(hj, Wa1o_ref[...], preferred_element_type=f32)    # (N, Ho)
        Wh2 = jnp.dot(hj, Wa2o_ref[...], preferred_element_type=f32)    # (N, Ho)

        # predecessor / successor neighbors; boundary rows fall back to "self"
        # (they are masked out by op_mask anyway)
        Wh_pre = jnp.concatenate([Wh[0:1], Wh[0:N - 1]], axis=0)
        Wh_suc = jnp.concatenate([Wh[1:N], Wh[N - 1:N]], axis=0)
        Wh2_pre = jnp.concatenate([Wh2[0:1], Wh2[0:N - 1]], axis=0)
        Wh2_suc = jnp.concatenate([Wh2[1:N], Wh2[N - 1:N]], axis=0)

        e_pre = jnp.where(opm[:, 0:1] > 0.5, NEG, _leaky_relu(Wh1 + Wh2_pre))
        e_slf = jnp.where(opm[:, 1:2] > 0.5, NEG, _leaky_relu(Wh1 + Wh2))
        e_suc = jnp.where(opm[:, 2:3] > 0.5, NEG, _leaky_relu(Wh1 + Wh2_suc))

        mx = jnp.maximum(jnp.maximum(e_pre, e_slf), e_suc)
        p_pre = jnp.exp(e_pre - mx)
        p_slf = jnp.exp(e_slf - mx)
        p_suc = jnp.exp(e_suc - mx)
        den = p_pre + p_slf + p_suc                                      # (N, Ho)

        # expand per-head scalars across each head's Dout block with a 0/1 matmul
        rE = lax.broadcasted_iota(jnp.int32, (Ho, Ho * Dout), 0)
        cE = lax.broadcasted_iota(jnp.int32, (Ho, Ho * Dout), 1)
        E = ((cE >= rE * Dout) & (cE < (rE + 1) * Dout)).astype(f32)     # (Ho, Ho*Dout)

        num = (jnp.dot(p_pre, E, preferred_element_type=f32) * Wh_pre
               + jnp.dot(p_slf, E, preferred_element_type=f32) * Wh
               + jnp.dot(p_suc, E, preferred_element_type=f32) * Wh_suc)
        hj_new = num / jnp.dot(den, E, preferred_element_type=f32)       # (N, Ho*Dout)

        if concat:
            out_j = _elu(hj_new)                                         # (N, Ho*Dout)
        else:
            acc = hj_new[:, 0:Dout]
            for h in range(1, Ho):
                acc = acc + hj_new[:, h * Dout:(h + 1) * Dout]
            out_j = _elu(acc / Ho)                                       # (N, Dout)
        oj_ref[...] = out_j[None]

        # --------------- machine attention (edge projection folded) ---------------
        Wm = jnp.dot(hm, Wm_ref[...], preferred_element_type=f32)        # (M, Hm*Dout)
        Wm1 = jnp.dot(hm, Wa1m_ref[...], preferred_element_type=f32)     # (M, Hm)
        # target-node term laid out as (Hm, M): (Hm, Dm) x (M, Dm)^T
        Wm2T = lax.dot_general(Wa2mT_ref[...], hm, (((1,), (1,)), ((), ())),
                               preferred_element_type=f32)               # (Hm, M)

        # candidate gather via scalar-prefetched SMEM indices + folded edge logits:
        #   edge_h[k, q] = sum_j comp[k, q, j] * (fea_j[cand[b, j]] @ W_edge[h] @ a3[h])
        rows = [fj_ref[0, pl.ds(cand_ref[b, j], 1), :] for j in range(J)]
        fjc = jnp.concatenate(rows, axis=0) if J > 1 else rows[0]        # (J, Dj)
        v = jnp.dot(fjc, WeA_ref[...], preferred_element_type=f32)       # (J, Hm)
        v_rep = jnp.concatenate([v] * M, axis=0)                         # (M*J, Hm)
        rK = lax.broadcasted_iota(jnp.int32, (M * J, M), 0)
        cK = lax.broadcasted_iota(jnp.int32, (M * J, M), 1)
        Krep = ((rK >= cK * J) & (rK < (cK + 1) * J)).astype(f32)        # (M*J, M)

        head_outs = []
        for h in range(Hm):
            S_h = Krep * v_rep[:, h:h + 1]                               # (M*J, M)
            edge_h = jnp.dot(comp, S_h, preferred_element_type=f32)      # (M, M)
            e_h = _leaky_relu(Wm1[:, h:h + 1] + Wm2T[h:h + 1, :] + edge_h)
            e_h = jnp.where(mmask > 0, e_h, NEG)
            p_h = jnp.exp(e_h - jnp.max(e_h, axis=-1, keepdims=True))
            att_h = p_h / jnp.sum(p_h, axis=-1, keepdims=True)           # dropout = id
            head_outs.append(jnp.dot(att_h, Wm[:, h * Dout:(h + 1) * Dout],
                                     preferred_element_type=f32))        # (M, Dout)
        if concat:
            out_m = _elu(jnp.concatenate(head_outs, axis=-1))            # (M, Hm*Dout)
        else:
            accm = head_outs[0]
            for h in range(1, Hm):
                accm = accm + head_outs[h]
            out_m = _elu(accm / Hm)                                      # (M, Dout)
        om_ref[...] = out_m[None]

        # ------------- nonzero_averaging fused into the last layer -------------
        if compute_global:
            def _nz_avg(x):
                nz = (jnp.max(jnp.abs(x), axis=-1, keepdims=True) > 0).astype(f32)
                cnt = jnp.maximum(jnp.sum(nz, axis=0, keepdims=True), 1.0)
                return jnp.sum(x, axis=0, keepdims=True) / cnt
            gj_ref[...] = _nz_avg(out_j)[None]
            gm_ref[...] = _nz_avg(out_m)[None]

    return kernel


def dan_layer(fea_j, op_mask, fea_m, mch_mask, comp_mmj, candidate, fused,
              concat, compute_global):
    B, N, Dj = fea_j.shape
    _, M, Dm = fea_m.shape
    J = candidate.shape[1]
    Ho = fused["Wa1o"].shape[1]
    Hm = fused["Wa1m"].shape[1]
    Dout = fused["Wop"].shape[1] // Ho
    out_wj = Ho * Dout if concat else Dout
    out_wm = Hm * Dout if concat else Dout

    kernel = _make_dan_layer_kernel(N, M, J, Dj, Dm, Ho, Hm, Dout, concat,
                                    compute_global)

    out_shape = [jax.ShapeDtypeStruct((B, N, out_wj), jnp.float32),
                 jax.ShapeDtypeStruct((B, M, out_wm), jnp.float32)]
    out_specs = [pl.BlockSpec((1, N, out_wj), lambda b, c: (b, 0, 0)),
                 pl.BlockSpec((1, M, out_wm), lambda b, c: (b, 0, 0))]
    if compute_global:
        out_shape += [jax.ShapeDtypeStruct((B, 1, out_wj), jnp.float32),
                      jax.ShapeDtypeStruct((B, 1, out_wm), jnp.float32)]
        out_specs += [pl.BlockSpec((1, 1, out_wj), lambda b, c: (b, 0, 0)),
                      pl.BlockSpec((1, 1, out_wm), lambda b, c: (b, 0, 0))]

    grid_spec = pltpu.PrefetchScalarGridSpec(
        num_scalar_prefetch=1,                        # candidate indices -> SMEM
        grid=(B,),
        in_specs=[
            pl.BlockSpec((1, N, Dj), lambda b, c: (b, 0, 0)),       # fea_j
            pl.BlockSpec((1, N, 3), lambda b, c: (b, 0, 0)),        # op_mask
            pl.BlockSpec((1, M, Dm), lambda b, c: (b, 0, 0)),       # fea_m
            pl.BlockSpec((1, M, M), lambda b, c: (b, 0, 0)),        # mch_mask
            pl.BlockSpec((1, M, M * J), lambda b, c: (b, 0, 0)),    # comp_idx (flattened)
            pl.BlockSpec((Dj, Ho * Dout), lambda b, c: (0, 0)),     # W_op (heads fused)
            pl.BlockSpec((Dj, Ho), lambda b, c: (0, 0)),            # W_op @ a1
            pl.BlockSpec((Dj, Ho), lambda b, c: (0, 0)),            # W_op @ a2
            pl.BlockSpec((Dm, Hm * Dout), lambda b, c: (0, 0)),     # W_mch (heads fused)
            pl.BlockSpec((Dm, Hm), lambda b, c: (0, 0)),            # W_mch @ a1
            pl.BlockSpec((Hm, Dm), lambda b, c: (0, 0)),            # (W_mch @ a2)^T
            pl.BlockSpec((Dj, Hm), lambda b, c: (0, 0)),            # W_edge @ a3
        ],
        out_specs=out_specs,
    )
    return pl.pallas_call(
        kernel,
        out_shape=tuple(out_shape),
        grid_spec=grid_spec,
        compiler_params=pltpu.CompilerParams(dimension_semantics=("parallel",)),
    )(candidate, fea_j, op_mask, fea_m, mch_mask, comp_mmj,
      fused["Wop"], fused["Wa1o"], fused["Wa2o"],
      fused["Wm"], fused["Wa1m"], fused["Wa2mT"], fused["WeA"])


# ---------------------------------------------------------------------------
# Parameters
# ---------------------------------------------------------------------------
def _xavier(key, shape, fan_in, fan_out, gain=1.414):
    bound = gain * (6.0 / (fan_in + fan_out)) ** 0.5
    return jax.random.uniform(key, shape, jnp.float32, -bound, bound)


def init_dan_params(key, fea_j_dim, fea_m_dim, heads_oab, heads_mab, out_dims):
    n_layers = len(out_dims)
    mid = list(out_dims[:-1])
    j_in = [fea_j_dim] + mid
    m_in = [fea_m_dim] + mid
    h_oab_prev = [1] + list(heads_oab)
    h_mab_prev = [1] + list(heads_mab)
    params = []
    for i in range(n_layers):
        in_j = h_oab_prev[i] * j_in[i]        # op input dim & edge input dim
        in_m = h_mab_prev[i] * m_in[i]        # machine input dim
        out = out_dims[i]
        ho, hm = heads_oab[i], heads_mab[i]
        key, k0, k1, k2, k3, k4 = jax.random.split(key, 6)
        params.append(dict(
            W_op=_xavier(k0, (ho, in_j, out), in_j, out),
            a_op=_xavier(k1, (ho, 2, out), 2 * out, 1),
            W_mch=_xavier(k2, (hm, in_m, out), in_m, out),
            W_edge=_xavier(k3, (hm, in_j, out), in_j, out),
            a_mch=_xavier(k4, (hm, 3, out), 3 * out, 1),
        ))
    return params


def _fuse_layer_params(layer):
    """Fold per-head weights into head-fused / analytically-folded forms."""
    W_op, a_op = layer["W_op"], layer["a_op"]          # (Ho, Dj, Do), (Ho, 2, Do)
    W_m, a_m = layer["W_mch"], layer["a_mch"]          # (Hm, Dm, Do), (Hm, 3, Do)
    W_e = layer["W_edge"]                              # (Hm, Dj, Do)
    Ho, Dj, Do = W_op.shape
    Hm, Dm, _ = W_m.shape
    return dict(
        Wop=jnp.transpose(W_op, (1, 0, 2)).reshape(Dj, Ho * Do),
        Wa1o=jnp.einsum("hio,ho->ih", W_op, a_op[:, 0, :]),
        Wa2o=jnp.einsum("hio,ho->ih", W_op, a_op[:, 1, :]),
        Wm=jnp.transpose(W_m, (1, 0, 2)).reshape(Dm, Hm * Do),
        Wa1m=jnp.einsum("hio,ho->ih", W_m, a_m[:, 0, :]),
        Wa2mT=jnp.einsum("hio,ho->hi", W_m, a_m[:, 1, :]),
        WeA=jnp.einsum("hio,ho->ih", W_e, a_m[:, 2, :]),
    )


# ---------------------------------------------------------------------------
# Full forward pass (mirrors DualAttentionNetwork.forward)
# ---------------------------------------------------------------------------
def dual_attention_forward(params, fea_j, op_mask, candidate, fea_m, mch_mask, comp_idx):
    B, M, _, J = comp_idx.shape
    comp_mmj = comp_idx.reshape(B, M, M * J).astype(jnp.float32)   # free metadata reshape
    fea_j = fea_j.astype(jnp.float32)
    fea_m = fea_m.astype(jnp.float32)
    op_mask = op_mask.astype(jnp.float32)
    mch_mask = mch_mask.astype(jnp.float32)
    candidate = candidate.astype(jnp.int32)

    n_layers = len(params)
    fea_j_global = fea_m_global = None
    for i, layer in enumerate(params):
        fused = _fuse_layer_params(layer)
        last = (i == n_layers - 1)
        outs = dan_layer(fea_j, op_mask, fea_m, mch_mask, comp_mmj, candidate,
                         fused, concat=not last, compute_global=last)
        if last:
            fea_j, fea_m, gj, gm = outs
            fea_j_global = gj[:, 0, :]
            fea_m_global = gm[:, 0, :]
        else:
            fea_j, fea_m = outs
    return fea_j, fea_m, fea_j_global, fea_m_global


# ---------------------------------------------------------------------------
if __name__ == "__main__":
    key = jax.random.PRNGKey(0)
    B, N, M, J = 2, 8, 4, 3          # batch, #operations, #machines, #jobs
    FEA_J_DIM, FEA_M_DIM = 8, 6
    HEADS_OAB, HEADS_MAB = [4, 4], [4, 4]
    OUT_DIMS = [32, 16]

    key, kp, k1, k2, k3, k4 = jax.random.split(key, 6)
    params = init_dan_params(kp, FEA_J_DIM, FEA_M_DIM, HEADS_OAB, HEADS_MAB, OUT_DIMS)

    fea_j = jax.random.normal(k1, (B, N, FEA_J_DIM), jnp.float32)
    fea_m = jax.random.normal(k2, (B, M, FEA_M_DIM), jnp.float32)

    # jobs have [3, 3, 2] operations -> op indices [0..2], [3..5], [6..7]
    op_mask = jnp.zeros((B, N, 3), jnp.float32)
    op_mask = op_mask.at[:, jnp.array([0, 3, 6]), 0].set(1.0)   # first op: no predecessor
    op_mask = op_mask.at[:, jnp.array([2, 5, 7]), 2].set(1.0)   # last op: no successor
    candidate = jnp.array([[0, 3, 6], [1, 4, 6]], jnp.int32)    # (B, J)

    mch_mask = (jax.random.uniform(k3, (B, M, M)) > 0.3).astype(jnp.float32)
    mch_mask = jnp.maximum(mch_mask, jnp.eye(M, dtype=jnp.float32)[None])
    comp_idx = (jax.random.uniform(k4, (B, M, M, J)) > 0.5).astype(jnp.float32)

    fwd = jax.jit(dual_attention_forward)
    fea_j_o, fea_m_o, fea_j_g, fea_m_g = fwd(
        params, fea_j, op_mask, candidate, fea_m, mch_mask, comp_idx)

    jax.block_until_ready((fea_j_o, fea_m_o, fea_j_g, fea_m_g))
    assert fea_j_o.shape == (B, N, OUT_DIMS[-1])
    assert fea_m_o.shape == (B, M, OUT_DIMS[-1])
    assert fea_j_g.shape == (B, OUT_DIMS[-1])
    assert fea_m_g.shape == (B, OUT_DIMS[-1])
    print("KERNEL_OK")
</pallas_src>

<mosaic_0001>
module attributes {stable_mosaic.version = 11 : i64} {
  func.func @kernel(%arg0: i32, %arg1: memref<2x3xi32, #tpu.memory_space<smem>>, %arg2: memref<1x8x128xf32, #tpu.memory_space<vmem>>, %arg3: memref<1x8x3xf32, #tpu.memory_space<vmem>>, %arg4: memref<1x4x128xf32, #tpu.memory_space<vmem>>, %arg5: memref<1x4x4xf32, #tpu.memory_space<vmem>>, %arg6: memref<1x4x12xf32, #tpu.memory_space<vmem>>, %arg7: memref<128x64xf32, #tpu.memory_space<vmem>>, %arg8: memref<128x4xf32, #tpu.memory_space<vmem>>, %arg9: memref<128x4xf32, #tpu.memory_space<vmem>>, %arg10: memref<128x64xf32, #tpu.memory_space<vmem>>, %arg11: memref<128x4xf32, #tpu.memory_space<vmem>>, %arg12: memref<4x128xf32, #tpu.memory_space<vmem>>, %arg13: memref<128x4xf32, #tpu.memory_space<vmem>>, %arg14: memref<1x8x16xf32, #tpu.memory_space<vmem>>, %arg15: memref<1x4x16xf32, #tpu.memory_space<vmem>>, %arg16: memref<1x1x16xf32, #tpu.memory_space<vmem>>, %arg17: memref<1x1x16xf32, #tpu.memory_space<vmem>>) attributes {dimension_semantics = [#tpu.dimension_semantics<parallel>], iteration_bounds = array<i64: 2>, scalar_prefetch = 1 : i64, scratch_operands = 0 : i64, tpu.core_type = #tpu.core_type<tc>, window_params = [{transform_indices = @transform_0, window_bounds = array<i64: 1, 8, 128>}, {transform_indices = @transform_1, window_bounds = array<i64: 1, 8, 3>}, {transform_indices = @transform_2, window_bounds = array<i64: 1, 4, 128>}, {transform_indices = @transform_3, window_bounds = array<i64: 1, 4, 4>}, {transform_indices = @transform_4, window_bounds = array<i64: 1, 4, 12>}, {pipeline_mode = #tpu.pipeline_mode<synchronous>, transform_indices = @transform_5, window_bounds = array<i64: 128, 64>}, {pipeline_mode = #tpu.pipeline_mode<synchronous>, transform_indices = @transform_6, window_bounds = array<i64: 128, 4>}, {pipeline_mode = #tpu.pipeline_mode<synchronous>, transform_indices = @transform_7, window_bounds = array<i64: 128, 4>}, {pipeline_mode = #tpu.pipeline_mode<synchronous>, transform_indices = @transform_8, window_bounds = array<i64: 128, 64>}, {pipeline_mode = #tpu.pipeline_mode<synchronous>, transform_indices = @transform_9, window_bounds = array<i64: 128, 4>}, {pipeline_mode = #tpu.pipeline_mode<synchronous>, transform_indices = @transform_10, window_bounds = array<i64: 4, 128>}, {pipeline_mode = #tpu.pipeline_mode<synchronous>, transform_indices = @transform_11, window_bounds = array<i64: 128, 4>}, {transform_indices = @transform_12, window_bounds = array<i64: 1, 8, 16>}, {transform_indices = @transform_13, window_bounds = array<i64: 1, 4, 16>}, {transform_indices = @transform_14, window_bounds = array<i64: 1, 1, 16>}, {transform_indices = @transform_15, window_bounds = array<i64: 1, 1, 16>}]} {
    %c0 = arith.constant 0 : index
    %c0_0 = arith.constant 0 : index
    %c0_1 = arith.constant 0 : index
    %0 = vector.load %arg2[%c0, %c0_0, %c0_1] : memref<1x8x128xf32, #tpu.memory_space<vmem>>, vector<1x8x128xf32>
    %1 = vector.shape_cast %0 : vector<1x8x128xf32> to vector<8x128xf32>
    %c0_2 = arith.constant 0 : index
    %c0_3 = arith.constant 0 : index
    %c0_4 = arith.constant 0 : index
    %2 = vector.load %arg4[%c0_2, %c0_3, %c0_4] : memref<1x4x128xf32, #tpu.memory_space<vmem>>, vector<1x4x128xf32>
    %3 = vector.shape_cast %2 : vector<1x4x128xf32> to vector<4x128xf32>
    %c0_5 = arith.constant 0 : index
    %c0_6 = arith.constant 0 : index
    %c0_7 = arith.constant 0 : index
    %4 = vector.load %arg3[%c0_5, %c0_6, %c0_7] : memref<1x8x3xf32, #tpu.memory_space<vmem>>, vector<1x8x3xf32>
    %5 = vector.shape_cast %4 : vector<1x8x3xf32> to vector<8x3xf32>
    %c0_8 = arith.constant 0 : index
    %c0_9 = arith.constant 0 : index
    %c0_10 = arith.constant 0 : index
    %6 = vector.load %arg5[%c0_8, %c0_9, %c0_10] : memref<1x4x4xf32, #tpu.memory_space<vmem>>, vector<1x4x4xf32>
    %7 = vector.shape_cast %6 : vector<1x4x4xf32> to vector<4x4xf32>
    %c0_11 = arith.constant 0 : index
    %c0_12 = arith.constant 0 : index
    %c0_13 = arith.constant 0 : index
    %8 = vector.load %arg6[%c0_11, %c0_12, %c0_13] : memref<1x4x12xf32, #tpu.memory_space<vmem>>, vector<1x4x12xf32>
    %9 = vector.shape_cast %8 : vector<1x4x12xf32> to vector<4x12xf32>
    %c0_14 = arith.constant 0 : index
    %c0_15 = arith.constant 0 : index
    %10 = vector.load %arg7[%c0_14, %c0_15] : memref<128x64xf32, #tpu.memory_space<vmem>>, vector<128x64xf32>
    %cst = arith.constant dense<0.000000e+00> : vector<8x64xf32>
    %11 = tpu.matmul %1, %10, %cst {dimension_numbers = #tpu.dot_dimension_numbers<[1], [0], [0], [1], [0, 0, 1, 1], [], []>} : vector<8x128xf32>, vector<128x64xf32>, vector<8x64xf32> -> vector<8x64xf32>
    %c0_16 = arith.constant 0 : index
    %c0_17 = arith.constant 0 : index
    %12 = vector.load %arg8[%c0_16, %c0_17] : memref<128x4xf32, #tpu.memory_space<vmem>>, vector<128x4xf32>
    %cst_18 = arith.constant dense<0.000000e+00> : vector<8x4xf32>
    %13 = tpu.matmul %1, %12, %cst_18 {dimension_numbers = #tpu.dot_dimension_numbers<[1], [0], [0], [1], [0, 0, 1, 1], [], []>} : vector<8x128xf32>, vector<128x4xf32>, vector<8x4xf32> -> vector<8x4xf32>
    %c0_19 = arith.constant 0 : index
    %c0_20 = arith.constant 0 : index
    %14 = vector.load %arg9[%c0_19, %c0_20] : memref<128x4xf32, #tpu.memory_space<vmem>>, vector<128x4xf32>
    %cst_21 = arith.constant dense<0.000000e+00> : vector<8x4xf32>
    %15 = tpu.matmul %1, %14, %cst_21 {dimension_numbers = #tpu.dot_dimension_numbers<[1], [0], [0], [1], [0, 0, 1, 1], [], []>} : vector<8x128xf32>, vector<128x4xf32>, vector<8x4xf32> -> vector<8x4xf32>
    %16 = vector.extract_strided_slice %11 {offsets = [0, 0], sizes = [1, 64], strides = [1, 1]} : vector<8x64xf32> to vector<1x64xf32>
    %17 = vector.extract_strided_slice %11 {offsets = [0, 0], sizes = [7, 64], strides = [1, 1]} : vector<8x64xf32> to vector<7x64xf32>
    %18 = tpu.concatenate %16, %17 in 0 : vector<1x64xf32>, vector<7x64xf32> -> vector<8x64xf32>
    %19 = vector.extract_strided_slice %11 {offsets = [1, 0], sizes = [7, 64], strides = [1, 1]} : vector<8x64xf32> to vector<7x64xf32>
    %20 = vector.extract_strided_slice %11 {offsets = [7, 0], sizes = [1, 64], strides = [1, 1]} : vector<8x64xf32> to vector<1x64xf32>
    %21 = tpu.concatenate %19, %20 in 0 : vector<7x64xf32>, vector<1x64xf32> -> vector<8x64xf32>
    %22 = vector.extract_strided_slice %15 {offsets = [0, 0], sizes = [1, 4], strides = [1, 1]} : vector<8x4xf32> to vector<1x4xf32>
    %23 = vector.extract_strided_slice %15 {offsets = [0, 0], sizes = [7, 4], strides = [1, 1]} : vector<8x4xf32> to vector<7x4xf32>
    %24 = tpu.concatenate %22, %23 in 0 : vector<1x4xf32>, vector<7x4xf32> -> vector<8x4xf32>
    %25 = vector.extract_strided_slice %15 {offsets = [1, 0], sizes = [7, 4], strides = [1, 1]} : vector<8x4xf32> to vector<7x4xf32>
    %26 = vector.extract_strided_slice %15 {offsets = [7, 0], sizes = [1, 4], strides = [1, 1]} : vector<8x4xf32> to vector<1x4xf32>
    %27 = tpu.concatenate %25, %26 in 0 : vector<7x4xf32>, vector<1x4xf32> -> vector<8x4xf32>
    %28 = vector.extract_strided_slice %5 {offsets = [0, 0], sizes = [8, 1], strides = [1, 1]} : vector<8x3xf32> to vector<8x1xf32>
    %cst_22 = arith.constant 5.000000e-01 : f32
    %29 = vector.broadcast %cst_22 : f32 to vector<8x1xf32>
    %30 = arith.cmpf ogt, %28, %29 : vector<8x1xf32>
    %31 = arith.addf %13, %24 : vector<8x4xf32>
    %cst_23 = arith.constant 0.000000e+00 : f32
    %32 = vector.broadcast %cst_23 : f32 to vector<8x4xf32>
    %33 = arith.cmpf ogt, %31, %32 : vector<8x4xf32>
    %cst_24 = arith.constant 2.000000e-01 : f32
    %34 = vector.broadcast %cst_24 : f32 to vector<8x4xf32>
    %35 = arith.mulf %34, %31 : vector<8x4xf32>
    %36 = arith.select %33, %31, %35 : vector<8x4xi1>, vector<8x4xf32>
    %cst_25 = arith.constant -9.000000e+15 : f32
    %37 = vector.shape_cast %30 : vector<8x1xi1> to vector<8x1xi1>
    %38 = vector.broadcast %37 : vector<8x1xi1> to vector<8x4xi1>
    %39 = vector.broadcast %cst_25 : f32 to vector<8x4xf32>
    %40 = arith.select %38, %39, %36 : vector<8x4xi1>, vector<8x4xf32>
    %41 = vector.extract_strided_slice %5 {offsets = [0, 1], sizes = [8, 1], strides = [1, 1]} : vector<8x3xf32> to vector<8x1xf32>
    %cst_26 = arith.constant 5.000000e-01 : f32
    %42 = vector.broadcast %cst_26 : f32 to vector<8x1xf32>
    %43 = arith.cmpf ogt, %41, %42 : vector<8x1xf32>
    %44 = arith.addf %13, %15 : vector<8x4xf32>
    %cst_27 = arith.constant 0.000000e+00 : f32
    %45 = vector.broadcast %cst_27 : f32 to vector<8x4xf32>
    %46 = arith.cmpf ogt, %44, %45 : vector<8x4xf32>
    %cst_28 = arith.constant 2.000000e-01 : f32
    %47 = vector.broadcast %cst_28 : f32 to vector<8x4xf32>
    %48 = arith.mulf %47, %44 : vector<8x4xf32>
    %49 = arith.select %46, %44, %48 : vector<8x4xi1>, vector<8x4xf32>
    %cst_29 = arith.constant -9.000000e+15 : f32
    %50 = vector.shape_cast %43 : vector<8x1xi1> to vector<8x1xi1>
    %51 = vector.broadcast %50 : vector<8x1xi1> to vector<8x4xi1>
    %52 = vector.broadcast %cst_29 : f32 to vector<8x4xf32>
    %53 = arith.select %51, %52, %49 : vector<8x4xi1>, vector<8x4xf32>
    %54 = vector.extract_strided_slice %5 {offsets = [0, 2], sizes = [8, 1], strides = [1, 1]} : vector<8x3xf32> to vector<8x1xf32>
    %cst_30 = arith.constant 5.000000e-01 : f32
    %55 = vector.broadcast %cst_30 : f32 to vector<8x1xf32>
    %56 = arith.cmpf ogt, %54, %55 : vector<8x1xf32>
    %57 = arith.addf %13, %27 : vector<8x4xf32>
    %cst_31 = arith.constant 0.000000e+00 : f32
    %58 = vector.broadcast %cst_31 : f32 to vector<8x4xf32>
    %59 = arith.cmpf ogt, %57, %58 : vector<8x4xf32>
    %cst_32 = arith.constant 2.000000e-01 : f32
    %60 = vector.broadcast %cst_32 : f32 to vector<8x4xf32>
    %61 = arith.mulf %60, %57 : vector<8x4xf32>
    %62 = arith.select %59, %57, %61 : vector<8x4xi1>, vector<8x4xf32>
    %cst_33 = arith.constant -9.000000e+15 : f32
    %63 = vector.shape_cast %56 : vector<8x1xi1> to vector<8x1xi1>
    %64 = vector.broadcast %63 : vector<8x1xi1> to vector<8x4xi1>
    %65 = vector.broadcast %cst_33 : f32 to vector<8x4xf32>
    %66 = arith.select %64, %65, %62 : vector<8x4xi1>, vector<8x4xf32>
    %67 = arith.maximumf %40, %53 : vector<8x4xf32>
    %68 = arith.maximumf %67, %66 : vector<8x4xf32>
    %69 = arith.subf %40, %68 : vector<8x4xf32>
    %70 = math.exp %69 : vector<8x4xf32>
    %71 = arith.subf %53, %68 : vector<8x4xf32>
    %72 = math.exp %71 : vector<8x4xf32>
    %73 = arith.subf %66, %68 : vector<8x4xf32>
    %74 = math.exp %73 : vector<8x4xf32>
    %75 = arith.addf %70, %72 : vector<8x4xf32>
    %76 = arith.addf %75, %74 : vector<8x4xf32>
    %77 = tpu.iota {dimensions = array<i32: 0>} : vector<4x64xi32>
    %78 = tpu.iota {dimensions = array<i32: 1>} : vector<4x64xi32>
    %c16_i32 = arith.constant 16 : i32
    %79 = vector.broadcast %c16_i32 : i32 to vector<4x64xi32>
    %80 = arith.muli %77, %79 : vector<4x64xi32>
    %81 = arith.cmpi sge, %78, %80 : vector<4x64xi32>
    %c1_i32 = arith.constant 1 : i32
    %82 = vector.broadcast %c1_i32 : i32 to vector<4x64xi32>
    %83 = arith.addi %77, %82 : vector<4x64xi32>
    %c16_i32_34 = arith.constant 16 : i32
    %84 = vector.broadcast %c16_i32_34 : i32 to vector<4x64xi32>
    %85 = arith.muli %83, %84 : vector<4x64xi32>
    %86 = arith.cmpi slt, %78, %85 : vector<4x64xi32>
    %87 = arith.andi %81, %86 : vector<4x64xi1>
    %88 = arith.extui %87 : vector<4x64xi1> to vector<4x64xi32>
    %89 = arith.sitofp %88 : vector<4x64xi32> to vector<4x64xf32>
    %cst_35 = arith.constant dense<0.000000e+00> : vector<8x64xf32>
    %90 = tpu.matmul %70, %89, %cst_35 {dimension_numbers = #tpu.dot_dimension_numbers<[1], [0], [0], [1], [0, 0, 1, 1], [], []>} : vector<8x4xf32>, vector<4x64xf32>, vector<8x64xf32> -> vector<8x64xf32>
    %91 = arith.mulf %90, %18 : vector<8x64xf32>
    %cst_36 = arith.constant dense<0.000000e+00> : vector<8x64xf32>
    %92 = tpu.matmul %72, %89, %cst_36 {dimension_numbers = #tpu.dot_dimension_numbers<[1], [0], [0], [1], [0, 0, 1, 1], [], []>} : vector<8x4xf32>, vector<4x64xf32>, vector<8x64xf32> -> vector<8x64xf32>
    %93 = arith.mulf %92, %11 : vector<8x64xf32>
    %94 = arith.addf %91, %93 : vector<8x64xf32>
    %cst_37 = arith.constant dense<0.000000e+00> : vector<8x64xf32>
    %95 = tpu.matmul %74, %89, %cst_37 {dimension_numbers = #tpu.dot_dimension_numbers<[1], [0], [0], [1], [0, 0, 1, 1], [], []>} : vector<8x4xf32>, vector<4x64xf32>, vector<8x64xf32> -> vector<8x64xf32>
    %96 = arith.mulf %95, %21 : vector<8x64xf32>
    %97 = arith.addf %94, %96 : vector<8x64xf32>
    %cst_38 = arith.constant dense<0.000000e+00> : vector<8x64xf32>
    %98 = tpu.matmul %76, %89, %cst_38 {dimension_numbers = #tpu.dot_dimension_numbers<[1], [0], [0], [1], [0, 0, 1, 1], [], []>} : vector<8x4xf32>, vector<4x64xf32>, vector<8x64xf32> -> vector<8x64xf32>
    %99 = arith.divf %97, %98 : vector<8x64xf32>
    %100 = vector.extract_strided_slice %99 {offsets = [0, 0], sizes = [8, 16], strides = [1, 1]} : vector<8x64xf32> to vector<8x16xf32>
    %101 = vector.extract_strided_slice %99 {offsets = [0, 16], sizes = [8, 16], strides = [1, 1]} : vector<8x64xf32> to vector<8x16xf32>
    %102 = arith.addf %100, %101 : vector<8x16xf32>
    %103 = vector.extract_strided_slice %99 {offsets = [0, 32], sizes = [8, 16], strides = [1, 1]} : vector<8x64xf32> to vector<8x16xf32>
    %104 = arith.addf %102, %103 : vector<8x16xf32>
    %105 = vector.extract_strided_slice %99 {offsets = [0, 48], sizes = [8, 16], strides = [1, 1]} : vector<8x64xf32> to vector<8x16xf32>
    %106 = arith.addf %104, %105 : vector<8x16xf32>
    %cst_39 = arith.constant 4.000000e+00 : f32
    %107 = vector.broadcast %cst_39 : f32 to vector<8x16xf32>
    %108 = arith.divf %106, %107 : vector<8x16xf32>
    %cst_40 = arith.constant 0.000000e+00 : f32
    %109 = vector.broadcast %cst_40 : f32 to vector<8x16xf32>
    %110 = arith.cmpf ogt, %108, %109 : vector<8x16xf32>
    %111 = math.exp %108 : vector<8x16xf32>
    %cst_41 = arith.constant 1.000000e+00 : f32
    %112 = vector.broadcast %cst_41 : f32 to vector<8x16xf32>
    %113 = arith.subf %111, %112 : vector<8x16xf32>
    %114 = arith.select %110, %108, %113 : vector<8x16xi1>, vector<8x16xf32>
    %115 = vector.shape_cast %114 : vector<8x16xf32> to vector<1x8x16xf32>
    %c0_42 = arith.constant 0 : index
    %c0_43 = arith.constant 0 : index
    %c0_44 = arith.constant 0 : index
    %116 = vector.load %arg14[%c0_42, %c0_43, %c0_44] : memref<1x8x16xf32, #tpu.memory_space<vmem>>, vector<1x8x16xf32>
    tpu.vector_store %arg14[%c0_42, %c0_43, %c0_44], %115 {strides = array<i32>} : memref<1x8x16xf32, #tpu.memory_space<vmem>>, vector<1x8x16xf32>,
    %c0_45 = arith.constant 0 : index
    %c0_46 = arith.constant 0 : index
    %117 = vector.load %arg10[%c0_45, %c0_46] : memref<128x64xf32, #tpu.memory_space<vmem>>, vector<128x64xf32>
    %cst_47 = arith.constant dense<0.000000e+00> : vector<4x64xf32>
    %118 = tpu.matmul %3, %117, %cst_47 {dimension_numbers = #tpu.dot_dimension_numbers<[1], [0], [0], [1], [0, 0, 1, 1], [], []>} : vector<4x128xf32>, vector<128x64xf32>, vector<4x64xf32> -> vector<4x64xf32>
    %c0_48 = arith.constant 0 : index
    %c0_49 = arith.constant 0 : index
    %119 = vector.load %arg11[%c0_48, %c0_49] : memref<128x4xf32, #tpu.memory_space<vmem>>, vector<128x4xf32>
    %cst_50 = arith.constant dense<0.000000e+00> : vector<4x4xf32>
    %120 = tpu.matmul %3, %119, %cst_50 {dimension_numbers = #tpu.dot_dimension_numbers<[1], [0], [0], [1], [0, 0, 1, 1], [], []>} : vector<4x128xf32>, vector<128x4xf32>, vector<4x4xf32> -> vector<4x4xf32>
    %c0_51 = arith.constant 0 : index
    %c0_52 = arith.constant 0 : index
    %121 = vector.load %arg12[%c0_51, %c0_52] : memref<4x128xf32, #tpu.memory_space<vmem>>, vector<4x128xf32>
    %cst_53 = arith.constant dense<0.000000e+00> : vector<4x4xf32>
    %122 = tpu.matmul %121, %3, %cst_53 {dimension_numbers = #tpu.dot_dimension_numbers<[1], [1], [0], [0], [0, 0, 1, 0], [], []>} : vector<4x128xf32>, vector<4x128xf32>, vector<4x4xf32> -> vector<4x4xf32>
    %123 = arith.index_cast %arg0 : i32 to index
    %c0_54 = arith.constant 0 : index
    %124 = memref.load %arg1[%123, %c0_54] : memref<2x3xi32, #tpu.memory_space<smem>>
    %c0_55 = arith.constant 0 : index
    %125 = arith.index_cast %124 : i32 to index
    %c0_56 = arith.constant 0 : index
    %126 = vector.load %arg2[%c0_55, %125, %c0_56] : memref<1x8x128xf32, #tpu.memory_space<vmem>>, vector<1x1x128xf32>
    %127 = vector.shape_cast %126 : vector<1x1x128xf32> to vector<1x128xf32>
    %128 = arith.index_cast %arg0 : i32 to index
    %c1 = arith.constant 1 : index
    %129 = memref.load %arg1[%128, %c1] : memref<2x3xi32, #tpu.memory_space<smem>>
    %c0_57 = arith.constant 0 : index
    %130 = arith.index_cast %129 : i32 to index
    %c0_58 = arith.constant 0 : index
    %131 = vector.load %arg2[%c0_57, %130, %c0_58] : memref<1x8x128xf32, #tpu.memory_space<vmem>>, vector<1x1x128xf32>
    %132 = vector.shape_cast %131 : vector<1x1x128xf32> to vector<1x128xf32>
    %133 = arith.index_cast %arg0 : i32 to index
    %c2 = arith.constant 2 : index
    %134 = memref.load %arg1[%133, %c2] : memref<2x3xi32, #tpu.memory_space<smem>>
    %c0_59 = arith.constant 0 : index
    %135 = arith.index_cast %134 : i32 to index
    %c0_60 = arith.constant 0 : index
    %136 = vector.load %arg2[%c0_59, %135, %c0_60] : memref<1x8x128xf32, #tpu.memory_space<vmem>>, vector<1x1x128xf32>
    %137 = vector.shape_cast %136 : vector<1x1x128xf32> to vector<1x128xf32>
    %138 = tpu.concatenate %127, %132, %137 in 0 : vector<1x128xf32>, vector<1x128xf32>, vector<1x128xf32> -> vector<3x128xf32>
    %c0_61 = arith.constant 0 : index
    %c0_62 = arith.constant 0 : index
    %139 = vector.load %arg13[%c0_61, %c0_62] : memref<128x4xf32, #tpu.memory_space<vmem>>, vector<128x4xf32>
    %cst_63 = arith.constant dense<0.000000e+00> : vector<3x4xf32>
    %140 = tpu.matmul %138, %139, %cst_63 {dimension_numbers = #tpu.dot_dimension_numbers<[1], [0], [0], [1], [0, 0, 1, 1], [], []>} : vector<3x128xf32>, vector<128x4xf32>, vector<3x4xf32> -> vector<3x4xf32>
    %141 = tpu.concatenate %140, %140, %140, %140 in 0 : vector<3x4xf32>, vector<3x4xf32>, vector<3x4xf32>, vector<3x4xf32> -> vector<12x4xf32>
    %142 = tpu.iota {dimensions = array<i32: 0>} : vector<12x4xi32>
    %143 = tpu.iota {dimensions = array<i32: 1>} : vector<12x4xi32>
    %c3_i32 = arith.constant 3 : i32
    %144 = vector.broadcast %c3_i32 : i32 to vector<12x4xi32>
    %145 = arith.muli %143, %144 : vector<12x4xi32>
    %146 = arith.cmpi sge, %142, %145 : vector<12x4xi32>
    %c1_i32_64 = arith.constant 1 : i32
    %147 = vector.broadcast %c1_i32_64 : i32 to vector<12x4xi32>
    %148 = arith.addi %143, %147 : vector<12x4xi32>
    %c3_i32_65 = arith.constant 3 : i32
    %149 = vector.broadcast %c3_i32_65 : i32 to vector<12x4xi32>
    %150 = arith.muli %148, %149 : vector<12x4xi32>
    %151 = arith.cmpi slt, %142, %150 : vector<12x4xi32>
    %152 = arith.andi %146, %151 : vector<12x4xi1>
    %153 = arith.extui %152 : vector<12x4xi1> to vector<12x4xi32>
    %154 = arith.sitofp %153 : vector<12x4xi32> to vector<12x4xf32>
    %155 = vector.extract_strided_slice %141 {offsets = [0, 0], sizes = [12, 1], strides = [1, 1]} : vector<12x4xf32> to vector<12x1xf32>
    %156 = vector.broadcast %155 : vector<12x1xf32> to vector<12x4xf32>
    %157 = arith.mulf %154, %156 : vector<12x4xf32>
    %cst_66 = arith.constant dense<0.000000e+00> : vector<4x4xf32>
    %158 = tpu.matmul %9, %157, %cst_66 {dimension_numbers = #tpu.dot_dimension_numbers<[1], [0], [0], [1], [0, 0, 1, 1], [], []>} : vector<4x12xf32>, vector<12x4xf32>, vector<4x4xf32> -> vector<4x4xf32>
    %159 = vector.extract_strided_slice %120 {offsets = [0, 0], sizes = [4, 1], strides = [1, 1]} : vector<4x4xf32> to vector<4x1xf32>
    %160 = vector.extract_strided_slice %122 {offsets = [0, 0], sizes = [1, 4], strides = [1, 1]} : vector<4x4xf32> to vector<1x4xf32>
    %161 = vector.broadcast %159 : vector<4x1xf32> to vector<4x4xf32>
    %162 = vector.broadcast %160 : vector<1x4xf32> to vector<4x4xf32>
    %163 = arith.addf %161, %162 : vector<4x4xf32>
    %164 = arith.addf %163, %158 : vector<4x4xf32>
    %cst_67 = arith.constant 0.000000e+00 : f32
    %165 = vector.broadcast %cst_67 : f32 to vector<4x4xf32>
    %166 = arith.cmpf ogt, %164, %165 : vector<4x4xf32>
    %cst_68 = arith.constant 2.000000e-01 : f32
    %167 = vector.broadcast %cst_68 : f32 to vector<4x4xf32>
    %168 = arith.mulf %167, %164 : vector<4x4xf32>
    %169 = arith.select %166, %164, %168 : vector<4x4xi1>, vector<4x4xf32>
    %cst_69 = arith.constant 0.000000e+00 : f32
    %170 = vector.broadcast %cst_69 : f32 to vector<4x4xf32>
    %171 = arith.cmpf ogt, %7, %170 : vector<4x4xf32>
    %cst_70 = arith.constant -9.000000e+15 : f32
    %172 = vector.broadcast %cst_70 : f32 to vector<4x4xf32>
    %173 = arith.select %171, %169, %172 : vector<4x4xi1>, vector<4x4xf32>
    %cst_71 = arith.constant dense<0xFF800000> : vector<4xf32>
    %174 = vector.multi_reduction <maximumf>, %173, %cst_71 [1] : vector<4x4xf32> to vector<4xf32>
    %175 = vector.shape_cast %174 : vector<4xf32> to vector<4x1xf32>
    %176 = vector.broadcast %175 : vector<4x1xf32> to vector<4x4xf32>
    %177 = arith.subf %173, %176 : vector<4x4xf32>
    %178 = math.exp %177 : vector<4x4xf32>
    %cst_72 = arith.constant dense<0.000000e+00> : vector<4xf32>
    %179 = vector.multi_reduction <add>, %178, %cst_72 [1] : vector<4x4xf32> to vector<4xf32>
    %180 = vector.shape_cast %179 : vector<4xf32> to vector<4x1xf32>
    %181 = vector.broadcast %180 : vector<4x1xf32> to vector<4x4xf32>
    %182 = arith.divf %178, %181 : vector<4x4xf32>
    %183 = vector.extract_strided_slice %118 {offsets = [0, 0], sizes = [4, 16], strides = [1, 1]} : vector<4x64xf32> to vector<4x16xf32>
    %cst_73 = arith.constant dense<0.000000e+00> : vector<4x16xf32>
    %184 = tpu.matmul %182, %183, %cst_73 {dimension_numbers = #tpu.dot_dimension_numbers<[1], [0], [0], [1], [0, 0, 1, 1], [], []>} : vector<4x4xf32>, vector<4x16xf32>, vector<4x16xf32> -> vector<4x16xf32>
    %185 = vector.extract_strided_slice %141 {offsets = [0, 1], sizes = [12, 1], strides = [1, 1]} : vector<12x4xf32> to vector<12x1xf32>
    %186 = vector.broadcast %185 : vector<12x1xf32> to vector<12x4xf32>
    %187 = arith.mulf %154, %186 : vector<12x4xf32>
    %cst_74 = arith.constant dense<0.000000e+00> : vector<4x4xf32>
    %188 = tpu.matmul %9, %187, %cst_74 {dimension_numbers = #tpu.dot_dimension_numbers<[1], [0], [0], [1], [0, 0, 1, 1], [], []>} : vector<4x12xf32>, vector<12x4xf32>, vector<4x4xf32> -> vector<4x4xf32>
    %189 = vector.extract_strided_slice %120 {offsets = [0, 1], sizes = [4, 1], strides = [1, 1]} : vector<4x4xf32> to vector<4x1xf32>
    %190 = vector.extract_strided_slice %122 {offsets = [1, 0], sizes = [1, 4], strides = [1, 1]} : vector<4x4xf32> to vector<1x4xf32>
    %191 = vector.broadcast %189 : vector<4x1xf32> to vector<4x4xf32>
    %192 = vector.broadcast %190 : vector<1x4xf32> to vector<4x4xf32>
    %193 = arith.addf %191, %192 : vector<4x4xf32>
    %194 = arith.addf %193, %188 : vector<4x4xf32>
    %cst_75 = arith.constant 0.000000e+00 : f32
    %195 = vector.broadcast %cst_75 : f32 to vector<4x4xf32>
    %196 = arith.cmpf ogt, %194, %195 : vector<4x4xf32>
    %cst_76 = arith.constant 2.000000e-01 : f32
    %197 = vector.broadcast %cst_76 : f32 to vector<4x4xf32>
    %198 = arith.mulf %197, %194 : vector<4x4xf32>
    %199 = arith.select %196, %194, %198 : vector<4x4xi1>, vector<4x4xf32>
    %cst_77 = arith.constant 0.000000e+00 : f32
    %200 = vector.broadcast %cst_77 : f32 to vector<4x4xf32>
    %201 = arith.cmpf ogt, %7, %200 : vector<4x4xf32>
    %cst_78 = arith.constant -9.000000e+15 : f32
    %202 = vector.broadcast %cst_78 : f32 to vector<4x4xf32>
    %203 = arith.select %201, %199, %202 : vector<4x4xi1>, vector<4x4xf32>
    %cst_79 = arith.constant dense<0xFF800000> : vector<4xf32>
    %204 = vector.multi_reduction <maximumf>, %203, %cst_79 [1] : vector<4x4xf32> to vector<4xf32>
    %205 = vector.shape_cast %204 : vector<4xf32> to vector<4x1xf32>
    %206 = vector.broadcast %205 : vector<4x1xf32> to vector<4x4xf32>
    %207 = arith.subf %203, %206 : vector<4x4xf32>
    %208 = math.exp %207 : vector<4x4xf32>
    %cst_80 = arith.constant dense<0.000000e+00> : vector<4xf32>
    %209 = vector.multi_reduction <add>, %208, %cst_80 [1] : vector<4x4xf32> to vector<4xf32>
    %210 = vector.shape_cast %209 : vector<4xf32> to vector<4x1xf32>
    %211 = vector.broadcast %210 : vector<4x1xf32> to vector<4x4xf32>
    %212 = arith.divf %208, %211 : vector<4x4xf32>
    %213 = vector.extract_strided_slice %118 {offsets = [0, 16], sizes = [4, 16], strides = [1, 1]} : vector<4x64xf32> to vector<4x16xf32>
    %cst_81 = arith.constant dense<0.000000e+00> : vector<4x16xf32>
    %214 = tpu.matmul %212, %213, %cst_81 {dimension_numbers = #tpu.dot_dimension_numbers<[1], [0], [0], [1], [0, 0, 1, 1], [], []>} : vector<4x4xf32>, vector<4x16xf32>, vector<4x16xf32> -> vector<4x16xf32>
    %215 = vector.extract_strided_slice %141 {offsets = [0, 2], sizes = [12, 1], strides = [1, 1]} : vector<12x4xf32> to vector<12x1xf32>
    %216 = vector.broadcast %215 : vector<12x1xf32> to vector<12x4xf32>
    %217 = arith.mulf %154, %216 : vector<12x4xf32>
    %cst_82 = arith.constant dense<0.000000e+00> : vector<4x4xf32>
    %218 = tpu.matmul %9, %217, %cst_82 {dimension_numbers = #tpu.dot_dimension_numbers<[1], [0], [0], [1], [0, 0, 1, 1], [], []>} : vector<4x12xf32>, vector<12x4xf32>, vector<4x4xf32> -> vector<4x4xf32>
    %219 = vector.extract_strided_slice %120 {offsets = [0, 2], sizes = [4, 1], strides = [1, 1]} : vector<4x4xf32> to vector<4x1xf32>
    %220 = vector.extract_strided_slice %122 {offsets = [2, 0], sizes = [1, 4], strides = [1, 1]} : vector<4x4xf32> to vector<1x4xf32>
    %221 = vector.broadcast %219 : vector<4x1xf32> to vector<4x4xf32>
    %222 = vector.broadcast %220 : vector<1x4xf32> to vector<4x4xf32>
    %223 = arith.addf %221, %222 : vector<4x4xf32>
    %224 = arith.addf %223, %218 : vector<4x4xf32>
    %cst_83 = arith.constant 0.000000e+00 : f32
    %225 = vector.broadcast %cst_83 : f32 to vector<4x4xf32>
    %226 = arith.cmpf ogt, %224, %225 : vector<4x4xf32>
    %cst_84 = arith.constant 2.000000e-01 : f32
    %227 = vector.broadcast %cst_84 : f32 to vector<4x4xf32>
    %228 = arith.mulf %227, %224 : vector<4x4xf32>
    %229 = arith.select %226, %224, %228 : vector<4x4xi1>, vector<4x4xf32>
    %cst_85 = arith.constant 0.000000e+00 : f32
    %230 = vector.broadcast %cst_85 : f32 to vector<4x4xf32>
    %231 = arith.cmpf ogt, %7, %230 : vector<4x4xf32>
    %cst_86 = arith.constant -9.000000e+15 : f32
    %232 = vector.broadcast %cst_86 : f32 to vector<4x4xf32>
    %233 = arith.select %231, %229, %232 : vector<4x4xi1>, vector<4x4xf32>
    %cst_87 = arith.constant dense<0xFF800000> : vector<4xf32>
    %234 = vector.multi_reduction <maximumf>, %233, %cst_87 [1] : vector<4x4xf32> to vector<4xf32>
    %235 = vector.shape_cast %234 : vector<4xf32> to vector<4x1xf32>
    %236 = vector.broadcast %235 : vector<4x1xf32> to vector<4x4xf32>
    %237 = arith.subf %233, %236 : vector<4x4xf32>
    %238 = math.exp %237 : vector<4x4xf32>
    %cst_88 = arith.constant dense<0.000000e+00> : vector<4xf32>
    %239 = vector.multi_reduction <add>, %238, %cst_88 [1] : vector<4x4xf32> to vector<4xf32>
    %240 = vector.shape_cast %239 : vector<4xf32> to vector<4x1xf32>
    %241 = vector.broadcast %240 : vector<4x1xf32> to vector<4x4xf32>
    %242 = arith.divf %238, %241 : vector<4x4xf32>
    %243 = vector.extract_strided_slice %118 {offsets = [0, 32], sizes = [4, 16], strides = [1, 1]} : vector<4x64xf32> to vector<4x16xf32>
    %cst_89 = arith.constant dense<0.000000e+00> : vector<4x16xf32>
    %244 = tpu.matmul %242, %243, %cst_89 {dimension_numbers = #tpu.dot_dimension_numbers<[1], [0], [0], [1], [0, 0, 1, 1], [], []>} : vector<4x4xf32>, vector<4x16xf32>, vector<4x16xf32> -> vector<4x16xf32>
    %245 = vector.extract_strided_slice %141 {offsets = [0, 3], sizes = [12, 1], strides = [1, 1]} : vector<12x4xf32> to vector<12x1xf32>
    %246 = vector.broadcast %245 : vector<12x1xf32> to vector<12x4xf32>
    %247 = arith.mulf %154, %246 : vector<12x4xf32>
    %cst_90 = arith.constant dense<0.000000e+00> : vector<4x4xf32>
    %248 = tpu.matmul %9, %247, %cst_90 {dimension_numbers = #tpu.dot_dimension_numbers<[1], [0], [0], [1], [0, 0, 1, 1], [], []>} : vector<4x12xf32>, vector<12x4xf32>, vector<4x4xf32> -> vector<4x4xf32>
    %249 = vector.extract_strided_slice %120 {offsets = [0, 3], sizes = [4, 1], strides = [1, 1]} : vector<4x4xf32> to vector<4x1xf32>
    %250 = vector.extract_strided_slice %122 {offsets = [3, 0], sizes = [1, 4], strides = [1, 1]} : vector<4x4xf32> to vector<1x4xf32>
    %251 = vector.broadcast %249 : vector<4x1xf32> to vector<4x4xf32>
    %252 = vector.broadcast %250 : vector<1x4xf32> to vector<4x4xf32>
    %253 = arith.addf %251, %252 : vector<4x4xf32>
    %254 = arith.addf %253, %248 : vector<4x4xf32>
    %cst_91 = arith.constant 0.000000e+00 : f32
    %255 = vector.broadcast %cst_91 : f32 to vector<4x4xf32>
    %256 = arith.cmpf ogt, %254, %255 : vector<4x4xf32>
    %cst_92 = arith.constant 2.000000e-01 : f32
    %257 = vector.broadcast %cst_92 : f32 to vector<4x4xf32>
    %258 = arith.mulf %257, %254 : vector<4x4xf32>
    %259 = arith.select %256, %254, %258 : vector<4x4xi1>, vector<4x4xf32>
    %cst_93 = arith.constant 0.000000e+00 : f32
    %260 = vector.broadcast %cst_93 : f32 to vector<4x4xf32>
    %261 = arith.cmpf ogt, %7, %260 : vector<4x4xf32>
    %cst_94 = arith.constant -9.000000e+15 : f32
    %262 = vector.broadcast %cst_94 : f32 to vector<4x4xf32>
    %263 = arith.select %261, %259, %262 : vector<4x4xi1>, vector<4x4xf32>
    %cst_95 = arith.constant dense<0xFF800000> : vector<4xf32>
    %264 = vector.multi_reduction <maximumf>, %263, %cst_95 [1] : vector<4x4xf32> to vector<4xf32>
    %265 = vector.shape_cast %264 : vector<4xf32> to vector<4x1xf32>
    %266 = vector.broadcast %265 : vector<4x1xf32> to vector<4x4xf32>
    %267 = arith.subf %263, %266 : vector<4x4xf32>
    %268 = math.exp %267 : vector<4x4xf32>
    %cst_96 = arith.constant dense<0.000000e+00> : vector<4xf32>
    %269 = vector.multi_reduction <add>, %268, %cst_96 [1] : vector<4x4xf32> to vector<4xf32>
    %270 = vector.shape_cast %269 : vector<4xf32> to vector<4x1xf32>
    %271 = vector.broadcast %270 : vector<4x1xf32> to vector<4x4xf32>
    %272 = arith.divf %268, %271 : vector<4x4xf32>
    %273 = vector.extract_strided_slice %118 {offsets = [0, 48], sizes = [4, 16], strides = [1, 1]} : vector<4x64xf32> to vector<4x16xf32>
    %cst_97 = arith.constant dense<0.000000e+00> : vector<4x16xf32>
    %274 = tpu.matmul %272, %273, %cst_97 {dimension_numbers = #tpu.dot_dimension_numbers<[1], [0], [0], [1], [0, 0, 1, 1], [], []>} : vector<4x4xf32>, vector<4x16xf32>, vector<4x16xf32> -> vector<4x16xf32>
    %275 = arith.addf %184, %214 : vector<4x16xf32>
    %276 = arith.addf %275, %244 : vector<4x16xf32>
    %277 = arith.addf %276, %274 : vector<4x16xf32>
    %cst_98 = arith.constant 4.000000e+00 : f32
    %278 = vector.broadcast %cst_98 : f32 to vector<4x16xf32>
    %279 = arith.divf %277, %278 : vector<4x16xf32>
    %cst_99 = arith.constant 0.000000e+00 : f32
    %280 = vector.broadcast %cst_99 : f32 to vector<4x16xf32>
    %281 = arith.cmpf ogt, %279, %280 : vector<4x16xf32>
    %282 = math.exp %279 : vector<4x16xf32>
    %cst_100 = arith.constant 1.000000e+00 : f32
    %283 = vector.broadcast %cst_100 : f32 to vector<4x16xf32>
    %284 = arith.subf %282, %283 : vector<4x16xf32>
    %285 = arith.select %281, %279, %284 : vector<4x16xi1>, vector<4x16xf32>
    %286 = vector.shape_cast %285 : vector<4x16xf32> to vector<1x4x16xf32>
    %c0_101 = arith.constant 0 : index
    %c0_102 = arith.constant 0 : index
    %c0_103 = arith.constant 0 : index
    %287 = vector.load %arg15[%c0_101, %c0_102, %c0_103] : memref<1x4x16xf32, #tpu.memory_space<vmem>>, vector<1x4x16xf32>
    tpu.vector_store %arg15[%c0_101, %c0_102, %c0_103], %286 {strides = array<i32>} : memref<1x4x16xf32, #tpu.memory_space<vmem>>, vector<1x4x16xf32>,
    %288 = math.absf %114 : vector<8x16xf32>
    %cst_104 = arith.constant dense<0xFF800000> : vector<8xf32>
    %289 = vector.multi_reduction <maximumf>, %288, %cst_104 [1] : vector<8x16xf32> to vector<8xf32>
    %290 = vector.shape_cast %289 : vector<8xf32> to vector<8x1xf32>
    %cst_105 = arith.constant 0.000000e+00 : f32
    %291 = vector.broadcast %cst_105 : f32 to vector<8x1xf32>
    %292 = arith.cmpf ogt, %290, %291 : vector<8x1xf32>
    %293 = arith.extui %292 : vector<8x1xi1> to vector<8x1xi32>
    %294 = arith.sitofp %293 : vector<8x1xi32> to vector<8x1xf32>
    %cst_106 = arith.constant dense<0.000000e+00> : vector<1xf32>
    %295 = vector.multi_reduction <add>, %294, %cst_106 [0] : vector<8x1xf32> to vector<1xf32>
    %296 = vector.shape_cast %295 : vector<1xf32> to vector<1x1xf32>
    %cst_107 = arith.constant 1.000000e+00 : f32
    %297 = vector.broadcast %cst_107 : f32 to vector<1x1xf32>
    %298 = arith.maximumf %296, %297 : vector<1x1xf32>
    %cst_108 = arith.constant dense<0.000000e+00> : vector<16xf32>
    %299 = vector.multi_reduction <add>, %114, %cst_108 [0] : vector<8x16xf32> to vector<16xf32>
    %300 = vector.shape_cast %299 : vector<16xf32> to vector<1x16xf32>
    %301 = vector.broadcast %298 : vector<1x1xf32> to vector<1x16xf32>
    %302 = arith.divf %300, %301 : vector<1x16xf32>
    %303 = vector.shape_cast %302 : vector<1x16xf32> to vector<1x1x16xf32>
    %c0_109 = arith.constant 0 : index
    %c0_110 = arith.constant 0 : index
    %c0_111 = arith.constant 0 : index
    %304 = vector.load %arg16[%c0_109, %c0_110, %c0_111] : memref<1x1x16xf32, #tpu.memory_space<vmem>>, vector<1x1x16xf32>
    tpu.vector_store %arg16[%c0_109, %c0_110, %c0_111], %303 {strides = array<i32>} : memref<1x1x16xf32, #tpu.memory_space<vmem>>, vector<1x1x16xf32>,
    %305 = math.absf %285 : vector<4x16xf32>
    %cst_112 = arith.constant dense<0xFF800000> : vector<4xf32>
    %306 = vector.multi_reduction <maximumf>, %305, %cst_112 [1] : vector<4x16xf32> to vector<4xf32>
    %307 = vector.shape_cast %306 : vector<4xf32> to vector<4x1xf32>
    %cst_113 = arith.constant 0.000000e+00 : f32
    %308 = vector.broadcast %cst_113 : f32 to vector<4x1xf32>
    %309 = arith.cmpf ogt, %307, %308 : vector<4x1xf32>
    %310 = arith.extui %309 : vector<4x1xi1> to vector<4x1xi32>
    %311 = arith.sitofp %310 : vector<4x1xi32> to vector<4x1xf32>
    %cst_114 = arith.constant dense<0.000000e+00> : vector<1xf32>
    %312 = vector.multi_reduction <add>, %311, %cst_114 [0] : vector<4x1xf32> to vector<1xf32>
    %313 = vector.shape_cast %312 : vector<1xf32> to vector<1x1xf32>
    %cst_115 = arith.constant 1.000000e+00 : f32
    %314 = vector.broadcast %cst_115 : f32 to vector<1x1xf32>
    %315 = arith.maximumf %313, %314 : vector<1x1xf32>
    %cst_116 = arith.constant dense<0.000000e+00> : vector<16xf32>
    %316 = vector.multi_reduction <add>, %285, %cst_116 [0] : vector<4x16xf32> to vector<16xf32>
    %317 = vector.shape_cast %316 : vector<16xf32> to vector<1x16xf32>
    %318 = vector.broadcast %315 : vector<1x1xf32> to vector<1x16xf32>
    %319 = arith.divf %317, %318 : vector<1x16xf32>
    %320 = vector.shape_cast %319 : vector<1x16xf32> to vector<1x1x16xf32>
    %c0_117 = arith.constant 0 : index
    %c0_118 = arith.constant 0 : index
    %c0_119 = arith.constant 0 : index
    %321 = vector.load %arg17[%c0_117, %c0_118, %c0_119] : memref<1x1x16xf32, #tpu.memory_space<vmem>>, vector<1x1x16xf32>
    tpu.vector_store %arg17[%c0_117, %c0_118, %c0_119], %320 {strides = array<i32>} : memref<1x1x16xf32, #tpu.memory_space<vmem>>, vector<1x1x16xf32>,
    return
  }
  func.func @transform_0(%arg0: i32, %arg1: memref<2x3xi32, #tpu.memory_space<smem>>) -> (i32, i32, i32) {
    %c0_i32 = arith.constant 0 : i32
    %c0_i32_0 = arith.constant 0 : i32
    %c0_i32_1 = arith.constant 0 : i32
    return %arg0, %c0_i32, %c0_i32_0 : i32, i32, i32
  }
  func.func @transform_1(%arg0: i32, %arg1: memref<2x3xi32, #tpu.memory_space<smem>>) -> (i32, i32, i32) {
    %c0_i32 = arith.constant 0 : i32
    %c0_i32_0 = arith.constant 0 : i32
    %c0_i32_1 = arith.constant 0 : i32
    return %arg0, %c0_i32, %c0_i32_0 : i32, i32, i32
  }
  func.func @transform_2(%arg0: i32, %arg1: memref<2x3xi32, #tpu.memory_space<smem>>) -> (i32, i32, i32) {
    %c0_i32 = arith.constant 0 : i32
    %c0_i32_0 = arith.constant 0 : i32
    %c0_i32_1 = arith.constant 0 : i32
    return %arg0, %c0_i32, %c0_i32_0 : i32, i32, i32
  }
  func.func @transform_3(%arg0: i32, %arg1: memref<2x3xi32, #tpu.memory_space<smem>>) -> (i32, i32, i32) {
    %c0_i32 = arith.constant 0 : i32
    %c0_i32_0 = arith.constant 0 : i32
    %c0_i32_1 = arith.constant 0 : i32
    return %arg0, %c0_i32, %c0_i32_0 : i32, i32, i32
  }
  func.func @transform_4(%arg0: i32, %arg1: memref<2x3xi32, #tpu.memory_space<smem>>) -> (i32, i32, i32) {
    %c0_i32 = arith.constant 0 : i32
    %c0_i32_0 = arith.constant 0 : i32
    %c0_i32_1 = arith.constant 0 : i32
    return %arg0, %c0_i32, %c0_i32_0 : i32, i32, i32
  }
  func.func @transform_5(%arg0: i32, %arg1: memref<2x3xi32, #tpu.memory_space<smem>>) -> (i32, i32) {
    %c0_i32 = arith.constant 0 : i32
    %c0_i32_0 = arith.constant 0 : i32
    %c0_i32_1 = arith.constant 0 : i32
    return %c0_i32, %c0_i32_0 : i32, i32
  }
  func.func @transform_6(%arg0: i32, %arg1: memref<2x3xi32, #tpu.memory_space<smem>>) -> (i32, i32) {
    %c0_i32 = arith.constant 0 : i32
    %c0_i32_0 = arith.constant 0 : i32
    %c0_i32_1 = arith.constant 0 : i32
    return %c0_i32, %c0_i32_0 : i32, i32
  }
  func.func @transform_7(%arg0: i32, %arg1: memref<2x3xi32, #tpu.memory_space<smem>>) -> (i32, i32) {
    %c0_i32 = arith.constant 0 : i32
    %c0_i32_0 = arith.constant 0 : i32
    %c0_i32_1 = arith.constant 0 : i32
    return %c0_i32, %c0_i32_0 : i32, i32
  }
  func.func @transform_8(%arg0: i32, %arg1: memref<2x3xi32, #tpu.memory_space<smem>>) -> (i32, i32) {
    %c0_i32 = arith.constant 0 : i32
    %c0_i32_0 = arith.constant 0 : i32
    %c0_i32_1 = arith.constant 0 : i32
    return %c0_i32, %c0_i32_0 : i32, i32
  }
  func.func @transform_9(%arg0: i32, %arg1: memref<2x3xi32, #tpu.memory_space<smem>>) -> (i32, i32) {
    %c0_i32 = arith.constant 0 : i32
    %c0_i32_0 = arith.constant 0 : i32
    %c0_i32_1 = arith.constant 0 : i32
    return %c0_i32, %c0_i32_0 : i32, i32
  }
  func.func @transform_10(%arg0: i32, %arg1: memref<2x3xi32, #tpu.memory_space<smem>>) -> (i32, i32) {
    %c0_i32 = arith.constant 0 : i32
    %c0_i32_0 = arith.constant 0 : i32
    %c0_i32_1 = arith.constant 0 : i32
    return %c0_i32, %c0_i32_0 : i32, i32
  }
  func.func @transform_11(%arg0: i32, %arg1: memref<2x3xi32, #tpu.memory_space<smem>>) -> (i32, i32) {
    %c0_i32 = arith.constant 0 : i32
    %c0_i32_0 = arith.constant 0 : i32
    %c0_i32_1 = arith.constant 0 : i32
    return %c0_i32, %c0_i32_0 : i32, i32
  }
  func.func @transform_12(%arg0: i32, %arg1: memref<2x3xi32, #tpu.memory_space<smem>>) -> (i32, i32, i32) {
    %c0_i32 = arith.constant 0 : i32
    %c0_i32_0 = arith.constant 0 : i32
    %c0_i32_1 = arith.constant 0 : i32
    return %arg0, %c0_i32, %c0_i32_0 : i32, i32, i32
  }
  func.func @transform_13(%arg0: i32, %arg1: memref<2x3xi32, #tpu.memory_space<smem>>) -> (i32, i32, i32) {
    %c0_i32 = arith.constant 0 : i32
    %c0_i32_0 = arith.constant 0 : i32
    %c0_i32_1 = arith.constant 0 : i32
    return %arg0, %c0_i32, %c0_i32_0 : i32, i32, i32
  }
  func.func @transform_14(%arg0: i32, %arg1: memref<2x3xi32, #tpu.memory_space<smem>>) -> (i32, i32, i32) {
    %c0_i32 = arith.constant 0 : i32
    %c0_i32_0 = arith.constant 0 : i32
    %c0_i32_1 = arith.constant 0 : i32
    return %arg0, %c0_i32, %c0_i32_0 : i32, i32, i32
  }
  func.func @transform_15(%arg0: i32, %arg1: memref<2x3xi32, #tpu.memory_space<smem>>) -> (i32, i32, i32) {
    %c0_i32 = arith.constant 0 : i32
    %c0_i32_0 = arith.constant 0 : i32
    %c0_i32_1 = arith.constant 0 : i32
    return %arg0, %c0_i32, %c0_i32_0 : i32, i32, i32
  }
}

module attributes {stable_mosaic.version = 11 : i64} {
  func.func @kernel(%arg0: i32, %arg1: memref<2x3xi32, #tpu.memory_space<smem>>, %arg2: memref<1x8x8xf32, #tpu.memory_space<vmem>>, %arg3: memref<1x8x3xf32, #tpu.memory_space<vmem>>, %arg4: memref<1x4x6xf32, #tpu.memory_space<vmem>>, %arg5: memref<1x4x4xf32, #tpu.memory_space<vmem>>, %arg6: memref<1x4x12xf32, #tpu.memory_space<vmem>>, %arg7: memref<8x128xf32, #tpu.memory_space<vmem>>, %arg8: memref<8x4xf32, #tpu.memory_space<vmem>>, %arg9: memref<8x4xf32, #tpu.memory_space<vmem>>, %arg10: memref<6x128xf32, #tpu.memory_space<vmem>>, %arg11: memref<6x4xf32, #tpu.memory_space<vmem>>, %arg12: memref<4x6xf32, #tpu.memory_space<vmem>>, %arg13: memref<8x4xf32, #tpu.memory_space<vmem>>, %arg14: memref<1x8x128xf32, #tpu.memory_space<vmem>>, %arg15: memref<1x4x128xf32, #tpu.memory_space<vmem>>) attributes {dimension_semantics = [#tpu.dimension_semantics<parallel>], iteration_bounds = array<i64: 2>, scalar_prefetch = 1 : i64, scratch_operands = 0 : i64, tpu.core_type = #tpu.core_type<tc>, window_params = [{transform_indices = @transform_0, window_bounds = array<i64: 1, 8, 8>}, {transform_indices = @transform_1, window_bounds = array<i64: 1, 8, 3>}, {transform_indices = @transform_2, window_bounds = array<i64: 1, 4, 6>}, {transform_indices = @transform_3, window_bounds = array<i64: 1, 4, 4>}, {transform_indices = @transform_4, window_bounds = array<i64: 1, 4, 12>}, {pipeline_mode = #tpu.pipeline_mode<synchronous>, transform_indices = @transform_5, window_bounds = array<i64: 8, 128>}, {pipeline_mode = #tpu.pipeline_mode<synchronous>, transform_indices = @transform_6, window_bounds = array<i64: 8, 4>}, {pipeline_mode = #tpu.pipeline_mode<synchronous>, transform_indices = @transform_7, window_bounds = array<i64: 8, 4>}, {pipeline_mode = #tpu.pipeline_mode<synchronous>, transform_indices = @transform_8, window_bounds = array<i64: 6, 128>}, {pipeline_mode = #tpu.pipeline_mode<synchronous>, transform_indices = @transform_9, window_bounds = array<i64: 6, 4>}, {pipeline_mode = #tpu.pipeline_mode<synchronous>, transform_indices = @transform_10, window_bounds = array<i64: 4, 6>}, {pipeline_mode = #tpu.pipeline_mode<synchronous>, transform_indices = @transform_11, window_bounds = array<i64: 8, 4>}, {transform_indices = @transform_12, window_bounds = array<i64: 1, 8, 128>}, {transform_indices = @transform_13, window_bounds = array<i64: 1, 4, 128>}]} {
    %c0 = arith.constant 0 : index
    %c0_0 = arith.constant 0 : index
    %c0_1 = arith.constant 0 : index
    %0 = vector.load %arg2[%c0, %c0_0, %c0_1] : memref<1x8x8xf32, #tpu.memory_space<vmem>>, vector<1x8x8xf32>
    %1 = vector.shape_cast %0 : vector<1x8x8xf32> to vector<8x8xf32>
    %c0_2 = arith.constant 0 : index
    %c0_3 = arith.constant 0 : index
    %c0_4 = arith.constant 0 : index
    %2 = vector.load %arg4[%c0_2, %c0_3, %c0_4] : memref<1x4x6xf32, #tpu.memory_space<vmem>>, vector<1x4x6xf32>
    %3 = vector.shape_cast %2 : vector<1x4x6xf32> to vector<4x6xf32>
    %c0_5 = arith.constant 0 : index
    %c0_6 = arith.constant 0 : index
    %c0_7 = arith.constant 0 : index
    %4 = vector.load %arg3[%c0_5, %c0_6, %c0_7] : memref<1x8x3xf32, #tpu.memory_space<vmem>>, vector<1x8x3xf32>
    %5 = vector.shape_cast %4 : vector<1x8x3xf32> to vector<8x3xf32>
    %c0_8 = arith.constant 0 : index
    %c0_9 = arith.constant 0 : index
    %c0_10 = arith.constant 0 : index
    %6 = vector.load %arg5[%c0_8, %c0_9, %c0_10] : memref<1x4x4xf32, #tpu.memory_space<vmem>>, vector<1x4x4xf32>
    %7 = vector.shape_cast %6 : vector<1x4x4xf32> to vector<4x4xf32>
    %c0_11 = arith.constant 0 : index
    %c0_12 = arith.constant 0 : index
    %c0_13 = arith.constant 0 : index
    %8 = vector.load %arg6[%c0_11, %c0_12, %c0_13] : memref<1x4x12xf32, #tpu.memory_space<vmem>>, vector<1x4x12xf32>
    %9 = vector.shape_cast %8 : vector<1x4x12xf32> to vector<4x12xf32>
    %c0_14 = arith.constant 0 : index
    %c0_15 = arith.constant 0 : index
    %10 = vector.load %arg7[%c0_14, %c0_15] : memref<8x128xf32, #tpu.memory_space<vmem>>, vector<8x128xf32>
    %cst = arith.constant dense<0.000000e+00> : vector<8x128xf32>
    %11 = tpu.matmul %1, %10, %cst {dimension_numbers = #tpu.dot_dimension_numbers<[1], [0], [0], [1], [0, 0, 1, 1], [], []>} : vector<8x8xf32>, vector<8x128xf32>, vector<8x128xf32> -> vector<8x128xf32>
    %c0_16 = arith.constant 0 : index
    %c0_17 = arith.constant 0 : index
    %12 = vector.load %arg8[%c0_16, %c0_17] : memref<8x4xf32, #tpu.memory_space<vmem>>, vector<8x4xf32>
    %cst_18 = arith.constant dense<0.000000e+00> : vector<8x4xf32>
    %13 = tpu.matmul %1, %12, %cst_18 {dimension_numbers = #tpu.dot_dimension_numbers<[1], [0], [0], [1], [0, 0, 1, 1], [], []>} : vector<8x8xf32>, vector<8x4xf32>, vector<8x4xf32> -> vector<8x4xf32>
    %c0_19 = arith.constant 0 : index
    %c0_20 = arith.constant 0 : index
    %14 = vector.load %arg9[%c0_19, %c0_20] : memref<8x4xf32, #tpu.memory_space<vmem>>, vector<8x4xf32>
    %cst_21 = arith.constant dense<0.000000e+00> : vector<8x4xf32>
    %15 = tpu.matmul %1, %14, %cst_21 {dimension_numbers = #tpu.dot_dimension_numbers<[1], [0], [0], [1], [0, 0, 1, 1], [], []>} : vector<8x8xf32>, vector<8x4xf32>, vector<8x4xf32> -> vector<8x4xf32>
    %16 = vector.extract_strided_slice %11 {offsets = [0, 0], sizes = [1, 128], strides = [1, 1]} : vector<8x128xf32> to vector<1x128xf32>
    %17 = vector.extract_strided_slice %11 {offsets = [0, 0], sizes = [7, 128], strides = [1, 1]} : vector<8x128xf32> to vector<7x128xf32>
    %18 = tpu.concatenate %16, %17 in 0 : vector<1x128xf32>, vector<7x128xf32> -> vector<8x128xf32>
    %19 = vector.extract_strided_slice %11 {offsets = [1, 0], sizes = [7, 128], strides = [1, 1]} : vector<8x128xf32> to vector<7x128xf32>
    %20 = vector.extract_strided_slice %11 {offsets = [7, 0], sizes = [1, 128], strides = [1, 1]} : vector<8x128xf32> to vector<1x128xf32>
    %21 = tpu.concatenate %19, %20 in 0 : vector<7x128xf32>, vector<1x128xf32> -> vector<8x128xf32>
    %22 = vector.extract_strided_slice %15 {offsets = [0, 0], sizes = [1, 4], strides = [1, 1]} : vector<8x4xf32> to vector<1x4xf32>
    %23 = vector.extract_strided_slice %15 {offsets = [0, 0], sizes = [7, 4], strides = [1, 1]} : vector<8x4xf32> to vector<7x4xf32>
    %24 = tpu.concatenate %22, %23 in 0 : vector<1x4xf32>, vector<7x4xf32> -> vector<8x4xf32>
    %25 = vector.extract_strided_slice %15 {offsets = [1, 0], sizes = [7, 4], strides = [1, 1]} : vector<8x4xf32> to vector<7x4xf32>
    %26 = vector.extract_strided_slice %15 {offsets = [7, 0], sizes = [1, 4], strides = [1, 1]} : vector<8x4xf32> to vector<1x4xf32>
    %27 = tpu.concatenate %25, %26 in 0 : vector<7x4xf32>, vector<1x4xf32> -> vector<8x4xf32>
    %28 = vector.extract_strided_slice %5 {offsets = [0, 0], sizes = [8, 1], strides = [1, 1]} : vector<8x3xf32> to vector<8x1xf32>
    %cst_22 = arith.constant 5.000000e-01 : f32
    %29 = vector.broadcast %cst_22 : f32 to vector<8x1xf32>
    %30 = arith.cmpf ogt, %28, %29 : vector<8x1xf32>
    %31 = arith.addf %13, %24 : vector<8x4xf32>
    %cst_23 = arith.constant 0.000000e+00 : f32
    %32 = vector.broadcast %cst_23 : f32 to vector<8x4xf32>
    %33 = arith.cmpf ogt, %31, %32 : vector<8x4xf32>
    %cst_24 = arith.constant 2.000000e-01 : f32
    %34 = vector.broadcast %cst_24 : f32 to vector<8x4xf32>
    %35 = arith.mulf %34, %31 : vector<8x4xf32>
    %36 = arith.select %33, %31, %35 : vector<8x4xi1>, vector<8x4xf32>
    %cst_25 = arith.constant -9.000000e+15 : f32
    %37 = vector.shape_cast %30 : vector<8x1xi1> to vector<8x1xi1>
    %38 = vector.broadcast %37 : vector<8x1xi1> to vector<8x4xi1>
    %39 = vector.broadcast %cst_25 : f32 to vector<8x4xf32>
    %40 = arith.select %38, %39, %36 : vector<8x4xi1>, vector<8x4xf32>
    %41 = vector.extract_strided_slice %5 {offsets = [0, 1], sizes = [8, 1], strides = [1, 1]} : vector<8x3xf32> to vector<8x1xf32>
    %cst_26 = arith.constant 5.000000e-01 : f32
    %42 = vector.broadcast %cst_26 : f32 to vector<8x1xf32>
    %43 = arith.cmpf ogt, %41, %42 : vector<8x1xf32>
    %44 = arith.addf %13, %15 : vector<8x4xf32>
    %cst_27 = arith.constant 0.000000e+00 : f32
    %45 = vector.broadcast %cst_27 : f32 to vector<8x4xf32>
    %46 = arith.cmpf ogt, %44, %45 : vector<8x4xf32>
    %cst_28 = arith.constant 2.000000e-01 : f32
    %47 = vector.broadcast %cst_28 : f32 to vector<8x4xf32>
    %48 = arith.mulf %47, %44 : vector<8x4xf32>
    %49 = arith.select %46, %44, %48 : vector<8x4xi1>, vector<8x4xf32>
    %cst_29 = arith.constant -9.000000e+15 : f32
    %50 = vector.shape_cast %43 : vector<8x1xi1> to vector<8x1xi1>
    %51 = vector.broadcast %50 : vector<8x1xi1> to vector<8x4xi1>
    %52 = vector.broadcast %cst_29 : f32 to vector<8x4xf32>
    %53 = arith.select %51, %52, %49 : vector<8x4xi1>, vector<8x4xf32>
    %54 = vector.extract_strided_slice %5 {offsets = [0, 2], sizes = [8, 1], strides = [1, 1]} : vector<8x3xf32> to vector<8x1xf32>
    %cst_30 = arith.constant 5.000000e-01 : f32
    %55 = vector.broadcast %cst_30 : f32 to vector<8x1xf32>
    %56 = arith.cmpf ogt, %54, %55 : vector<8x1xf32>
    %57 = arith.addf %13, %27 : vector<8x4xf32>
    %cst_31 = arith.constant 0.000000e+00 : f32
    %58 = vector.broadcast %cst_31 : f32 to vector<8x4xf32>
    %59 = arith.cmpf ogt, %57, %58 : vector<8x4xf32>
    %cst_32 = arith.constant 2.000000e-01 : f32
    %60 = vector.broadcast %cst_32 : f32 to vector<8x4xf32>
    %61 = arith.mulf %60, %57 : vector<8x4xf32>
    %62 = arith.select %59, %57, %61 : vector<8x4xi1>, vector<8x4xf32>
    %cst_33 = arith.constant -9.000000e+15 : f32
    %63 = vector.shape_cast %56 : vector<8x1xi1> to vector<8x1xi1>
    %64 = vector.broadcast %63 : vector<8x1xi1> to vector<8x4xi1>
    %65 = vector.broadcast %cst_33 : f32 to vector<8x4xf32>
    %66 = arith.select %64, %65, %62 : vector<8x4xi1>, vector<8x4xf32>
    %67 = arith.maximumf %40, %53 : vector<8x4xf32>
    %68 = arith.maximumf %67, %66 : vector<8x4xf32>
    %69 = arith.subf %40, %68 : vector<8x4xf32>
    %70 = math.exp %69 : vector<8x4xf32>
    %71 = arith.subf %53, %68 : vector<8x4xf32>
    %72 = math.exp %71 : vector<8x4xf32>
    %73 = arith.subf %66, %68 : vector<8x4xf32>
    %74 = math.exp %73 : vector<8x4xf32>
    %75 = arith.addf %70, %72 : vector<8x4xf32>
    %76 = arith.addf %75, %74 : vector<8x4xf32>
    %77 = tpu.iota {dimensions = array<i32: 0>} : vector<4x128xi32>
    %78 = tpu.iota {dimensions = array<i32: 1>} : vector<4x128xi32>
    %c32_i32 = arith.constant 32 : i32
    %79 = vector.broadcast %c32_i32 : i32 to vector<4x128xi32>
    %80 = arith.muli %77, %79 : vector<4x128xi32>
    %81 = arith.cmpi sge, %78, %80 : vector<4x128xi32>
    %c1_i32 = arith.constant 1 : i32
    %82 = vector.broadcast %c1_i32 : i32 to vector<4x128xi32>
    %83 = arith.addi %77, %82 : vector<4x128xi32>
    %c32_i32_34 = arith.constant 32 : i32
    %84 = vector.broadcast %c32_i32_34 : i32 to vector<4x128xi32>
    %85 = arith.muli %83, %84 : vector<4x128xi32>
    %86 = arith.cmpi slt, %78, %85 : vector<4x128xi32>
    %87 = arith.andi %81, %86 : vector<4x128xi1>
    %88 = arith.extui %87 : vector<4x128xi1> to vector<4x128xi32>
    %89 = arith.sitofp %88 : vector<4x128xi32> to vector<4x128xf32>
    %cst_35 = arith.constant dense<0.000000e+00> : vector<8x128xf32>
    %90 = tpu.matmul %70, %89, %cst_35 {dimension_numbers = #tpu.dot_dimension_numbers<[1], [0], [0], [1], [0, 0, 1, 1], [], []>} : vector<8x4xf32>, vector<4x128xf32>, vector<8x128xf32> -> vector<8x128xf32>
    %91 = arith.mulf %90, %18 : vector<8x128xf32>
    %cst_36 = arith.constant dense<0.000000e+00> : vector<8x128xf32>
    %92 = tpu.matmul %72, %89, %cst_36 {dimension_numbers = #tpu.dot_dimension_numbers<[1], [0], [0], [1], [0, 0, 1, 1], [], []>} : vector<8x4xf32>, vector<4x128xf32>, vector<8x128xf32> -> vector<8x128xf32>
    %93 = arith.mulf %92, %11 : vector<8x128xf32>
    %94 = arith.addf %91, %93 : vector<8x128xf32>
    %cst_37 = arith.constant dense<0.000000e+00> : vector<8x128xf32>
    %95 = tpu.matmul %74, %89, %cst_37 {dimension_numbers = #tpu.dot_dimension_numbers<[1], [0], [0], [1], [0, 0, 1, 1], [], []>} : vector<8x4xf32>, vector<4x128xf32>, vector<8x128xf32> -> vector<8x128xf32>
    %96 = arith.mulf %95, %21 : vector<8x128xf32>
    %97 = arith.addf %94, %96 : vector<8x128xf32>
    %cst_38 = arith.constant dense<0.000000e+00> : vector<8x128xf32>
    %98 = tpu.matmul %76, %89, %cst_38 {dimension_numbers = #tpu.dot_dimension_numbers<[1], [0], [0], [1], [0, 0, 1, 1], [], []>} : vector<8x4xf32>, vector<4x128xf32>, vector<8x128xf32> -> vector<8x128xf32>
    %99 = arith.divf %97, %98 : vector<8x128xf32>
    %cst_39 = arith.constant 0.000000e+00 : f32
    %100 = vector.broadcast %cst_39 : f32 to vector<8x128xf32>
    %101 = arith.cmpf ogt, %99, %100 : vector<8x128xf32>
    %102 = math.exp %99 : vector<8x128xf32>
    %cst_40 = arith.constant 1.000000e+00 : f32
    %103 = vector.broadcast %cst_40 : f32 to vector<8x128xf32>
    %104 = arith.subf %102, %103 : vector<8x128xf32>
    %105 = arith.select %101, %99, %104 : vector<8x128xi1>, vector<8x128xf32>
    %106 = vector.shape_cast %105 : vector<8x128xf32> to vector<1x8x128xf32>
    %c0_41 = arith.constant 0 : index
    %c0_42 = arith.constant 0 : index
    %c0_43 = arith.constant 0 : index
    %107 = vector.load %arg14[%c0_41, %c0_42, %c0_43] : memref<1x8x128xf32, #tpu.memory_space<vmem>>, vector<1x8x128xf32>
    tpu.vector_store %arg14[%c0_41, %c0_42, %c0_43], %106 {strides = array<i32>} : memref<1x8x128xf32, #tpu.memory_space<vmem>>, vector<1x8x128xf32>,
    %c0_44 = arith.constant 0 : index
    %c0_45 = arith.constant 0 : index
    %108 = vector.load %arg10[%c0_44, %c0_45] : memref<6x128xf32, #tpu.memory_space<vmem>>, vector<6x128xf32>
    %cst_46 = arith.constant dense<0.000000e+00> : vector<4x128xf32>
    %109 = tpu.matmul %3, %108, %cst_46 {dimension_numbers = #tpu.dot_dimension_numbers<[1], [0], [0], [1], [0, 0, 1, 1], [], []>} : vector<4x6xf32>, vector<6x128xf32>, vector<4x128xf32> -> vector<4x128xf32>
    %c0_47 = arith.constant 0 : index
    %c0_48 = arith.constant 0 : index
    %110 = vector.load %arg11[%c0_47, %c0_48] : memref<6x4xf32, #tpu.memory_space<vmem>>, vector<6x4xf32>
    %cst_49 = arith.constant dense<0.000000e+00> : vector<4x4xf32>
    %111 = tpu.matmul %3, %110, %cst_49 {dimension_numbers = #tpu.dot_dimension_numbers<[1], [0], [0], [1], [0, 0, 1, 1], [], []>} : vector<4x6xf32>, vector<6x4xf32>, vector<4x4xf32> -> vector<4x4xf32>
    %c0_50 = arith.constant 0 : index
    %c0_51 = arith.constant 0 : index
    %112 = vector.load %arg12[%c0_50, %c0_51] : memref<4x6xf32, #tpu.memory_space<vmem>>, vector<4x6xf32>
    %cst_52 = arith.constant dense<0.000000e+00> : vector<4x4xf32>
    %113 = tpu.matmul %112, %3, %cst_52 {dimension_numbers = #tpu.dot_dimension_numbers<[1], [1], [0], [0], [0, 0, 1, 0], [], []>} : vector<4x6xf32>, vector<4x6xf32>, vector<4x4xf32> -> vector<4x4xf32>
    %114 = arith.index_cast %arg0 : i32 to index
    %c0_53 = arith.constant 0 : index
    %115 = memref.load %arg1[%114, %c0_53] : memref<2x3xi32, #tpu.memory_space<smem>>
    %c0_54 = arith.constant 0 : index
    %116 = arith.index_cast %115 : i32 to index
    %c0_55 = arith.constant 0 : index
    %117 = vector.load %arg2[%c0_54, %116, %c0_55] : memref<1x8x8xf32, #tpu.memory_space<vmem>>, vector<1x1x8xf32>
    %118 = vector.shape_cast %117 : vector<1x1x8xf32> to vector<1x8xf32>
    %119 = arith.index_cast %arg0 : i32 to index
    %c1 = arith.constant 1 : index
    %120 = memref.load %arg1[%119, %c1] : memref<2x3xi32, #tpu.memory_space<smem>>
    %c0_56 = arith.constant 0 : index
    %121 = arith.index_cast %120 : i32 to index
    %c0_57 = arith.constant 0 : index
    %122 = vector.load %arg2[%c0_56, %121, %c0_57] : memref<1x8x8xf32, #tpu.memory_space<vmem>>, vector<1x1x8xf32>
    %123 = vector.shape_cast %122 : vector<1x1x8xf32> to vector<1x8xf32>
    %124 = arith.index_cast %arg0 : i32 to index
    %c2 = arith.constant 2 : index
    %125 = memref.load %arg1[%124, %c2] : memref<2x3xi32, #tpu.memory_space<smem>>
    %c0_58 = arith.constant 0 : index
    %126 = arith.index_cast %125 : i32 to index
    %c0_59 = arith.constant 0 : index
    %127 = vector.load %arg2[%c0_58, %126, %c0_59] : memref<1x8x8xf32, #tpu.memory_space<vmem>>, vector<1x1x8xf32>
    %128 = vector.shape_cast %127 : vector<1x1x8xf32> to vector<1x8xf32>
    %129 = tpu.concatenate %118, %123, %128 in 0 : vector<1x8xf32>, vector<1x8xf32>, vector<1x8xf32> -> vector<3x8xf32>
    %c0_60 = arith.constant 0 : index
    %c0_61 = arith.constant 0 : index
    %130 = vector.load %arg13[%c0_60, %c0_61] : memref<8x4xf32, #tpu.memory_space<vmem>>, vector<8x4xf32>
    %cst_62 = arith.constant dense<0.000000e+00> : vector<3x4xf32>
    %131 = tpu.matmul %129, %130, %cst_62 {dimension_numbers = #tpu.dot_dimension_numbers<[1], [0], [0], [1], [0, 0, 1, 1], [], []>} : vector<3x8xf32>, vector<8x4xf32>, vector<3x4xf32> -> vector<3x4xf32>
    %132 = tpu.concatenate %131, %131, %131, %131 in 0 : vector<3x4xf32>, vector<3x4xf32>, vector<3x4xf32>, vector<3x4xf32> -> vector<12x4xf32>
    %133 = tpu.iota {dimensions = array<i32: 0>} : vector<12x4xi32>
    %134 = tpu.iota {dimensions = array<i32: 1>} : vector<12x4xi32>
    %c3_i32 = arith.constant 3 : i32
    %135 = vector.broadcast %c3_i32 : i32 to vector<12x4xi32>
    %136 = arith.muli %134, %135 : vector<12x4xi32>
    %137 = arith.cmpi sge, %133, %136 : vector<12x4xi32>
    %c1_i32_63 = arith.constant 1 : i32
    %138 = vector.broadcast %c1_i32_63 : i32 to vector<12x4xi32>
    %139 = arith.addi %134, %138 : vector<12x4xi32>
    %c3_i32_64 = arith.constant 3 : i32
    %140 = vector.broadcast %c3_i32_64 : i32 to vector<12x4xi32>
    %141 = arith.muli %139, %140 : vector<12x4xi32>
    %142 = arith.cmpi slt, %133, %141 : vector<12x4xi32>
    %143 = arith.andi %137, %142 : vector<12x4xi1>
    %144 = arith.extui %143 : vector<12x4xi1> to vector<12x4xi32>
    %145 = arith.sitofp %144 : vector<12x4xi32> to vector<12x4xf32>
    %146 = vector.extract_strided_slice %132 {offsets = [0, 0], sizes = [12, 1], strides = [1, 1]} : vector<12x4xf32> to vector<12x1xf32>
    %147 = vector.broadcast %146 : vector<12x1xf32> to vector<12x4xf32>
    %148 = arith.mulf %145, %147 : vector<12x4xf32>
    %cst_65 = arith.constant dense<0.000000e+00> : vector<4x4xf32>
    %149 = tpu.matmul %9, %148, %cst_65 {dimension_numbers = #tpu.dot_dimension_numbers<[1], [0], [0], [1], [0, 0, 1, 1], [], []>} : vector<4x12xf32>, vector<12x4xf32>, vector<4x4xf32> -> vector<4x4xf32>
    %150 = vector.extract_strided_slice %111 {offsets = [0, 0], sizes = [4, 1], strides = [1, 1]} : vector<4x4xf32> to vector<4x1xf32>
    %151 = vector.extract_strided_slice %113 {offsets = [0, 0], sizes = [1, 4], strides = [1, 1]} : vector<4x4xf32> to vector<1x4xf32>
    %152 = vector.broadcast %150 : vector<4x1xf32> to vector<4x4xf32>
    %153 = vector.broadcast %151 : vector<1x4xf32> to vector<4x4xf32>
    %154 = arith.addf %152, %153 : vector<4x4xf32>
    %155 = arith.addf %154, %149 : vector<4x4xf32>
    %cst_66 = arith.constant 0.000000e+00 : f32
    %156 = vector.broadcast %cst_66 : f32 to vector<4x4xf32>
    %157 = arith.cmpf ogt, %155, %156 : vector<4x4xf32>
    %cst_67 = arith.constant 2.000000e-01 : f32
    %158 = vector.broadcast %cst_67 : f32 to vector<4x4xf32>
    %159 = arith.mulf %158, %155 : vector<4x4xf32>
    %160 = arith.select %157, %155, %159 : vector<4x4xi1>, vector<4x4xf32>
    %cst_68 = arith.constant 0.000000e+00 : f32
    %161 = vector.broadcast %cst_68 : f32 to vector<4x4xf32>
    %162 = arith.cmpf ogt, %7, %161 : vector<4x4xf32>
    %cst_69 = arith.constant -9.000000e+15 : f32
    %163 = vector.broadcast %cst_69 : f32 to vector<4x4xf32>
    %164 = arith.select %162, %160, %163 : vector<4x4xi1>, vector<4x4xf32>
    %cst_70 = arith.constant dense<0xFF800000> : vector<4xf32>
    %165 = vector.multi_reduction <maximumf>, %164, %cst_70 [1] : vector<4x4xf32> to vector<4xf32>
    %166 = vector.shape_cast %165 : vector<4xf32> to vector<4x1xf32>
    %167 = vector.broadcast %166 : vector<4x1xf32> to vector<4x4xf32>
    %168 = arith.subf %164, %167 : vector<4x4xf32>
    %169 = math.exp %168 : vector<4x4xf32>
    %cst_71 = arith.constant dense<0.000000e+00> : vector<4xf32>
    %170 = vector.multi_reduction <add>, %169, %cst_71 [1] : vector<4x4xf32> to vector<4xf32>
    %171 = vector.shape_cast %170 : vector<4xf32> to vector<4x1xf32>
    %172 = vector.broadcast %171 : vector<4x1xf32> to vector<4x4xf32>
    %173 = arith.divf %169, %172 : vector<4x4xf32>
    %174 = vector.extract_strided_slice %109 {offsets = [0, 0], sizes = [4, 32], strides = [1, 1]} : vector<4x128xf32> to vector<4x32xf32>
    %cst_72 = arith.constant dense<0.000000e+00> : vector<4x32xf32>
    %175 = tpu.matmul %173, %174, %cst_72 {dimension_numbers = #tpu.dot_dimension_numbers<[1], [0], [0], [1], [0, 0, 1, 1], [], []>} : vector<4x4xf32>, vector<4x32xf32>, vector<4x32xf32> -> vector<4x32xf32>
    %176 = vector.extract_strided_slice %132 {offsets = [0, 1], sizes = [12, 1], strides = [1, 1]} : vector<12x4xf32> to vector<12x1xf32>
    %177 = vector.broadcast %176 : vector<12x1xf32> to vector<12x4xf32>
    %178 = arith.mulf %145, %177 : vector<12x4xf32>
    %cst_73 = arith.constant dense<0.000000e+00> : vector<4x4xf32>
    %179 = tpu.matmul %9, %178, %cst_73 {dimension_numbers = #tpu.dot_dimension_numbers<[1], [0], [0], [1], [0, 0, 1, 1], [], []>} : vector<4x12xf32>, vector<12x4xf32>, vector<4x4xf32> -> vector<4x4xf32>
    %180 = vector.extract_strided_slice %111 {offsets = [0, 1], sizes = [4, 1], strides = [1, 1]} : vector<4x4xf32> to vector<4x1xf32>
    %181 = vector.extract_strided_slice %113 {offsets = [1, 0], sizes = [1, 4], strides = [1, 1]} : vector<4x4xf32> to vector<1x4xf32>
    %182 = vector.broadcast %180 : vector<4x1xf32> to vector<4x4xf32>
    %183 = vector.broadcast %181 : vector<1x4xf32> to vector<4x4xf32>
    %184 = arith.addf %182, %183 : vector<4x4xf32>
    %185 = arith.addf %184, %179 : vector<4x4xf32>
    %cst_74 = arith.constant 0.000000e+00 : f32
    %186 = vector.broadcast %cst_74 : f32 to vector<4x4xf32>
    %187 = arith.cmpf ogt, %185, %186 : vector<4x4xf32>
    %cst_75 = arith.constant 2.000000e-01 : f32
    %188 = vector.broadcast %cst_75 : f32 to vector<4x4xf32>
    %189 = arith.mulf %188, %185 : vector<4x4xf32>
    %190 = arith.select %187, %185, %189 : vector<4x4xi1>, vector<4x4xf32>
    %cst_76 = arith.constant 0.000000e+00 : f32
    %191 = vector.broadcast %cst_76 : f32 to vector<4x4xf32>
    %192 = arith.cmpf ogt, %7, %191 : vector<4x4xf32>
    %cst_77 = arith.constant -9.000000e+15 : f32
    %193 = vector.broadcast %cst_77 : f32 to vector<4x4xf32>
    %194 = arith.select %192, %190, %193 : vector<4x4xi1>, vector<4x4xf32>
    %cst_78 = arith.constant dense<0xFF800000> : vector<4xf32>
    %195 = vector.multi_reduction <maximumf>, %194, %cst_78 [1] : vector<4x4xf32> to vector<4xf32>
    %196 = vector.shape_cast %195 : vector<4xf32> to vector<4x1xf32>
    %197 = vector.broadcast %196 : vector<4x1xf32> to vector<4x4xf32>
    %198 = arith.subf %194, %197 : vector<4x4xf32>
    %199 = math.exp %198 : vector<4x4xf32>
    %cst_79 = arith.constant dense<0.000000e+00> : vector<4xf32>
    %200 = vector.multi_reduction <add>, %199, %cst_79 [1] : vector<4x4xf32> to vector<4xf32>
    %201 = vector.shape_cast %200 : vector<4xf32> to vector<4x1xf32>
    %202 = vector.broadcast %201 : vector<4x1xf32> to vector<4x4xf32>
    %203 = arith.divf %199, %202 : vector<4x4xf32>
    %204 = vector.extract_strided_slice %109 {offsets = [0, 32], sizes = [4, 32], strides = [1, 1]} : vector<4x128xf32> to vector<4x32xf32>
    %cst_80 = arith.constant dense<0.000000e+00> : vector<4x32xf32>
    %205 = tpu.matmul %203, %204, %cst_80 {dimension_numbers = #tpu.dot_dimension_numbers<[1], [0], [0], [1], [0, 0, 1, 1], [], []>} : vector<4x4xf32>, vector<4x32xf32>, vector<4x32xf32> -> vector<4x32xf32>
    %206 = vector.extract_strided_slice %132 {offsets = [0, 2], sizes = [12, 1], strides = [1, 1]} : vector<12x4xf32> to vector<12x1xf32>
    %207 = vector.broadcast %206 : vector<12x1xf32> to vector<12x4xf32>
    %208 = arith.mulf %145, %207 : vector<12x4xf32>
    %cst_81 = arith.constant dense<0.000000e+00> : vector<4x4xf32>
    %209 = tpu.matmul %9, %208, %cst_81 {dimension_numbers = #tpu.dot_dimension_numbers<[1], [0], [0], [1], [0, 0, 1, 1], [], []>} : vector<4x12xf32>, vector<12x4xf32>, vector<4x4xf32> -> vector<4x4xf32>
    %210 = vector.extract_strided_slice %111 {offsets = [0, 2], sizes = [4, 1], strides = [1, 1]} : vector<4x4xf32> to vector<4x1xf32>
    %211 = vector.extract_strided_slice %113 {offsets = [2, 0], sizes = [1, 4], strides = [1, 1]} : vector<4x4xf32> to vector<1x4xf32>
    %212 = vector.broadcast %210 : vector<4x1xf32> to vector<4x4xf32>
    %213 = vector.broadcast %211 : vector<1x4xf32> to vector<4x4xf32>
    %214 = arith.addf %212, %213 : vector<4x4xf32>
    %215 = arith.addf %214, %209 : vector<4x4xf32>
    %cst_82 = arith.constant 0.000000e+00 : f32
    %216 = vector.broadcast %cst_82 : f32 to vector<4x4xf32>
    %217 = arith.cmpf ogt, %215, %216 : vector<4x4xf32>
    %cst_83 = arith.constant 2.000000e-01 : f32
    %218 = vector.broadcast %cst_83 : f32 to vector<4x4xf32>
    %219 = arith.mulf %218, %215 : vector<4x4xf32>
    %220 = arith.select %217, %215, %219 : vector<4x4xi1>, vector<4x4xf32>
    %cst_84 = arith.constant 0.000000e+00 : f32
    %221 = vector.broadcast %cst_84 : f32 to vector<4x4xf32>
    %222 = arith.cmpf ogt, %7, %221 : vector<4x4xf32>
    %cst_85 = arith.constant -9.000000e+15 : f32
    %223 = vector.broadcast %cst_85 : f32 to vector<4x4xf32>
    %224 = arith.select %222, %220, %223 : vector<4x4xi1>, vector<4x4xf32>
    %cst_86 = arith.constant dense<0xFF800000> : vector<4xf32>
    %225 = vector.multi_reduction <maximumf>, %224, %cst_86 [1] : vector<4x4xf32> to vector<4xf32>
    %226 = vector.shape_cast %225 : vector<4xf32> to vector<4x1xf32>
    %227 = vector.broadcast %226 : vector<4x1xf32> to vector<4x4xf32>
    %228 = arith.subf %224, %227 : vector<4x4xf32>
    %229 = math.exp %228 : vector<4x4xf32>
    %cst_87 = arith.constant dense<0.000000e+00> : vector<4xf32>
    %230 = vector.multi_reduction <add>, %229, %cst_87 [1] : vector<4x4xf32> to vector<4xf32>
    %231 = vector.shape_cast %230 : vector<4xf32> to vector<4x1xf32>
    %232 = vector.broadcast %231 : vector<4x1xf32> to vector<4x4xf32>
    %233 = arith.divf %229, %232 : vector<4x4xf32>
    %234 = vector.extract_strided_slice %109 {offsets = [0, 64], sizes = [4, 32], strides = [1, 1]} : vector<4x128xf32> to vector<4x32xf32>
    %cst_88 = arith.constant dense<0.000000e+00> : vector<4x32xf32>
    %235 = tpu.matmul %233, %234, %cst_88 {dimension_numbers = #tpu.dot_dimension_numbers<[1], [0], [0], [1], [0, 0, 1, 1], [], []>} : vector<4x4xf32>, vector<4x32xf32>, vector<4x32xf32> -> vector<4x32xf32>
    %236 = vector.extract_strided_slice %132 {offsets = [0, 3], sizes = [12, 1], strides = [1, 1]} : vector<12x4xf32> to vector<12x1xf32>
    %237 = vector.broadcast %236 : vector<12x1xf32> to vector<12x4xf32>
    %238 = arith.mulf %145, %237 : vector<12x4xf32>
    %cst_89 = arith.constant dense<0.000000e+00> : vector<4x4xf32>
    %239 = tpu.matmul %9, %238, %cst_89 {dimension_numbers = #tpu.dot_dimension_numbers<[1], [0], [0], [1], [0, 0, 1, 1], [], []>} : vector<4x12xf32>, vector<12x4xf32>, vector<4x4xf32> -> vector<4x4xf32>
    %240 = vector.extract_strided_slice %111 {offsets = [0, 3], sizes = [4, 1], strides = [1, 1]} : vector<4x4xf32> to vector<4x1xf32>
    %241 = vector.extract_strided_slice %113 {offsets = [3, 0], sizes = [1, 4], strides = [1, 1]} : vector<4x4xf32> to vector<1x4xf32>
    %242 = vector.broadcast %240 : vector<4x1xf32> to vector<4x4xf32>
    %243 = vector.broadcast %241 : vector<1x4xf32> to vector<4x4xf32>
    %244 = arith.addf %242, %243 : vector<4x4xf32>
    %245 = arith.addf %244, %239 : vector<4x4xf32>
    %cst_90 = arith.constant 0.000000e+00 : f32
    %246 = vector.broadcast %cst_90 : f32 to vector<4x4xf32>
    %247 = arith.cmpf ogt, %245, %246 : vector<4x4xf32>
    %cst_91 = arith.constant 2.000000e-01 : f32
    %248 = vector.broadcast %cst_91 : f32 to vector<4x4xf32>
    %249 = arith.mulf %248, %245 : vector<4x4xf32>
    %250 = arith.select %247, %245, %249 : vector<4x4xi1>, vector<4x4xf32>
    %cst_92 = arith.constant 0.000000e+00 : f32
    %251 = vector.broadcast %cst_92 : f32 to vector<4x4xf32>
    %252 = arith.cmpf ogt, %7, %251 : vector<4x4xf32>
    %cst_93 = arith.constant -9.000000e+15 : f32
    %253 = vector.broadcast %cst_93 : f32 to vector<4x4xf32>
    %254 = arith.select %252, %250, %253 : vector<4x4xi1>, vector<4x4xf32>
    %cst_94 = arith.constant dense<0xFF800000> : vector<4xf32>
    %255 = vector.multi_reduction <maximumf>, %254, %cst_94 [1] : vector<4x4xf32> to vector<4xf32>
    %256 = vector.shape_cast %255 : vector<4xf32> to vector<4x1xf32>
    %257 = vector.broadcast %256 : vector<4x1xf32> to vector<4x4xf32>
    %258 = arith.subf %254, %257 : vector<4x4xf32>
    %259 = math.exp %258 : vector<4x4xf32>
    %cst_95 = arith.constant dense<0.000000e+00> : vector<4xf32>
    %260 = vector.multi_reduction <add>, %259, %cst_95 [1] : vector<4x4xf32> to vector<4xf32>
    %261 = vector.shape_cast %260 : vector<4xf32> to vector<4x1xf32>
    %262 = vector.broadcast %261 : vector<4x1xf32> to vector<4x4xf32>
    %263 = arith.divf %259, %262 : vector<4x4xf32>
    %264 = vector.extract_strided_slice %109 {offsets = [0, 96], sizes = [4, 32], strides = [1, 1]} : vector<4x128xf32> to vector<4x32xf32>
    %cst_96 = arith.constant dense<0.000000e+00> : vector<4x32xf32>
    %265 = tpu.matmul %263, %264, %cst_96 {dimension_numbers = #tpu.dot_dimension_numbers<[1], [0], [0], [1], [0, 0, 1, 1], [], []>} : vector<4x4xf32>, vector<4x32xf32>, vector<4x32xf32> -> vector<4x32xf32>
    %266 = tpu.concatenate %175, %205, %235, %265 in 1 : vector<4x32xf32>, vector<4x32xf32>, vector<4x32xf32>, vector<4x32xf32> -> vector<4x128xf32>
    %cst_97 = arith.constant 0.000000e+00 : f32
    %267 = vector.broadcast %cst_97 : f32 to vector<4x128xf32>
    %268 = arith.cmpf ogt, %266, %267 : vector<4x128xf32>
    %269 = math.exp %266 : vector<4x128xf32>
    %cst_98 = arith.constant 1.000000e+00 : f32
    %270 = vector.broadcast %cst_98 : f32 to vector<4x128xf32>
    %271 = arith.subf %269, %270 : vector<4x128xf32>
    %272 = arith.select %268, %266, %271 : vector<4x128xi1>, vector<4x128xf32>
    %273 = vector.shape_cast %272 : vector<4x128xf32> to vector<1x4x128xf32>
    %c0_99 = arith.constant 0 : index
    %c0_100 = arith.constant 0 : index
    %c0_101 = arith.constant 0 : index
    %274 = vector.load %arg15[%c0_99, %c0_100, %c0_101] : memref<1x4x128xf32, #tpu.memory_space<vmem>>, vector<1x4x128xf32>
    tpu.vector_store %arg15[%c0_99, %c0_100, %c0_101], %273 {strides = array<i32>} : memref<1x4x128xf32, #tpu.memory_space<vmem>>, vector<1x4x128xf32>,
    return
  }
  func.func @transform_0(%arg0: i32, %arg1: memref<2x3xi32, #tpu.memory_space<smem>>) -> (i32, i32, i32) {
    %c0_i32 = arith.constant 0 : i32
    %c0_i32_0 = arith.constant 0 : i32
    %c0_i32_1 = arith.constant 0 : i32
    return %arg0, %c0_i32, %c0_i32_0 : i32, i32, i32
  }
  func.func @transform_1(%arg0: i32, %arg1: memref<2x3xi32, #tpu.memory_space<smem>>) -> (i32, i32, i32) {
    %c0_i32 = arith.constant 0 : i32
    %c0_i32_0 = arith.constant 0 : i32
    %c0_i32_1 = arith.constant 0 : i32
    return %arg0, %c0_i32, %c0_i32_0 : i32, i32, i32
  }
  func.func @transform_2(%arg0: i32, %arg1: memref<2x3xi32, #tpu.memory_space<smem>>) -> (i32, i32, i32) {
    %c0_i32 = arith.constant 0 : i32
    %c0_i32_0 = arith.constant 0 : i32
    %c0_i32_1 = arith.constant 0 : i32
    return %arg0, %c0_i32, %c0_i32_0 : i32, i32, i32
  }
  func.func @transform_3(%arg0: i32, %arg1: memref<2x3xi32, #tpu.memory_space<smem>>) -> (i32, i32, i32) {
    %c0_i32 = arith.constant 0 : i32
    %c0_i32_0 = arith.constant 0 : i32
    %c0_i32_1 = arith.constant 0 : i32
    return %arg0, %c0_i32, %c0_i32_0 : i32, i32, i32
  }
  func.func @transform_4(%arg0: i32, %arg1: memref<2x3xi32, #tpu.memory_space<smem>>) -> (i32, i32, i32) {
    %c0_i32 = arith.constant 0 : i32
    %c0_i32_0 = arith.constant 0 : i32
    %c0_i32_1 = arith.constant 0 : i32
    return %arg0, %c0_i32, %c0_i32_0 : i32, i32, i32
  }
  func.func @transform_5(%arg0: i32, %arg1: memref<2x3xi32, #tpu.memory_space<smem>>) -> (i32, i32) {
    %c0_i32 = arith.constant 0 : i32
    %c0_i32_0 = arith.constant 0 : i32
    %c0_i32_1 = arith.constant 0 : i32
    return %c0_i32, %c0_i32_0 : i32, i32
  }
  func.func @transform_6(%arg0: i32, %arg1: memref<2x3xi32, #tpu.memory_space<smem>>) -> (i32, i32) {
    %c0_i32 = arith.constant 0 : i32
    %c0_i32_0 = arith.constant 0 : i32
    %c0_i32_1 = arith.constant 0 : i32
    return %c0_i32, %c0_i32_0 : i32, i32
  }
  func.func @transform_7(%arg0: i32, %arg1: memref<2x3xi32, #tpu.memory_space<smem>>) -> (i32, i32) {
    %c0_i32 = arith.constant 0 : i32
    %c0_i32_0 = arith.constant 0 : i32
    %c0_i32_1 = arith.constant 0 : i32
    return %c0_i32, %c0_i32_0 : i32, i32
  }
  func.func @transform_8(%arg0: i32, %arg1: memref<2x3xi32, #tpu.memory_space<smem>>) -> (i32, i32) {
    %c0_i32 = arith.constant 0 : i32
    %c0_i32_0 = arith.constant 0 : i32
    %c0_i32_1 = arith.constant 0 : i32
    return %c0_i32, %c0_i32_0 : i32, i32
  }
  func.func @transform_9(%arg0: i32, %arg1: memref<2x3xi32, #tpu.memory_space<smem>>) -> (i32, i32) {
    %c0_i32 = arith.constant 0 : i32
    %c0_i32_0 = arith.constant 0 : i32
    %c0_i32_1 = arith.constant 0 : i32
    return %c0_i32, %c0_i32_0 : i32, i32
  }
  func.func @transform_10(%arg0: i32, %arg1: memref<2x3xi32, #tpu.memory_space<smem>>) -> (i32, i32) {
    %c0_i32 = arith.constant 0 : i32
    %c0_i32_0 = arith.constant 0 : i32
    %c0_i32_1 = arith.constant 0 : i32
    return %c0_i32, %c0_i32_0 : i32, i32
  }
  func.func @transform_11(%arg0: i32, %arg1: memref<2x3xi32, #tpu.memory_space<smem>>) -> (i32, i32) {
    %c0_i32 = arith.constant 0 : i32
    %c0_i32_0 = arith.constant 0 : i32
    %c0_i32_1 = arith.constant 0 : i32
    return %c0_i32, %c0_i32_0 : i32, i32
  }
  func.func @transform_12(%arg0: i32, %arg1: memref<2x3xi32, #tpu.memory_space<smem>>) -> (i32, i32, i32) {
    %c0_i32 = arith.constant 0 : i32
    %c0_i32_0 = arith.constant 0 : i32
    %c0_i32_1 = arith.constant 0 : i32
    return %arg0, %c0_i32, %c0_i32_0 : i32, i32, i32
  }
  func.func @transform_13(%arg0: i32, %arg1: memref<2x3xi32, #tpu.memory_space<smem>>) -> (i32, i32, i32) {
    %c0_i32 = arith.constant 0 : i32
    %c0_i32_0 = arith.constant 0 : i32
    %c0_i32_1 = arith.constant 0 : i32
    return %arg0, %c0_i32, %c0_i32_0 : i32, i32, i32
  }
}

</mosaic_0001>

<llo_original>
// kernel: dual_attention_forward.2
$region0: #{dual_attention_forward.2}
  #allocation0 [shape = 'u32[]', space=smem, size = 0x4, offset = 0x4, fixed_abs, tag = 'smem constant byte address 0x4 - core index']
  #allocation1 [shape = 'u32[144,128]{1,0:T(1,128)}', space=vmem, size = 0x12000, scoped, tag = 'internal scratch']
  #allocation2 [shape = 's32[1]{0}', space=sflag, size = 0x4, scoped, tag = 'scoped memory for dual_attention_forward.2']
  #allocation3 [shape = 'u8[1024]{0}', space=smem, size = 0x400, scoped, tag = 'prefetched SMEM operand 0']
  %s0 = inlined_call_operand.vmem [shape: s32[2,3], index: 0, kind: input, shape index: {}]
  %s1 = inlined_call_operand.vmem [shape: f32[2,8,8], index: 1, kind: input, shape index: {}]
  %s2 = inlined_call_operand.vmem [shape: f32[2,8,3], index: 2, kind: input, shape index: {}]
  %s3 = inlined_call_operand.vmem [shape: f32[2,4,6], index: 3, kind: input, shape index: {}]
  %s4 = inlined_call_operand.vmem [shape: f32[2,4,4], index: 4, kind: input, shape index: {}]
  %s5 = inlined_call_operand.vmem [shape: f32[2,4,12], index: 5, kind: input, shape index: {}]
  %s6 = inlined_call_operand.vmem [shape: f32[8,128], index: 6, kind: input, shape index: {}]
  %s7 = inlined_call_operand.vmem [shape: f32[8,4], index: 7, kind: input, shape index: {}]
  %s8 = inlined_call_operand.vmem [shape: f32[8,4], index: 8, kind: input, shape index: {}]
  %s9 = inlined_call_operand.vmem [shape: f32[6,128], index: 9, kind: input, shape index: {}]
  %s10 = inlined_call_operand.vmem [shape: f32[6,4], index: 10, kind: input, shape index: {}]
  %s11 = inlined_call_operand.vmem [shape: f32[4,6], index: 11, kind: input, shape index: {}]
  %s12 = inlined_call_operand.vmem [shape: f32[8,4], index: 12, kind: input, shape index: {}]
  %s13 = inlined_call_operand.vmem [shape: f32[2,8,128], index: 13, kind: output, shape index: {0}]
  %s14 = inlined_call_operand.vmem [shape: f32[2,4,128], index: 14, kind: output, shape index: {1}]
  %15 = xla_tuple %s13, %s14
  %s16 = sld [smem:[#allocation0]]
  $region89: #{dual_attention_forward.2} parent=0
    _
  %s18 = ssub.s32 1, %s16
  %s19 = scalar_select 0, %s18, %s16
  %s20 = sshll.u32 %s0, 4
  %s21 = int_to_ptr.vmem [resolvable:$true] %s20
  %23 = dma.vmem_to_smem %s21, 32, [#allocation3], [#allocation2]
  %24 = dma.done [#allocation2], 32
  %25 = sfence
  loop: start=0, step=1, limit=4
  $region2: #{dual_attention_forward.2} parent=0 // loop_pre_header
    _
  $region3: #{dual_attention_forward.2} parent=0 // loop_header
    %s27 = sphi 0, %s31
    %p28 = scmp.ge.s32.totalorder %s27, 4
    %s37 = sphi 0, %s39
    %s40 = sphi 0, %s37
    %s41 = sphi 0, %s40
    %s57 = sphi 0, %s41
    %s63 = sphi 0, %s65
    %s66 = sphi 0, %s63
    %s67 = sphi 0, %s66
    %s83 = sphi 0, %s67
    %s89 = sphi 0, %s91
    %s92 = sphi 0, %s89
    %s93 = sphi 0, %s92
    %s109 = sphi 0, %s93
    %s115 = sphi 0, %s117
    %s118 = sphi 0, %s115
    %s119 = sphi 0, %s118
    %s135 = sphi 0, %s119
    %s141 = sphi 0, %s143
    %s144 = sphi 0, %s141
    %s145 = sphi 0, %s144
    %s161 = sphi 0, %s145
    %s165 = sphi 0, %s165
    %s167 = sphi 0, %s165
    %s168 = sphi 0, %s167
    %s182 = sphi 0, %s168
    %s186 = sphi 0, %s186
    %s188 = sphi 0, %s186
    %s189 = sphi 0, %s188
    %s203 = sphi 0, %s189
    %s207 = sphi 0, %s207
    %s209 = sphi 0, %s207
    %s210 = sphi 0, %s209
    %s224 = sphi 0, %s210
    %s228 = sphi 0, %s228
    %s230 = sphi 0, %s228
    %s231 = sphi 0, %s230
    %s245 = sphi 0, %s231
    %s249 = sphi 0, %s249
    %s251 = sphi 0, %s249
    %s252 = sphi 0, %s251
    %s266 = sphi 0, %s252
    %s270 = sphi 0, %s270
    %s272 = sphi 0, %s270
    %s273 = sphi 0, %s272
    %s287 = sphi 0, %s273
    %s291 = sphi 0, %s291
    %s293 = sphi 0, %s291
    %s294 = sphi 0, %s293
    %s308 = sphi 0, %s294
    %s314 = sphi 0, %s316
    %s317 = sphi 0, %s314
    %s318 = sphi 0, %s317
    %s334 = sphi 0, %s318
    %s340 = sphi 0, %s342
    %s343 = sphi 0, %s340
    %s344 = sphi 0, %s343
    %s360 = sphi 0, %s344
  $region4: #{dual_attention_forward.2} parent=0 // loop_header_branch
    %30 = sbr.rel (%p28) target = $region8
  $region5: #{dual_attention_forward.2} parent=0 // loop_body
    %s32 = ssub.s32 %s27, 1
    %s33 = ssub.s32 %s27, 2
    %s34 = sadd.s32 %s27, 1
    %s35 = ssub.s32 %s27, %s34
    %p36 = scmp.eq.s32.totalorder %s35, 0
    %s38 = sadd.s32 %s37, 1
    %s39 = scalar_select %p36, %s37, %s38
    %p42 = pneg %p36
    %p43 = scmp.eq.s32.totalorder %s27, 1
    %p44 = por %p42, %p43
    %p45 = scmp.ne.s32.totalorder %s37, %s40
    %p46 = scmp.eq.s32.totalorder %s27, 0
    %p47 = por %p45, %p46
    %p48 = scmp.ne.s32.totalorder %s37, %s40
    %p49 = scmp.eq.s32.totalorder %s32, 1
    %p50 = por %p48, %p49
    %p51 = scmp.ne.s32.totalorder %s40, %s41
    %p52 = scmp.eq.s32.totalorder %s32, 0
    %p53 = por %p51, %p52
    %p54 = scmp.ne.s32.totalorder %s40, %s41
    %p55 = scmp.eq.s32.totalorder %s33, 1
    %p56 = por %p54, %p55
    %p58 = scmp.ne.s32.totalorder %s41, %s57
    %p59 = scmp.eq.s32.totalorder %s33, 0
    %p60 = por %p58, %p59
    %s61 = ssub.s32 %s27, %s34
    %p62 = scmp.eq.s32.totalorder %s61, 0
    %s64 = sadd.s32 %s63, 1
    %s65 = scalar_select %p62, %s63, %s64
    %p68 = pneg %p62
    %p69 = scmp.eq.s32.totalorder %s27, 1
    %p70 = por %p68, %p69
    %p71 = scmp.ne.s32.totalorder %s63, %s66
    %p72 = scmp.eq.s32.totalorder %s27, 0
    %p73 = por %p71, %p72
    %p74 = scmp.ne.s32.totalorder %s63, %s66
    %p75 = scmp.eq.s32.totalorder %s32, 1
    %p76 = por %p74, %p75
    %p77 = scmp.ne.s32.totalorder %s66, %s67
    %p78 = scmp.eq.s32.totalorder %s32, 0
    %p79 = por %p77, %p78
    %p80 = scmp.ne.s32.totalorder %s66, %s67
    %p81 = scmp.eq.s32.totalorder %s33, 1
    %p82 = por %p80, %p81
    %p84 = scmp.ne.s32.totalorder %s67, %s83
    %p85 = scmp.eq.s32.totalorder %s33, 0
    %p86 = por %p84, %p85
    %s87 = ssub.s32 %s27, %s34
    %p88 = scmp.eq.s32.totalorder %s87, 0
    %s90 = sadd.s32 %s89, 1
    %s91 = scalar_select %p88, %s89, %s90
    %p94 = pneg %p88
    %p95 = scmp.eq.s32.totalorder %s27, 1
    %p96 = por %p94, %p95
    %p97 = scmp.ne.s32.totalorder %s89, %s92
    %p98 = scmp.eq.s32.totalorder %s27, 0
    %p99 = por %p97, %p98
    %p100 = scmp.ne.s32.totalorder %s89, %s92
    %p101 = scmp.eq.s32.totalorder %s32, 1
    %p102 = por %p100, %p101
    %p103 = scmp.ne.s32.totalorder %s92, %s93
    %p104 = scmp.eq.s32.totalorder %s32, 0
    %p105 = por %p103, %p104
    %p106 = scmp.ne.s32.totalorder %s92, %s93
    %p107 = scmp.eq.s32.totalorder %s33, 1
    %p108 = por %p106, %p107
    %p110 = scmp.ne.s32.totalorder %s93, %s109
    %p111 = scmp.eq.s32.totalorder %s33, 0
    %p112 = por %p110, %p111
    %s113 = ssub.s32 %s27, %s34
    %p114 = scmp.eq.s32.totalorder %s113, 0
    %s116 = sadd.s32 %s115, 1
    %s117 = scalar_select %p114, %s115, %s116
    %p120 = pneg %p114
    %p121 = scmp.eq.s32.totalorder %s27, 1
    %p122 = por %p120, %p121
    %p123 = scmp.ne.s32.totalorder %s115, %s118
    %p124 = scmp.eq.s32.totalorder %s27, 0
    %p125 = por %p123, %p124
    %p126 = scmp.ne.s32.totalorder %s115, %s118
    %p127 = scmp.eq.s32.totalorder %s32, 1
    %p128 = por %p126, %p127
    %p129 = scmp.ne.s32.totalorder %s118, %s119
    %p130 = scmp.eq.s32.totalorder %s32, 0
    %p131 = por %p129, %p130
    %p132 = scmp.ne.s32.totalorder %s118, %s119
    %p133 = scmp.eq.s32.totalorder %s33, 1
    %p134 = por %p132, %p133
    %p136 = scmp.ne.s32.totalorder %s119, %s135
    %p137 = scmp.eq.s32.totalorder %s33, 0
    %p138 = por %p136, %p137
    %s139 = ssub.s32 %s27, %s34
    %p140 = scmp.eq.s32.totalorder %s139, 0
    %s142 = sadd.s32 %s141, 1
    %s143 = scalar_select %p140, %s141, %s142
    %p146 = pneg %p140
    %p147 = scmp.eq.s32.totalorder %s27, 1
    %p148 = por %p146, %p147
    %p149 = scmp.ne.s32.totalorder %s141, %s144
    %p150 = scmp.eq.s32.totalorder %s27, 0
    %p151 = por %p149, %p150
    %p152 = scmp.ne.s32.totalorder %s141, %s144
    %p153 = scmp.eq.s32.totalorder %s32, 1
    %p154 = por %p152, %p153
    %p155 = scmp.ne.s32.totalorder %s144, %s145
    %p156 = scmp.eq.s32.totalorder %s32, 0
    %p157 = por %p155, %p156
    %p158 = scmp.ne.s32.totalorder %s144, %s145
    %p159 = scmp.eq.s32.totalorder %s33, 1
    %p160 = por %p158, %p159
    %p162 = scmp.ne.s32.totalorder %s145, %s161
    %p163 = scmp.eq.s32.totalorder %s33, 0
    %p164 = por %p162, %p163
    %s166 = sadd.s32 %s165, 1
    %p169 = scmp.eq.s32.totalorder %s27, 1
    %p170 = scmp.ne.s32.totalorder %s165, %s167
    %p171 = scmp.eq.s32.totalorder %s27, 0
    %p172 = por %p170, %p171
    %p173 = scmp.ne.s32.totalorder %s165, %s167
    %p174 = scmp.eq.s32.totalorder %s32, 1
    %p175 = por %p173, %p174
    %p176 = scmp.ne.s32.totalorder %s167, %s168
    %p177 = scmp.eq.s32.totalorder %s32, 0
    %p178 = por %p176, %p177
    %p179 = scmp.ne.s32.totalorder %s167, %s168
    %p180 = scmp.eq.s32.totalorder %s33, 1
    %p181 = por %p179, %p180
    %p183 = scmp.ne.s32.totalorder %s168, %s182
    %p184 = scmp.eq.s32.totalorder %s33, 0
    %p185 = por %p183, %p184
    %s187 = sadd.s32 %s186, 1
    %p190 = scmp.eq.s32.totalorder %s27, 1
    %p191 = scmp.ne.s32.totalorder %s186, %s188
    %p192 = scmp.eq.s32.totalorder %s27, 0
    %p193 = por %p191, %p192
    %p194 = scmp.ne.s32.totalorder %s186, %s188
    %p195 = scmp.eq.s32.totalorder %s32, 1
    %p196 = por %p194, %p195
    %p197 = scmp.ne.s32.totalorder %s188, %s189
    %p198 = scmp.eq.s32.totalorder %s32, 0
    %p199 = por %p197, %p198
    %p200 = scmp.ne.s32.totalorder %s188, %s189
    %p201 = scmp.eq.s32.totalorder %s33, 1
    %p202 = por %p200, %p201
    %p204 = scmp.ne.s32.totalorder %s189, %s203
    %p205 = scmp.eq.s32.totalorder %s33, 0
    %p206 = por %p204, %p205
    %s208 = sadd.s32 %s207, 1
    %p211 = scmp.eq.s32.totalorder %s27, 1
    %p212 = scmp.ne.s32.totalorder %s207, %s209
    %p213 = scmp.eq.s32.totalorder %s27, 0
    %p214 = por %p212, %p213
    %p215 = scmp.ne.s32.totalorder %s207, %s209
    %p216 = scmp.eq.s32.totalorder %s32, 1
    %p217 = por %p215, %p216
    %p218 = scmp.ne.s32.totalorder %s209, %s210
    %p219 = scmp.eq.s32.totalorder %s32, 0
    %p220 = por %p218, %p219
    %p221 = scmp.ne.s32.totalorder %s209, %s210
    %p222 = scmp.eq.s32.totalorder %s33, 1
    %p223 = por %p221, %p222
    %p225 = scmp.ne.s32.totalorder %s210, %s224
    %p226 = scmp.eq.s32.totalorder %s33, 0
    %p227 = por %p225, %p226
    %s229 = sadd.s32 %s228, 1
    %p232 = scmp.eq.s32.totalorder %s27, 1
    %p233 = scmp.ne.s32.totalorder %s228, %s230
    %p234 = scmp.eq.s32.totalorder %s27, 0
    %p235 = por %p233, %p234
    %p236 = scmp.ne.s32.totalorder %s228, %s230
    %p237 = scmp.eq.s32.totalorder %s32, 1
    %p238 = por %p236, %p237
    %p239 = scmp.ne.s32.totalorder %s230, %s231
    %p240 = scmp.eq.s32.totalorder %s32, 0
    %p241 = por %p239, %p240
    %p242 = scmp.ne.s32.totalorder %s230, %s231
    %p243 = scmp.eq.s32.totalorder %s33, 1
    %p244 = por %p242, %p243
    %p246 = scmp.ne.s32.totalorder %s231, %s245
    %p247 = scmp.eq.s32.totalorder %s33, 0
    %p248 = por %p246, %p247
    %s250 = sadd.s32 %s249, 1
    %p253 = scmp.eq.s32.totalorder %s27, 1
    %p254 = scmp.ne.s32.totalorder %s249, %s251
    %p255 = scmp.eq.s32.totalorder %s27, 0
    %p256 = por %p254, %p255
    %p257 = scmp.ne.s32.totalorder %s249, %s251
    %p258 = scmp.eq.s32.totalorder %s32, 1
    %p259 = por %p257, %p258
    %p260 = scmp.ne.s32.totalorder %s251, %s252
    %p261 = scmp.eq.s32.totalorder %s32, 0
    %p262 = por %p260, %p261
    %p263 = scmp.ne.s32.totalorder %s251, %s252
    %p264 = scmp.eq.s32.totalorder %s33, 1
    %p265 = por %p263, %p264
    %p267 = scmp.ne.s32.totalorder %s252, %s266
    %p268 = scmp.eq.s32.totalorder %s33, 0
    %p269 = por %p267, %p268
    %s271 = sadd.s32 %s270, 1
    %p274 = scmp.eq.s32.totalorder %s27, 1
    %p275 = scmp.ne.s32.totalorder %s270, %s272
    %p276 = scmp.eq.s32.totalorder %s27, 0
    %p277 = por %p275, %p276
    %p278 = scmp.ne.s32.totalorder %s270, %s272
    %p279 = scmp.eq.s32.totalorder %s32, 1
    %p280 = por %p278, %p279
    %p281 = scmp.ne.s32.totalorder %s272, %s273
    %p282 = scmp.eq.s32.totalorder %s32, 0
    %p283 = por %p281, %p282
    %p284 = scmp.ne.s32.totalorder %s272, %s273
    %p285 = scmp.eq.s32.totalorder %s33, 1
    %p286 = por %p284, %p285
    %p288 = scmp.ne.s32.totalorder %s273, %s287
    %p289 = scmp.eq.s32.totalorder %s33, 0
    %p290 = por %p288, %p289
    %s292 = sadd.s32 %s291, 1
    %p295 = scmp.eq.s32.totalorder %s27, 1
    %p296 = scmp.ne.s32.totalorder %s291, %s293
    %p297 = scmp.eq.s32.totalorder %s27, 0
    %p298 = por %p296, %p297
    %p299 = scmp.ne.s32.totalorder %s291, %s293
    %p300 = scmp.eq.s32.totalorder %s32, 1
    %p301 = por %p299, %p300
    %p302 = scmp.ne.s32.totalorder %s293, %s294
    %p303 = scmp.eq.s32.totalorder %s32, 0
    %p304 = por %p302, %p303
    %p305 = scmp.ne.s32.totalorder %s293, %s294
    %p306 = scmp.eq.s32.totalorder %s33, 1
    %p307 = por %p305, %p306
    %p309 = scmp.ne.s32.totalorder %s294, %s308
    %p310 = scmp.eq.s32.totalorder %s33, 0
    %p311 = por %p309, %p310
    %s312 = ssub.s32 %s27, %s34
    %p313 = scmp.eq.s32.totalorder %s312, 0
    %s315 = sadd.s32 %s314, 1
    %s316 = scalar_select %p313, %s314, %s315
    %p319 = pneg %p313
    %p320 = scmp.eq.s32.totalorder %s27, 1
    %p321 = por %p319, %p320
    %p322 = scmp.ne.s32.totalorder %s314, %s317
    %p323 = scmp.eq.s32.totalorder %s27, 0
    %p324 = por %p322, %p323
    %p325 = scmp.ne.s32.totalorder %s314, %s317
    %p326 = scmp.eq.s32.totalorder %s32, 1
    %p327 = por %p325, %p326
    %p328 = scmp.ne.s32.totalorder %s317, %s318
    %p329 = scmp.eq.s32.totalorder %s32, 0
    %p330 = por %p328, %p329
    %p331 = scmp.ne.s32.totalorder %s317, %s318
    %p332 = scmp.eq.s32.totalorder %s33, 1
    %p333 = por %p331, %p332
    %p335 = scmp.ne.s32.totalorder %s318, %s334
    %p336 = scmp.eq.s32.totalorder %s33, 0
    %p337 = por %p335, %p336
    %s338 = ssub.s32 %s27, %s34
    %p339 = scmp.eq.s32.totalorder %s338, 0
    %s341 = sadd.s32 %s340, 1
    %s342 = scalar_select %p339, %s340, %s341
    %p345 = pneg %p339
    %p346 = scmp.eq.s32.totalorder %s27, 1
    %p347 = por %p345, %p346
    %p348 = scmp.ne.s32.totalorder %s340, %s343
    %p349 = scmp.eq.s32.totalorder %s27, 0
    %p350 = por %p348, %p349
    %p351 = scmp.ne.s32.totalorder %s340, %s343
    %p352 = scmp.eq.s32.totalorder %s32, 1
    %p353 = por %p351, %p352
    %p354 = scmp.ne.s32.totalorder %s343, %s344
    %p355 = scmp.eq.s32.totalorder %s32, 0
    %p356 = por %p354, %p355
    %p357 = scmp.ne.s32.totalorder %s343, %s344
    %p358 = scmp.eq.s32.totalorder %s33, 1
    %p359 = por %p357, %p358
    %p361 = scmp.ne.s32.totalorder %s344, %s360
    %p362 = scmp.eq.s32.totalorder %s33, 0
    %p363 = por %p361, %p362
    %p364 = scmp.le.s32.totalorder 1, %s27
    %p365 = scmp.lt.s32.totalorder %s27, 3
    %p366 = pnand %p364, %p365
    %p367 = pneg %p366
    // Predicated region
    $region9: #{dual_attention_forward.2} parent=5 // pred_check
      _
    $region10: #{dual_attention_forward.2} parent=5 // pred_check_branch
      %369 = sbr.rel (%p366) target = $region12
    $region11: #{dual_attention_forward.2} parent=5 // pred_region
      %s370 = ssub.s32 %s27, 1
      // Predicated region
      $region13: #{dual_attention_forward.2} parent=11 // pred_check
        %p371 = pneg %p178
      $region14: #{dual_attention_forward.2} parent=11 // pred_check_branch
        %373 = sbr.rel (%p371) target = $region16
      $region15: #{dual_attention_forward.2} parent=11 // pred_region
        _
      $region16: #{dual_attention_forward.2} parent=11 // pred_fallthru
        _
      // Predicated region
      $region17: #{dual_attention_forward.2} parent=11 // pred_check
        %p374 = pneg %p199
      $region18: #{dual_attention_forward.2} parent=11 // pred_check_branch
        %376 = sbr.rel (%p374) target = $region20
      $region19: #{dual_attention_forward.2} parent=11 // pred_region
        _
      $region20: #{dual_attention_forward.2} parent=11 // pred_fallthru
        _
      // Predicated region
      $region21: #{dual_attention_forward.2} parent=11 // pred_check
        %p377 = pneg %p220
      $region22: #{dual_attention_forward.2} parent=11 // pred_check_branch
        %379 = sbr.rel (%p377) target = $region24
      $region23: #{dual_attention_forward.2} parent=11 // pred_region
        _
      $region24: #{dual_attention_forward.2} parent=11 // pred_fallthru
        _
      // Predicated region
      $region25: #{dual_attention_forward.2} parent=11 // pred_check
        %p380 = pneg %p241
      $region26: #{dual_attention_forward.2} parent=11 // pred_check_branch
        %382 = sbr.rel (%p380) target = $region28
      $region27: #{dual_attention_forward.2} parent=11 // pred_region
        _
      $region28: #{dual_attention_forward.2} parent=11 // pred_fallthru
        _
      // Predicated region
      $region29: #{dual_attention_forward.2} parent=11 // pred_check
        %p383 = pneg %p262
      $region30: #{dual_attention_forward.2} parent=11 // pred_check_branch
        %385 = sbr.rel (%p383) target = $region32
      $region31: #{dual_attention_forward.2} parent=11 // pred_region
        _
      $region32: #{dual_attention_forward.2} parent=11 // pred_fallthru
        _
      // Predicated region
      $region33: #{dual_attention_forward.2} parent=11 // pred_check
        %p386 = pneg %p283
      $region34: #{dual_attention_forward.2} parent=11 // pred_check_branch
        %388 = sbr.rel (%p386) target = $region36
      $region35: #{dual_attention_forward.2} parent=11 // pred_region
        _
      $region36: #{dual_attention_forward.2} parent=11 // pred_fallthru
        _
      // Predicated region
      $region37: #{dual_attention_forward.2} parent=11 // pred_check
        %p389 = pneg %p304
      $region38: #{dual_attention_forward.2} parent=11 // pred_check_branch
        %391 = sbr.rel (%p389) target = $region40
      $region39: #{dual_attention_forward.2} parent=11 // pred_region
        _
      $region40: #{dual_attention_forward.2} parent=11 // pred_fallthru
        _
    $region12: #{dual_attention_forward.2} parent=5 // pred_fallthru
      _
    %p392 = scmp.lt.s32.totalorder %s27, 2
    // Predicated region
    $region41: #{dual_attention_forward.2} parent=5 // pred_check
      %p393 = pneg %p392
    $region42: #{dual_attention_forward.2} parent=5 // pred_check_branch
      %395 = sbr.rel (%p393) target = $region44
    $region43: #{dual_attention_forward.2} parent=5 // pred_region
      // Predicated region
      $region45: #{dual_attention_forward.2} parent=43 // pred_check
        %p396 = pneg %p47
      $region46: #{dual_attention_forward.2} parent=43 // pred_check_branch
        %398 = sbr.rel (%p396) target = $region48
      $region47: #{dual_attention_forward.2} parent=43 // pred_region
        %p399 = scmp.lt.s32.totalorder %s27, 1
        %s400 = scalar_select %p399, %s27, 1
        %s401 = smul.addr %s400, 8
        %s402 = scalar_lea.vmem %s1, %s401
      $region48: #{dual_attention_forward.2} parent=43 // pred_fallthru
        _
      // Predicated region
      $region49: #{dual_attention_forward.2} parent=43 // pred_check
        %p403 = pneg %p73
      $region50: #{dual_attention_forward.2} parent=43 // pred_check_branch
        %405 = sbr.rel (%p403) target = $region52
      $region51: #{dual_attention_forward.2} parent=43 // pred_region
        %p406 = scmp.lt.s32.totalorder %s27, 1
        %s407 = scalar_select %p406, %s27, 1
        %s408 = smul.addr %s407, 8
        %s409 = scalar_lea.vmem %s2, %s408
      $region52: #{dual_attention_forward.2} parent=43 // pred_fallthru
        _
      // Predicated region
      $region53: #{dual_attention_forward.2} parent=43 // pred_check
        %p410 = pneg %p99
      $region54: #{dual_attention_forward.2} parent=43 // pred_check_branch
        %412 = sbr.rel (%p410) target = $region56
      $region55: #{dual_attention_forward.2} parent=43 // pred_region
        %p413 = scmp.lt.s32.totalorder %s27, 1
        %s414 = scalar_select %p413, %s27, 1
        %s415 = smul.addr %s414, 4
        %s416 = scalar_lea.vmem %s3, %s415
      $region56: #{dual_attention_forward.2} parent=43 // pred_fallthru
        _
      // Predicated region
      $region57: #{dual_attention_forward.2} parent=43 // pred_check
        %p417 = pneg %p125
      $region58: #{dual_attention_forward.2} parent=43 // pred_check_branch
        %419 = sbr.rel (%p417) target = $region60
      $region59: #{dual_attention_forward.2} parent=43 // pred_region
        %p420 = scmp.lt.s32.totalorder %s27, 1
        %s421 = scalar_select %p420, %s27, 1
        %s422 = smul.addr %s421, 4
        %s423 = scalar_lea.vmem %s4, %s422
      $region60: #{dual_attention_forward.2} parent=43 // pred_fallthru
        _
      // Predicated region
      $region61: #{dual_attention_forward.2} parent=43 // pred_check
        %p424 = pneg %p151
      $region62: #{dual_attention_forward.2} parent=43 // pred_check_branch
        %426 = sbr.rel (%p424) target = $region64
      $region63: #{dual_attention_forward.2} parent=43 // pred_region
        %p427 = scmp.lt.s32.totalorder %s27, 1
        %s428 = scalar_select %p427, %s27, 1
        %s429 = smul.addr %s428, 4
        %s430 = scalar_lea.vmem %s5, %s429
      $region64: #{dual_attention_forward.2} parent=43 // pred_fallthru
        _
    $region44: #{dual_attention_forward.2} parent=5 // pred_fallthru
      _
    %p431 = scmp.le.s32.totalorder 1, %s27
    %p432 = scmp.lt.s32.totalorder %s27, 3
    %p433 = pnand %p431, %p432
    %p434 = pneg %p433
    // Predicated region
    $region65: #{dual_attention_forward.2} parent=5 // pred_check
      _
    $region66: #{dual_attention_forward.2} parent=5 // pred_check_branch
      %436 = sbr.rel (%p433) target = $region68
    $region67: #{dual_attention_forward.2} parent=5 // pred_region
      %s437 = ssub.s32 %s27, 1
      %p438 = scmp.lt.s32.totalorder %s32, 1
      %s439 = scalar_select %p438, %s32, 1
      %s440 = smul.addr %s439, 8
      %s441 = scalar_lea.vmem %s1, %s440
      %p442 = pneg %p53
      %p443 = pneg %p50
      %p444 = scmp.lt.s32.totalorder %s32, 1
      %s445 = scalar_select %p444, %s32, 1
      %s446 = smul.addr %s445, 8
      %s447 = scalar_lea.vmem %s2, %s446
      %p448 = pneg %p79
      %p449 = pneg %p76
      %p450 = scmp.lt.s32.totalorder %s32, 1
      %s451 = scalar_select %p450, %s32, 1
      %s452 = smul.addr %s451, 4
      %s453 = scalar_lea.vmem %s3, %s452
      %p454 = pneg %p105
      %p455 = pneg %p102
      %p456 = scmp.lt.s32.totalorder %s32, 1
      %s457 = scalar_select %p456, %s32, 1
      %s458 = smul.addr %s457, 4
      %s459 = scalar_lea.vmem %s4, %s458
      %p460 = pneg %p131
      %p461 = pneg %p128
      %p462 = scmp.lt.s32.totalorder %s32, 1
      %s463 = scalar_select %p462, %s32, 1
      %s464 = smul.addr %s463, 4
      %s465 = scalar_lea.vmem %s5, %s464
      %p466 = pneg %p157
      %p467 = pneg %p154
      %p468 = pneg %p178
      %p469 = pneg %p175
      %p470 = pneg %p199
      %p471 = pneg %p196
      %p472 = pneg %p220
      %p473 = pneg %p217
      %p474 = pneg %p241
      %p475 = pneg %p238
      %p476 = pneg %p262
      %p477 = pneg %p259
      %p478 = pneg %p283
      %p479 = pneg %p280
      %p480 = pneg %p304
      %p481 = pneg %p301
      %p482 = pneg %p330
      %p483 = pneg %p327
      %p484 = scmp.lt.s32.totalorder %s32, 1
      %s485 = scalar_select %p484, %s32, 1
      %s486 = smul.addr %s485, 8
      %s487 = scalar_lea.vmem %s13, %s486
      %p488 = pneg %p356
      %p489 = pneg %p353
      %p490 = scmp.lt.s32.totalorder %s32, 1
      %s491 = scalar_select %p490, %s32, 1
      %s492 = smul.addr %s491, 4
      %s493 = scalar_lea.vmem %s14, %s492
      %p494 = scmp.lt.s32.totalorder %s32, 1
      %s495 = scalar_select %p494, %s32, 1
      %s496 = smul.addr %s495, 8
      %s497 = scalar_lea.vmem %s1, %s496
      %p498 = scmp.lt.s32.totalorder %s32, 1
      %s499 = scalar_select %p498, %s32, 1
      %s500 = smul.addr %s499, 8
      %s501 = scalar_lea.vmem %s2, %s500
      %p502 = scmp.lt.s32.totalorder %s32, 1
      %s503 = scalar_select %p502, %s32, 1
      %s504 = smul.addr %s503, 4
      %s505 = scalar_lea.vmem %s3, %s504
      %p506 = scmp.lt.s32.totalorder %s32, 1
      %s507 = scalar_select %p506, %s32, 1
      %s508 = smul.addr %s507, 4
      %s509 = scalar_lea.vmem %s4, %s508
      %p510 = scmp.lt.s32.totalorder %s32, 1
      %s511 = scalar_select %p510, %s32, 1
      %s512 = smul.addr %s511, 4
      %s513 = scalar_lea.vmem %s5, %s512
      %p514 = scmp.lt.s32.totalorder %s32, 1
      %s515 = scalar_select %p514, %s32, 1
      %s516 = smul.addr %s515, 8
      %s517 = scalar_lea.vmem %s13, %s516
      %p518 = scmp.lt.s32.totalorder %s32, 1
      %s519 = scalar_select %p518, %s32, 1
      %s520 = smul.addr %s519, 4
      %s521 = scalar_lea.vmem %s14, %s520
      %v522 = vld [vmem:[%s497] sm:$0xff]
      %v523 = vld [vmem:[%s505] sm:$0xf]
      %v524 = vld [vmem:[%s501] sm:$0xff]
      %v525 = vld [vmem:[%s509] sm:$0xf]
      %v526 = vld [vmem:[%s513] sm:$0xf]
      %v527 = vld [vmem:[%s6] sm:$0xff]
      %vm528 = vcmask 64512
      %v530 = vsel %vm528, %v522, 0
      %532 = vmatprep.subr.mxu0 0.0
      %533 = vmatpush1.msra.mxu0 %v527
      %534 = vmatprep.subr.mxu0 0.0
      %535 = vmatpush1.msra.mxu0 0.0
      %536 = vmatprep.subr.mxu0 0.0
      %537 = vmatpush1.msra.mxu0 0.0
      %538 = vmatprep.subr.mxu0 0.0
      %539 = vmatpush1.msra.mxu0 0.0
      %540 = vmatprep.subr.mxu0 0.0
      %541 = vmatpush1.msra.mxu0 0.0
      %542 = vmatprep.subr.mxu0 0.0
      %543 = vmatpush1.msra.mxu0 0.0
      %544 = vmatprep.subr.mxu0 0.0
      %545 = vmatpush1.msra.mxu0 0.0
      %546 = vmatprep.subr.mxu0 0.0
      %547 = vmatpush1.msra.mxu0 0.0
      %548 = vmatprep.subr.mxu0 0.0
      %549 = vmatpush1.msra.mxu0 0.0
      %550 = vmatprep.subr.mxu0 0.0
      %551 = vmatpush1.msra.mxu0 0.0
      %552 = vmatprep.subr.mxu0 0.0
      %553 = vmatpush1.msra.mxu0 0.0
      %554 = vmatprep.subr.mxu0 0.0
      %555 = vmatpush1.msra.mxu0 0.0
      %556 = vmatprep.subr.mxu0 0.0
      %557 = vmatpush1.msra.mxu0 0.0
      %558 = vmatprep.subr.mxu0 0.0
      %559 = vmatpush1.msra.mxu0 0.0
      %560 = vmatprep.subr.mxu0 0.0
      %561 = vmatpush1.msra.mxu0 0.0
      %562 = vmatprep.subr.mxu0 0.0
      %563 = vmatpush1.msra.mxu0 0.0
      %564 = vmatprep.subr.mxu0 0.0
      %565 = vmatpush1.msra.mxu0 0.0
      %566 = vmatprep.subr.mxu0 0.0
      %567 = vmatpush1.msra.mxu0 0.0
      %568 = vmatprep.subr.mxu0 0.0
      %569 = vmatpush1.msra.mxu0 0.0
      %570 = vmatprep.subr.mxu0 0.0
      %571 = vmatpush1.msra.mxu0 0.0
      %572 = vmatprep.subr.mxu0 0.0
      %573 = vmatpush1.msra.mxu0 0.0
      %574 = vmatprep.subr.mxu0 0.0
      %575 = vmatpush1.msra.mxu0 0.0
      %576 = vmatprep.subr.mxu0 0.0
      %577 = vmatpush1.msra.mxu0 0.0
      %578 = vmatprep.subr.mxu0 0.0
      %579 = vmatpush1.msra.mxu0 0.0
      %580 = vmatprep.subr.mxu0 0.0
      %581 = vmatpush1.msra.mxu0 0.0
      %582 = vmatprep.subr.mxu0 0.0
      %583 = vmatpush1.msra.mxu0 0.0
      %584 = vmatprep.subr.mxu0 0.0
      %585 = vmatpush1.msra.mxu0 0.0
      %586 = vmatprep.subr.mxu0 0.0
      %587 = vmatpush1.msra.mxu0 0.0
      %588 = vmatprep.subr.mxu0 0.0
      %589 = vmatpush1.msra.mxu0 0.0
      %590 = vmatprep.subr.mxu0 0.0
      %591 = vmatpush1.msra.mxu0 0.0
      %592 = vmatprep.subr.mxu0 0.0
      %593 = vmatpush1.msra.mxu0 0.0
      %594 = vmatprep.subr.mxu0 0.0
      %595 = vmatpush1.msra.mxu0 0.0
      %596 = vmatprep.mubr.f32.mxu0 0.0
      %597 = vmatmul.mubr.f32.gmra.mrb[0].mxu0 %v530
      %v598 = vpop.f32.mrb[0].mxu0
      %v599 = vadd.f32 0.0, %v598
      %v600 = vpop.f32.mrb[0].mxu0
      %601 = vdwg.mxu0
      %v602 = vld [vmem:[%s7] sm:$0xff]
      %603 = vmatprep.subr.mxu0 0.0
      %604 = vmatpush1.msra.mxu0 %v602
      %605 = vmatprep.subr.mxu0 0.0
      %606 = vmatpush1.msra.mxu0 0.0
      %607 = vmatprep.subr.mxu0 0.0
      %608 = vmatpush1.msra.mxu0 0.0
      %609 = vmatprep.subr.mxu0 0.0
      %610 = vmatpush1.msra.mxu0 0.0
      %611 = vmatprep.subr.mxu0 0.0
      %612 = vmatpush1.msra.mxu0 0.0
      %613 = vmatprep.subr.mxu0 0.0
      %614 = vmatpush1.msra.mxu0 0.0
      %615 = vmatprep.subr.mxu0 0.0
      %616 = vmatpush1.msra.mxu0 0.0
      %617 = vmatprep.subr.mxu0 0.0
      %618 = vmatpush1.msra.mxu0 0.0
      %619 = vmatprep.subr.mxu0 0.0
      %620 = vmatpush1.msra.mxu0 0.0
      %621 = vmatprep.subr.mxu0 0.0
      %622 = vmatpush1.msra.mxu0 0.0
      %623 = vmatprep.subr.mxu0 0.0
      %624 = vmatpush1.msra.mxu0 0.0
      %625 = vmatprep.subr.mxu0 0.0
      %626 = vmatpush1.msra.mxu0 0.0
      %627 = vmatprep.subr.mxu0 0.0
      %628 = vmatpush1.msra.mxu0 0.0
      %629 = vmatprep.subr.mxu0 0.0
      %630 = vmatpush1.msra.mxu0 0.0
      %631 = vmatprep.subr.mxu0 0.0
      %632 = vmatpush1.msra.mxu0 0.0
      %633 = vmatprep.subr.mxu0 0.0
      %634 = vmatpush1.msra.mxu0 0.0
      %635 = vmatprep.subr.mxu0 0.0
      %636 = vmatpush1.msra.mxu0 0.0
      %637 = vmatprep.subr.mxu0 0.0
      %638 = vmatpush1.msra.mxu0 0.0
      %639 = vmatprep.subr.mxu0 0.0
      %640 = vmatpush1.msra.mxu0 0.0
      %641 = vmatprep.subr.mxu0 0.0
      %642 = vmatpush1.msra.mxu0 0.0
      %643 = vmatprep.subr.mxu0 0.0
      %644 = vmatpush1.msra.mxu0 0.0
      %645 = vmatprep.subr.mxu0 0.0
      %646 = vmatpush1.msra.mxu0 0.0
      %647 = vmatprep.subr.mxu0 0.0
      %648 = vmatpush1.msra.mxu0 0.0
      %649 = vmatprep.subr.mxu0 0.0
      %650 = vmatpush1.msra.mxu0 0.0
      %651 = vmatprep.subr.mxu0 0.0
      %652 = vmatpush1.msra.mxu0 0.0
      %653 = vmatprep.subr.mxu0 0.0
      %654 = vmatpush1.msra.mxu0 0.0
      %655 = vmatprep.subr.mxu0 0.0
      %656 = vmatpush1.msra.mxu0 0.0
      %657 = vmatprep.subr.mxu0 0.0
      %658 = vmatpush1.msra.mxu0 0.0
      %659 = vmatprep.subr.mxu0 0.0
      %660 = vmatpush1.msra.mxu0 0.0
      %661 = vmatprep.subr.mxu0 0.0
      %662 = vmatpush1.msra.mxu0 0.0
      %663 = vmatprep.subr.mxu0 0.0
      %664 = vmatpush1.msra.mxu0 0.0
      %665 = vmatprep.subr.mxu0 0.0
      %666 = vmatpush1.msra.mxu0 0.0
      %667 = vmatprep.mubr.f32.mxu0 0.0
      %668 = vmatmul.mubr.f32.gmra.mrb[0].mxu0 %v530
      %v669 = vpop.f32.mrb[0].mxu0
      %v670 = vadd.f32 0.0, %v669
      %v671 = vpop.f32.mrb[0].mxu0
      %672 = vdwg.mxu0
      %v673 = vld [vmem:[%s8] sm:$0xff]
      %674 = vmatprep.subr.mxu0 0.0
      %675 = vmatpush1.msra.mxu0 %v673
      %676 = vmatprep.subr.mxu0 0.0
      %677 = vmatpush1.msra.mxu0 0.0
      %678 = vmatprep.subr.mxu0 0.0
      %679 = vmatpush1.msra.mxu0 0.0
      %680 = vmatprep.subr.mxu0 0.0
      %681 = vmatpush1.msra.mxu0 0.0
      %682 = vmatprep.subr.mxu0 0.0
      %683 = vmatpush1.msra.mxu0 0.0
      %684 = vmatprep.subr.mxu0 0.0
      %685 = vmatpush1.msra.mxu0 0.0
      %686 = vmatprep.subr.mxu0 0.0
      %687 = vmatpush1.msra.mxu0 0.0
      %688 = vmatprep.subr.mxu0 0.0
      %689 = vmatpush1.msra.mxu0 0.0
      %690 = vmatprep.subr.mxu0 0.0
      %691 = vmatpush1.msra.mxu0 0.0
      %692 = vmatprep.subr.mxu0 0.0
      %693 = vmatpush1.msra.mxu0 0.0
      %694 = vmatprep.subr.mxu0 0.0
      %695 = vmatpush1.msra.mxu0 0.0
      %696 = vmatprep.subr.mxu0 0.0
      %697 = vmatpush1.msra.mxu0 0.0
      %698 = vmatprep.subr.mxu0 0.0
      %699 = vmatpush1.msra.mxu0 0.0
      %700 = vmatprep.subr.mxu0 0.0
      %701 = vmatpush1.msra.mxu0 0.0
      %702 = vmatprep.subr.mxu0 0.0
      %703 = vmatpush1.msra.mxu0 0.0
      %704 = vmatprep.subr.mxu0 0.0
      %705 = vmatpush1.msra.mxu0 0.0
      %706 = vmatprep.subr.mxu0 0.0
      %707 = vmatpush1.msra.mxu0 0.0
      %708 = vmatprep.subr.mxu0 0.0
      %709 = vmatpush1.msra.mxu0 0.0
      %710 = vmatprep.subr.mxu0 0.0
      %711 = vmatpush1.msra.mxu0 0.0
      %712 = vmatprep.subr.mxu0 0.0
      %713 = vmatpush1.msra.mxu0 0.0
      %714 = vmatprep.subr.mxu0 0.0
      %715 = vmatpush1.msra.mxu0 0.0
      %716 = vmatprep.subr.mxu0 0.0
      %717 = vmatpush1.msra.mxu0 0.0
      %718 = vmatprep.subr.mxu0 0.0
      %719 = vmatpush1.msra.mxu0 0.0
      %720 = vmatprep.subr.mxu0 0.0
      %721 = vmatpush1.msra.mxu0 0.0
      %722 = vmatprep.subr.mxu0 0.0
      %723 = vmatpush1.msra.mxu0 0.0
      %724 = vmatprep.subr.mxu0 0.0
      %725 = vmatpush1.msra.mxu0 0.0
      %726 = vmatprep.subr.mxu0 0.0
      %727 = vmatpush1.msra.mxu0 0.0
      %728 = vmatprep.subr.mxu0 0.0
      %729 = vmatpush1.msra.mxu0 0.0
      %730 = vmatprep.subr.mxu0 0.0
      %731 = vmatpush1.msra.mxu0 0.0
      %732 = vmatprep.subr.mxu0 0.0
      %733 = vmatpush1.msra.mxu0 0.0
      %734 = vmatprep.subr.mxu0 0.0
      %735 = vmatpush1.msra.mxu0 0.0
      %736 = vmatprep.subr.mxu0 0.0
      %737 = vmatpush1.msra.mxu0 0.0
      %738 = vmatprep.mubr.f32.mxu0 0.0
      %739 = vmatmul.mubr.f32.gmra.mrb[0].mxu0 %v530
      %v740 = vpop.f32.mrb[0].mxu0
      %v741 = vadd.f32 0.0, %v740
      %v742 = vpop.f32.mrb[0].mxu0
      %743 = vdwg.mxu0
      %v745 = vrot.slane %v599, 7
      %vm747 = vcmask 1040384
      %v748 = vsel %vm747, %v599, %v745
      %v749 = vrot.slane %v599, 1
      %vm751 = vcmask 1046528
      %v752 = vsel %vm751, %v749, %v599
      %v754 = vrot.slane %v741, 7
      %v756 = vsel %vm747, %v741, %v754
      %v757 = vrot.slane %v741, 1
      %v759 = vsel %vm751, %v757, %v741
      %vm760 = vcmp.gt.f32.partialorder %v524, 0.5
      %v761 = vadd.f32 %v670, %v756
      %vm762 = vcmp.gt.f32.partialorder %v761, 0.0
      %v763 = vmul.f32 %v761, 0.2
      %v764 = vsel %vm762, %v761, %v763
      %v765 = vsel %vm760, 1, 0
      %766 = vset.pattern.permute.xlu0 0
      %767 = vperm.xlu0 %766, %v765
      %v768 = vpop.permute.xlu0 %767
      %vm769 = vcmp.eq.s32.totalorder %v768, 1
      %v770 = vsel %vm769, -9e+15, %v764
      %v771 = vadd.f32 %v670, %v741
      %vm772 = vcmp.gt.f32.partialorder %v771, 0.0
      %v773 = vmul.f32 %v771, 0.2
      %v774 = vsel %vm772, %v771, %v773
      %775 = vset.pattern.permute.xlu0 1
      %776 = vperm.xlu0 %775, %v765
      %v777 = vpop.permute.xlu0 %776
      %vm778 = vcmp.eq.s32.totalorder %v777, 1
      %v779 = vsel %vm778, -9e+15, %v774
      %v780 = vadd.f32 %v670, %v759
      %vm781 = vcmp.gt.f32.partialorder %v780, 0.0
      %v782 = vmul.f32 %v780, 0.2
      %v783 = vsel %vm781, %v780, %v782
      %784 = vset.pattern.permute.xlu0 2
      %785 = vperm.xlu0 %784, %v765
      %v786 = vpop.permute.xlu0 %785
      %vm787 = vcmp.eq.s32.totalorder %v786, 1
      %v788 = vsel %vm787, -9e+15, %v783
      %v789 = vmax.f32 %v770, %v779
      %v790 = vmax.f32 %v789, %v788
      %v791 = vsub.f32 %v770, %v790
      %v792 = vmul.f32 %v791, 1.442695
      %v793 = vpow.pop %v792
      %v794 = vsub.f32 %v779, %v790
      %v795 = vmul.f32 %v794, 1.442695
      %v796 = vpow.pop %v795
      %v797 = vsub.f32 %v788, %v790
      %v798 = vmul.f32 %v797, 1.442695
      %v799 = vpow.pop %v798
      %v800 = vadd.f32 %v793, %v796
      %v801 = vadd.f32 %v800, %v799
      %v802 = vlaneseq
      %v803 = vshrl.u32 %v802, 7
      %v804 = vlaneseq
      %v805 = vand.u32 %v804, 127
      %v806 = vmul.u32 %v803, 32
      %vm807 = vcmp.ge.s32.totalorder %v805, %v806
      %v808 = vadd.s32 %v803, 1
      %v809 = vmul.u32 %v808, 32
      %vm810 = vcmp.lt.s32.totalorder %v805, %v809
      %vm811 = vmand %vm807, %vm810
      %v812 = vsel %vm811, 1, 0
      %v813 = vcvt.s32.f32 %v812
      %vm814 = vcmask 31744
      %v816 = vsel %vm814, %v793, 0
      %vm818 = vcmask 1043456
      %v820 = vsel %vm818, %v813, 0
      %822 = vmatprep.subr.mxu0 0.0
      %823 = vmatpush1.msra.mxu0 %v820
      %824 = vmatprep.subr.mxu0 0.0
      %825 = vmatpush1.msra.mxu0 0.0
      %826 = vmatprep.subr.mxu0 0.0
      %827 = vmatpush1.msra.mxu0 0.0
      %828 = vmatprep.subr.mxu0 0.0
      %829 = vmatpush1.msra.mxu0 0.0
      %830 = vmatprep.subr.mxu0 0.0
      %831 = vmatpush1.msra.mxu0 0.0
      %832 = vmatprep.subr.mxu0 0.0
      %833 = vmatpush1.msra.mxu0 0.0
      %834 = vmatprep.subr.mxu0 0.0
      %835 = vmatpush1.msra.mxu0 0.0
      %836 = vmatprep.subr.mxu0 0.0
      %837 = vmatpush1.msra.mxu0 0.0
      %838 = vmatprep.subr.mxu0 0.0
      %839 = vmatpush1.msra.mxu0 0.0
      %840 = vmatprep.subr.mxu0 0.0
      %841 = vmatpush1.msra.mxu0 0.0
      %842 = vmatprep.subr.mxu0 0.0
      %843 = vmatpush1.msra.mxu0 0.0
      %844 = vmatprep.subr.mxu0 0.0
      %845 = vmatpush1.msra.mxu0 0.0
      %846 = vmatprep.subr.mxu0 0.0
      %847 = vmatpush1.msra.mxu0 0.0
      %848 = vmatprep.subr.mxu0 0.0
      %849 = vmatpush1.msra.mxu0 0.0
      %850 = vmatprep.subr.mxu0 0.0
      %851 = vmatpush1.msra.mxu0 0.0
      %852 = vmatprep.subr.mxu0 0.0
      %853 = vmatpush1.msra.mxu0 0.0
      %854 = vmatprep.subr.mxu0 0.0
      %855 = vmatpush1.msra.mxu0 0.0
      %856 = vmatprep.subr.mxu0 0.0
      %857 = vmatpush1.msra.mxu0 0.0
      %858 = vmatprep.subr.mxu0 0.0
      %859 = vmatpush1.msra.mxu0 0.0
      %860 = vmatprep.subr.mxu0 0.0
      %861 = vmatpush1.msra.mxu0 0.0
      %862 = vmatprep.subr.mxu0 0.0
      %863 = vmatpush1.msra.mxu0 0.0
      %864 = vmatprep.subr.mxu0 0.0
      %865 = vmatpush1.msra.mxu0 0.0
      %866 = vmatprep.subr.mxu0 0.0
      %867 = vmatpush1.msra.mxu0 0.0
      %868 = vmatprep.subr.mxu0 0.0
      %869 = vmatpush1.msra.mxu0 0.0
      %870 = vmatprep.subr.mxu0 0.0
      %871 = vmatpush1.msra.mxu0 0.0
      %872 = vmatprep.subr.mxu0 0.0
      %873 = vmatpush1.msra.mxu0 0.0
      %874 = vmatprep.subr.mxu0 0.0
      %875 = vmatpush1.msra.mxu0 0.0
      %876 = vmatprep.subr.mxu0 0.0
      %877 = vmatpush1.msra.mxu0 0.0
      %878 = vmatprep.subr.mxu0 0.0
      %879 = vmatpush1.msra.mxu0 0.0
      %880 = vmatprep.subr.mxu0 0.0
      %881 = vmatpush1.msra.mxu0 0.0
      %882 = vmatprep.subr.mxu0 0.0
      %883 = vmatpush1.msra.mxu0 0.0
      %884 = vmatprep.subr.mxu0 0.0
      %885 = vmatpush1.msra.mxu0 0.0
      %886 = vmatprep.mubr.f32.mxu0 0.0
      %887 = vmatmul.mubr.f32.gmra.mrb[0].mxu0 %v816
      %v888 = vpop.f32.mrb[0].mxu0
      %v889 = vadd.f32 0.0, %v888
      %v890 = vpop.f32.mrb[0].mxu0
      %891 = vdwg.mxu0
      %v892 = vmul.f32 %v889, %v748
      %v894 = vsel %vm814, %v796, 0
      %896 = vmatprep.subr.mxu0 0.0
      %897 = vmatpush1.msra.mxu0 %v820
      %898 = vmatprep.subr.mxu0 0.0
      %899 = vmatpush1.msra.mxu0 0.0
      %900 = vmatprep.subr.mxu0 0.0
      %901 = vmatpush1.msra.mxu0 0.0
      %902 = vmatprep.subr.mxu0 0.0
      %903 = vmatpush1.msra.mxu0 0.0
      %904 = vmatprep.subr.mxu0 0.0
      %905 = vmatpush1.msra.mxu0 0.0
      %906 = vmatprep.subr.mxu0 0.0
      %907 = vmatpush1.msra.mxu0 0.0
      %908 = vmatprep.subr.mxu0 0.0
      %909 = vmatpush1.msra.mxu0 0.0
      %910 = vmatprep.subr.mxu0 0.0
      %911 = vmatpush1.msra.mxu0 0.0
      %912 = vmatprep.subr.mxu0 0.0
      %913 = vmatpush1.msra.mxu0 0.0
      %914 = vmatprep.subr.mxu0 0.0
      %915 = vmatpush1.msra.mxu0 0.0
      %916 = vmatprep.subr.mxu0 0.0
      %917 = vmatpush1.msra.mxu0 0.0
      %918 = vmatprep.subr.mxu0 0.0
      %919 = vmatpush1.msra.mxu0 0.0
      %920 = vmatprep.subr.mxu0 0.0
      %921 = vmatpush1.msra.mxu0 0.0
      %922 = vmatprep.subr.mxu0 0.0
      %923 = vmatpush1.msra.mxu0 0.0
      %924 = vmatprep.subr.mxu0 0.0
      %925 = vmatpush1.msra.mxu0 0.0
      %926 = vmatprep.subr.mxu0 0.0
      %927 = vmatpush1.msra.mxu0 0.0
      %928 = vmatprep.subr.mxu0 0.0
      %929 = vmatpush1.msra.mxu0 0.0
      %930 = vmatprep.subr.mxu0 0.0
      %931 = vmatpush1.msra.mxu0 0.0
      %932 = vmatprep.subr.mxu0 0.0
      %933 = vmatpush1.msra.mxu0 0.0
      %934 = vmatprep.subr.mxu0 0.0
      %935 = vmatpush1.msra.mxu0 0.0
      %936 = vmatprep.subr.mxu0 0.0
      %937 = vmatpush1.msra.mxu0 0.0
      %938 = vmatprep.subr.mxu0 0.0
      %939 = vmatpush1.msra.mxu0 0.0
      %940 = vmatprep.subr.mxu0 0.0
      %941 = vmatpush1.msra.mxu0 0.0
      %942 = vmatprep.subr.mxu0 0.0
      %943 = vmatpush1.msra.mxu0 0.0
      %944 = vmatprep.subr.mxu0 0.0
      %945 = vmatpush1.msra.mxu0 0.0
      %946 = vmatprep.subr.mxu0 0.0
      %947 = vmatpush1.msra.mxu0 0.0
      %948 = vmatprep.subr.mxu0 0.0
      %949 = vmatpush1.msra.mxu0 0.0
      %950 = vmatprep.subr.mxu0 0.0
      %951 = vmatpush1.msra.mxu0 0.0
      %952 = vmatprep.subr.mxu0 0.0
      %953 = vmatpush1.msra.mxu0 0.0
      %954 = vmatprep.subr.mxu0 0.0
      %955 = vmatpush1.msra.mxu0 0.0
      %956 = vmatprep.subr.mxu0 0.0
      %957 = vmatpush1.msra.mxu0 0.0
      %958 = vmatprep.subr.mxu0 0.0
      %959 = vmatpush1.msra.mxu0 0.0
      %960 = vmatprep.mubr.f32.mxu0 0.0
      %961 = vmatmul.mubr.f32.gmra.mrb[0].mxu0 %v894
      %v962 = vpop.f32.mrb[0].mxu0
      %v963 = vadd.f32 0.0, %v962
      %v964 = vpop.f32.mrb[0].mxu0
      %965 = vdwg.mxu0
      %v966 = vmul.f32 %v963, %v599
      %v967 = vadd.f32 %v892, %v966
      %v969 = vsel %vm814, %v799, 0
      %971 = vmatprep.subr.mxu0 0.0
      %972 = vmatpush1.msra.mxu0 %v820
      %973 = vmatprep.subr.mxu0 0.0
      %974 = vmatpush1.msra.mxu0 0.0
      %975 = vmatprep.subr.mxu0 0.0
      %976 = vmatpush1.msra.mxu0 0.0
      %977 = vmatprep.subr.mxu0 0.0
      %978 = vmatpush1.msra.mxu0 0.0
      %979 = vmatprep.subr.mxu0 0.0
      %980 = vmatpush1.msra.mxu0 0.0
      %981 = vmatprep.subr.mxu0 0.0
      %982 = vmatpush1.msra.mxu0 0.0
      %983 = vmatprep.subr.mxu0 0.0
      %984 = vmatpush1.msra.mxu0 0.0
      %985 = vmatprep.subr.mxu0 0.0
      %986 = vmatpush1.msra.mxu0 0.0
      %987 = vmatprep.subr.mxu0 0.0
      %988 = vmatpush1.msra.mxu0 0.0
      %989 = vmatprep.subr.mxu0 0.0
      %990 = vmatpush1.msra.mxu0 0.0
      %991 = vmatprep.subr.mxu0 0.0
      %992 = vmatpush1.msra.mxu0 0.0
      %993 = vmatprep.subr.mxu0 0.0
      %994 = vmatpush1.msra.mxu0 0.0
      %995 = vmatprep.subr.mxu0 0.0
      %996 = vmatpush1.msra.mxu0 0.0
      %997 = vmatprep.subr.mxu0 0.0
      %998 = vmatpush1.msra.mxu0 0.0
      %999 = vmatprep.subr.mxu0 0.0
      %1000 = vmatpush1.msra.mxu0 0.0
      %1001 = vmatprep.subr.mxu0 0.0
      %1002 = vmatpush1.msra.mxu0 0.0
      %1003 = vmatprep.subr.mxu0 0.0
      %1004 = vmatpush1.msra.mxu0 0.0
      %1005 = vmatprep.subr.mxu0 0.0
      %1006 = vmatpush1.msra.mxu0 0.0
      %1007 = vmatprep.subr.mxu0 0.0
      %1008 = vmatpush1.msra.mxu0 0.0
      %1009 = vmatprep.subr.mxu0 0.0
      %1010 = vmatpush1.msra.mxu0 0.0
      %1011 = vmatprep.subr.mxu0 0.0
      %1012 = vmatpush1.msra.mxu0 0.0
      %1013 = vmatprep.subr.mxu0 0.0
      %1014 = vmatpush1.msra.mxu0 0.0
      %1015 = vmatprep.subr.mxu0 0.0
      %1016 = vmatpush1.msra.mxu0 0.0
      %1017 = vmatprep.subr.mxu0 0.0
      %1018 = vmatpush1.msra.mxu0 0.0
      %1019 = vmatprep.subr.mxu0 0.0
      %1020 = vmatpush1.msra.mxu0 0.0
      %1021 = vmatprep.subr.mxu0 0.0
      %1022 = vmatpush1.msra.mxu0 0.0
      %1023 = vmatprep.subr.mxu0 0.0
      %1024 = vmatpush1.msra.mxu0 0.0
      %1025 = vmatprep.subr.mxu0 0.0
      %1026 = vmatpush1.msra.mxu0 0.0
      %1027 = vmatprep.subr.mxu0 0.0
      %1028 = vmatpush1.msra.mxu0 0.0
      %1029 = vmatprep.subr.mxu0 0.0
      %1030 = vmatpush1.msra.mxu0 0.0
      %1031 = vmatprep.subr.mxu0 0.0
      %1032 = vmatpush1.msra.mxu0 0.0
      %1033 = vmatprep.subr.mxu0 0.0
      %1034 = vmatpush1.msra.mxu0 0.0
      %1035 = vmatprep.mubr.f32.mxu0 0.0
      %1036 = vmatmul.mubr.f32.gmra.mrb[0].mxu0 %v969
      %v1037 = vpop.f32.mrb[0].mxu0
      %v1038 = vadd.f32 0.0, %v1037
      %v1039 = vpop.f32.mrb[0].mxu0
      %1040 = vdwg.mxu0
      %v1041 = vmul.f32 %v1038, %v752
      %v1042 = vadd.f32 %v967, %v1041
      %v1044 = vsel %vm814, %v801, 0
      %1046 = vmatprep.subr.mxu0 0.0
      %1047 = vmatpush1.msra.mxu0 %v820
      %1048 = vmatprep.subr.mxu0 0.0
      %1049 = vmatpush1.msra.mxu0 0.0
      %1050 = vmatprep.subr.mxu0 0.0
      %1051 = vmatpush1.msra.mxu0 0.0
      %1052 = vmatprep.subr.mxu0 0.0
      %1053 = vmatpush1.msra.mxu0 0.0
      %1054 = vmatprep.subr.mxu0 0.0
      %1055 = vmatpush1.msra.mxu0 0.0
      %1056 = vmatprep.subr.mxu0 0.0
      %1057 = vmatpush1.msra.mxu0 0.0
      %1058 = vmatprep.subr.mxu0 0.0
      %1059 = vmatpush1.msra.mxu0 0.0
      %1060 = vmatprep.subr.mxu0 0.0
      %1061 = vmatpush1.msra.mxu0 0.0
      %1062 = vmatprep.subr.mxu0 0.0
      %1063 = vmatpush1.msra.mxu0 0.0
      %1064 = vmatprep.subr.mxu0 0.0
      %1065 = vmatpush1.msra.mxu0 0.0
      %1066 = vmatprep.subr.mxu0 0.0
      %1067 = vmatpush1.msra.mxu0 0.0
      %1068 = vmatprep.subr.mxu0 0.0
      %1069 = vmatpush1.msra.mxu0 0.0
      %1070 = vmatprep.subr.mxu0 0.0
      %1071 = vmatpush1.msra.mxu0 0.0
      %1072 = vmatprep.subr.mxu0 0.0
      %1073 = vmatpush1.msra.mxu0 0.0
      %1074 = vmatprep.subr.mxu0 0.0
      %1075 = vmatpush1.msra.mxu0 0.0
      %1076 = vmatprep.subr.mxu0 0.0
      %1077 = vmatpush1.msra.mxu0 0.0
      %1078 = vmatprep.subr.mxu0 0.0
      %1079 = vmatpush1.msra.mxu0 0.0
      %1080 = vmatprep.subr.mxu0 0.0
      %1081 = vmatpush1.msra.mxu0 0.0
      %1082 = vmatprep.subr.mxu0 0.0
      %1083 = vmatpush1.msra.mxu0 0.0
      %1084 = vmatprep.subr.mxu0 0.0
      %1085 = vmatpush1.msra.mxu0 0.0
      %1086 = vmatprep.subr.mxu0 0.0
      %1087 = vmatpush1.msra.mxu0 0.0
      %1088 = vmatprep.subr.mxu0 0.0
      %1089 = vmatpush1.msra.mxu0 0.0
      %1090 = vmatprep.subr.mxu0 0.0
      %1091 = vmatpush1.msra.mxu0 0.0
      %1092 = vmatprep.subr.mxu0 0.0
      %1093 = vmatpush1.msra.mxu0 0.0
      %1094 = vmatprep.subr.mxu0 0.0
      %1095 = vmatpush1.msra.mxu0 0.0
      %1096 = vmatprep.subr.mxu0 0.0
      %1097 = vmatpush1.msra.mxu0 0.0
      %1098 = vmatprep.subr.mxu0 0.0
      %1099 = vmatpush1.msra.mxu0 0.0
      %1100 = vmatprep.subr.mxu0 0.0
      %1101 = vmatpush1.msra.mxu0 0.0
      %1102 = vmatprep.subr.mxu0 0.0
      %1103 = vmatpush1.msra.mxu0 0.0
      %1104 = vmatprep.subr.mxu0 0.0
      %1105 = vmatpush1.msra.mxu0 0.0
      %1106 = vmatprep.subr.mxu0 0.0
      %1107 = vmatpush1.msra.mxu0 0.0
      %1108 = vmatprep.subr.mxu0 0.0
      %1109 = vmatpush1.msra.mxu0 0.0
      %1110 = vmatprep.mubr.f32.mxu0 0.0
      %1111 = vmatmul.mubr.f32.gmra.mrb[0].mxu0 %v1044
      %v1112 = vpop.f32.mrb[0].mxu0
      %v1113 = vadd.f32 0.0, %v1112
      %v1114 = vpop.f32.mrb[0].mxu0
      %1115 = vdwg.mxu0
      %v1116 = vrcp.pop %v1113
      %v1117 = vmul.f32 %v1042, %v1116
      %vm1118 = vcmp.gt.f32.partialorder %v1117, 0.0
      %v1119 = vmul.f32 %v1117, 1.442695
      %v1120 = vpow.pop %v1119
      %v1121 = vsub.f32 %v1120, 1.0
      %v1122 = vsel %vm1118, %v1117, %v1121
      %1123 = vst [vmem:[%s517] sm:$0xff] %v1122
      %v1124 = vld [vmem:[%s9] sm:$0x3f]
      %vm1125 = vcmask 48128
      %v1127 = vsel %vm1125, %v523, 0
      %vm1129 = vcmask 1045504
      %v1131 = vsel %vm1129, %v1124, 0
      %1133 = vmatprep.subr.mxu0 0.0
      %1134 = vmatpush1.msra.mxu0 %v1131
      %1135 = vmatprep.subr.mxu0 0.0
      %1136 = vmatpush1.msra.mxu0 0.0
      %1137 = vmatprep.subr.mxu0 0.0
      %1138 = vmatpush1.msra.mxu0 0.0
      %1139 = vmatprep.subr.mxu0 0.0
      %1140 = vmatpush1.msra.mxu0 0.0
      %1141 = vmatprep.subr.mxu0 0.0
      %1142 = vmatpush1.msra.mxu0 0.0
      %1143 = vmatprep.subr.mxu0 0.0
      %1144 = vmatpush1.msra.mxu0 0.0
      %1145 = vmatprep.subr.mxu0 0.0
      %1146 = vmatpush1.msra.mxu0 0.0
      %1147 = vmatprep.subr.mxu0 0.0
      %1148 = vmatpush1.msra.mxu0 0.0
      %1149 = vmatprep.subr.mxu0 0.0
      %1150 = vmatpush1.msra.mxu0 0.0
      %1151 = vmatprep.subr.mxu0 0.0
      %1152 = vmatpush1.msra.mxu0 0.0
      %1153 = vmatprep.subr.mxu0 0.0
      %1154 = vmatpush1.msra.mxu0 0.0
      %1155 = vmatprep.subr.mxu0 0.0
      %1156 = vmatpush1.msra.mxu0 0.0
      %1157 = vmatprep.subr.mxu0 0.0
      %1158 = vmatpush1.msra.mxu0 0.0
      %1159 = vmatprep.subr.mxu0 0.0
      %1160 = vmatpush1.msra.mxu0 0.0
      %1161 = vmatprep.subr.mxu0 0.0
      %1162 = vmatpush1.msra.mxu0 0.0
      %1163 = vmatprep.subr.mxu0 0.0
      %1164 = vmatpush1.msra.mxu0 0.0
      %1165 = vmatprep.subr.mxu0 0.0
      %1166 = vmatpush1.msra.mxu0 0.0
      %1167 = vmatprep.subr.mxu0 0.0
      %1168 = vmatpush1.msra.mxu0 0.0
      %1169 = vmatprep.subr.mxu0 0.0
      %1170 = vmatpush1.msra.mxu0 0.0
      %1171 = vmatprep.subr.mxu0 0.0
      %1172 = vmatpush1.msra.mxu0 0.0
      %1173 = vmatprep.subr.mxu0 0.0
      %1174 = vmatpush1.msra.mxu0 0.0
      %1175 = vmatprep.subr.mxu0 0.0
      %1176 = vmatpush1.msra.mxu0 0.0
      %1177 = vmatprep.subr.mxu0 0.0
      %1178 = vmatpush1.msra.mxu0 0.0
      %1179 = vmatprep.subr.mxu0 0.0
      %1180 = vmatpush1.msra.mxu0 0.0
      %1181 = vmatprep.subr.mxu0 0.0
      %1182 = vmatpush1.msra.mxu0 0.0
      %1183 = vmatprep.subr.mxu0 0.0
      %1184 = vmatpush1.msra.mxu0 0.0
      %1185 = vmatprep.subr.mxu0 0.0
      %1186 = vmatpush1.msra.mxu0 0.0
      %1187 = vmatprep.subr.mxu0 0.0
      %1188 = vmatpush1.msra.mxu0 0.0
      %1189 = vmatprep.subr.mxu0 0.0
      %1190 = vmatpush1.msra.mxu0 0.0
      %1191 = vmatprep.subr.mxu0 0.0
      %1192 = vmatpush1.msra.mxu0 0.0
      %1193 = vmatprep.subr.mxu0 0.0
      %1194 = vmatpush1.msra.mxu0 0.0
      %1195 = vmatprep.subr.mxu0 0.0
      %1196 = vmatpush1.msra.mxu0 0.0
      %1197 = vmatprep.mubr.f32.mxu0 0.0
      %1198 = vmatmul.mubr.f32.gmra.mrb[0].mxu0 %v1127
      %v1199 = vpop.f32.mrb[0].mxu0
      %v1200 = vadd.f32 0.0, %v1199
      %v1201 = vpop.f32.mrb[0].mxu0
      %1202 = vdwg.mxu0
      %v1203 = vld [vmem:[%s10] sm:$0x3f]
      %v1205 = vsel %vm1129, %v1203, 0
      %1207 = vmatprep.subr.mxu0 0.0
      %1208 = vmatpush1.msra.mxu0 %v1205
      %1209 = vmatprep.subr.mxu0 0.0
      %1210 = vmatpush1.msra.mxu0 0.0
      %1211 = vmatprep.subr.mxu0 0.0
      %1212 = vmatpush1.msra.mxu0 0.0
      %1213 = vmatprep.subr.mxu0 0.0
      %1214 = vmatpush1.msra.mxu0 0.0
      %1215 = vmatprep.subr.mxu0 0.0
      %1216 = vmatpush1.msra.mxu0 0.0
      %1217 = vmatprep.subr.mxu0 0.0
      %1218 = vmatpush1.msra.mxu0 0.0
      %1219 = vmatprep.subr.mxu0 0.0
      %1220 = vmatpush1.msra.mxu0 0.0
      %1221 = vmatprep.subr.mxu0 0.0
      %1222 = vmatpush1.msra.mxu0 0.0
      %1223 = vmatprep.subr.mxu0 0.0
      %1224 = vmatpush1.msra.mxu0 0.0
      %1225 = vmatprep.subr.mxu0 0.0
      %1226 = vmatpush1.msra.mxu0 0.0
      %1227 = vmatprep.subr.mxu0 0.0
      %1228 = vmatpush1.msra.mxu0 0.0
      %1229 = vmatprep.subr.mxu0 0.0
      %1230 = vmatpush1.msra.mxu0 0.0
      %1231 = vmatprep.subr.mxu0 0.0
      %1232 = vmatpush1.msra.mxu0 0.0
      %1233 = vmatprep.subr.mxu0 0.0
      %1234 = vmatpush1.msra.mxu0 0.0
      %1235 = vmatprep.subr.mxu0 0.0
      %1236 = vmatpush1.msra.mxu0 0.0
      %1237 = vmatprep.subr.mxu0 0.0
      %1238 = vmatpush1.msra.mxu0 0.0
      %1239 = vmatprep.subr.mxu0 0.0
      %1240 = vmatpush1.msra.mxu0 0.0
      %1241 = vmatprep.subr.mxu0 0.0
      %1242 = vmatpush1.msra.mxu0 0.0
      %1243 = vmatprep.subr.mxu0 0.0
      %1244 = vmatpush1.msra.mxu0 0.0
      %1245 = vmatprep.subr.mxu0 0.0
      %1246 = vmatpush1.msra.mxu0 0.0
      %1247 = vmatprep.subr.mxu0 0.0
      %1248 = vmatpush1.msra.mxu0 0.0
      %1249 = vmatprep.subr.mxu0 0.0
      %1250 = vmatpush1.msra.mxu0 0.0
      %1251 = vmatprep.subr.mxu0 0.0
      %1252 = vmatpush1.msra.mxu0 0.0
      %1253 = vmatprep.subr.mxu0 0.0
      %1254 = vmatpush1.msra.mxu0 0.0
      %1255 = vmatprep.subr.mxu0 0.0
      %1256 = vmatpush1.msra.mxu0 0.0
      %1257 = vmatprep.subr.mxu0 0.0
      %1258 = vmatpush1.msra.mxu0 0.0
      %1259 = vmatprep.subr.mxu0 0.0
      %1260 = vmatpush1.msra.mxu0 0.0
      %1261 = vmatprep.subr.mxu0 0.0
      %1262 = vmatpush1.msra.mxu0 0.0
      %1263 = vmatprep.subr.mxu0 0.0
      %1264 = vmatpush1.msra.mxu0 0.0
      %1265 = vmatprep.subr.mxu0 0.0
      %1266 = vmatpush1.msra.mxu0 0.0
      %1267 = vmatprep.subr.mxu0 0.0
      %1268 = vmatpush1.msra.mxu0 0.0
      %1269 = vmatprep.subr.mxu0 0.0
      %1270 = vmatpush1.msra.mxu0 0.0
      %1271 = vmatprep.mubr.f32.mxu0 0.0
      %1272 = vmatmul.mubr.f32.gmra.mrb[0].mxu0 %v1127
      %v1273 = vpop.f32.mrb[0].mxu0
      %v1274 = vadd.f32 0.0, %v1273
      %v1275 = vpop.f32.mrb[0].mxu0
      %1276 = vdwg.mxu0
      %v1277 = vld [vmem:[%s11] sm:$0xf]
      %v1279 = vsel %vm1125, %v1277, 0
      %1281 = vmatprep.subr.mxu0 0.0
      %1282 = vmatpush1.xpose.msra.mxu0 %v1127
      %1283 = vmatprep.subr.mxu0 0.0
      %1284 = vmatpush1.xpose.msra.mxu0 0.0
      %1285 = vmatprep.subr.mxu0 0.0
      %1286 = vmatpush1.xpose.msra.mxu0 0.0
      %1287 = vmatprep.subr.mxu0 0.0
      %1288 = vmatpush1.xpose.msra.mxu0 0.0
      %1289 = vmatprep.subr.mxu0 0.0
      %1290 = vmatpush1.xpose.msra.mxu0 0.0
      %1291 = vmatprep.subr.mxu0 0.0
      %1292 = vmatpush1.xpose.msra.mxu0 0.0
      %1293 = vmatprep.subr.mxu0 0.0
      %1294 = vmatpush1.xpose.msra.mxu0 0.0
      %1295 = vmatprep.subr.mxu0 0.0
      %1296 = vmatpush1.xpose.msra.mxu0 0.0
      %1297 = vmatprep.subr.mxu0 0.0
      %1298 = vmatpush1.xpose.msra.mxu0 0.0
      %1299 = vmatprep.subr.mxu0 0.0
      %1300 = vmatpush1.xpose.msra.mxu0 0.0
      %1301 = vmatprep.subr.mxu0 0.0
      %1302 = vmatpush1.xpose.msra.mxu0 0.0
      %1303 = vmatprep.subr.mxu0 0.0
      %1304 = vmatpush1.xpose.msra.mxu0 0.0
      %1305 = vmatprep.subr.mxu0 0.0
      %1306 = vmatpush1.xpose.msra.mxu0 0.0
      %1307 = vmatprep.subr.mxu0 0.0
      %1308 = vmatpush1.xpose.msra.mxu0 0.0
      %1309 = vmatprep.subr.mxu0 0.0
      %1310 = vmatpush1.xpose.msra.mxu0 0.0
      %1311 = vmatprep.subr.mxu0 0.0
      %1312 = vmatpush1.xpose.msra.mxu0 0.0
      %1313 = vmatprep.subr.mxu0 0.0
      %1314 = vmatpush1.xpose.msra.mxu0 0.0
      %1315 = vmatprep.subr.mxu0 0.0
      %1316 = vmatpush1.xpose.msra.mxu0 0.0
      %1317 = vmatprep.subr.mxu0 0.0
      %1318 = vmatpush1.xpose.msra.mxu0 0.0
      %1319 = vmatprep.subr.mxu0 0.0
      %1320 = vmatpush1.xpose.msra.mxu0 0.0
      %1321 = vmatprep.subr.mxu0 0.0
      %1322 = vmatpush1.xpose.msra.mxu0 0.0
      %1323 = vmatprep.subr.mxu0 0.0
      %1324 = vmatpush1.xpose.msra.mxu0 0.0
      %1325 = vmatprep.subr.mxu0 0.0
      %1326 = vmatpush1.xpose.msra.mxu0 0.0
      %1327 = vmatprep.subr.mxu0 0.0
      %1328 = vmatpush1.xpose.msra.mxu0 0.0
      %1329 = vmatprep.subr.mxu0 0.0
      %1330 = vmatpush1.xpose.msra.mxu0 0.0
      %1331 = vmatprep.subr.mxu0 0.0
      %1332 = vmatpush1.xpose.msra.mxu0 0.0
      %1333 = vmatprep.subr.mxu0 0.0
      %1334 = vmatpush1.xpose.msra.mxu0 0.0
      %1335 = vmatprep.subr.mxu0 0.0
      %1336 = vmatpush1.xpose.msra.mxu0 0.0
      %1337 = vmatprep.subr.mxu0 0.0
      %1338 = vmatpush1.xpose.msra.mxu0 0.0
      %1339 = vmatprep.subr.mxu0 0.0
      %1340 = vmatpush1.xpose.msra.mxu0 0.0
      %1341 = vmatprep.subr.mxu0 0.0
      %1342 = vmatpush1.xpose.msra.mxu0 0.0
      %1343 = vmatprep.subr.mxu0 0.0
      %1344 = vmatpush1.xpose.msra.mxu0 0.0
      %1345 = vmatprep.mubr.f32.mxu0 0.0
      %1346 = vmatmul.mubr.f32.gmra.mrb[0].mxu0 %v1279
      %v1347 = vpop.f32.mrb[0].mxu0
      %v1348 = vadd.f32 0.0, %v1347
      %v1349 = vpop.f32.mrb[0].mxu0
      %1350 = vdwg.mxu0
      %s1351 = smul.u32 %s32, 128
      %s1352 = sld [smem:[#allocation3 + %s1351]]
      %s1353 = scalar_lea.vmem %s497, %s1352
      %v1354 = vld [vmem:[%s1353] sm:$0x1]
      %s1355 = sadd.s32 %s1351, 1
      %s1356 = sld [smem:[#allocation3 + %s1355]]
      %s1357 = scalar_lea.vmem %s497, %s1356
      %v1358 = vld [vmem:[%s1357] sm:$0x1]
      %s1359 = sadd.s32 %s1351, 2
      %s1360 = sld [smem:[#allocation3 + %s1359]]
      %s1361 = scalar_lea.vmem %s497, %s1360
      %v1362 = vld [vmem:[%s1361] sm:$0x1]
      %v1364 = vrot.slane %v1358, 7
      %v1367 = vrot.slane %v1362, 6
      %v1369 = vsel %vm747, %v1354, %v1364
      %vm1370 = vcmask 1041408
      %v1371 = vsel %vm1370, %v1369, %v1367
      %v1372 = vld [vmem:[%s12] sm:$0xff]
      %v1374 = vsel %vm528, %v1371, 0
      %1376 = vmatprep.subr.mxu0 0.0
      %1377 = vmatpush1.msra.mxu0 %v1372
      %1378 = vmatprep.subr.mxu0 0.0
      %1379 = vmatpush1.msra.mxu0 0.0
      %1380 = vmatprep.subr.mxu0 0.0
      %1381 = vmatpush1.msra.mxu0 0.0
      %1382 = vmatprep.subr.mxu0 0.0
      %1383 = vmatpush1.msra.mxu0 0.0
      %1384 = vmatprep.subr.mxu0 0.0
      %1385 = vmatpush1.msra.mxu0 0.0
      %1386 = vmatprep.subr.mxu0 0.0
      %1387 = vmatpush1.msra.mxu0 0.0
      %1388 = vmatprep.subr.mxu0 0.0
      %1389 = vmatpush1.msra.mxu0 0.0
      %1390 = vmatprep.subr.mxu0 0.0
      %1391 = vmatpush1.msra.mxu0 0.0
      %1392 = vmatprep.subr.mxu0 0.0
      %1393 = vmatpush1.msra.mxu0 0.0
      %1394 = vmatprep.subr.mxu0 0.0
      %1395 = vmatpush1.msra.mxu0 0.0
      %1396 = vmatprep.subr.mxu0 0.0
      %1397 = vmatpush1.msra.mxu0 0.0
      %1398 = vmatprep.subr.mxu0 0.0
      %1399 = vmatpush1.msra.mxu0 0.0
      %1400 = vmatprep.subr.mxu0 0.0
      %1401 = vmatpush1.msra.mxu0 0.0
      %1402 = vmatprep.subr.mxu0 0.0
      %1403 = vmatpush1.msra.mxu0 0.0
      %1404 = vmatprep.subr.mxu0 0.0
      %1405 = vmatpush1.msra.mxu0 0.0
      %1406 = vmatprep.subr.mxu0 0.0
      %1407 = vmatpush1.msra.mxu0 0.0
      %1408 = vmatprep.subr.mxu0 0.0
      %1409 = vmatpush1.msra.mxu0 0.0
      %1410 = vmatprep.subr.mxu0 0.0
      %1411 = vmatpush1.msra.mxu0 0.0
      %1412 = vmatprep.subr.mxu0 0.0
      %1413 = vmatpush1.msra.mxu0 0.0
      %1414 = vmatprep.subr.mxu0 0.0
      %1415 = vmatpush1.msra.mxu0 0.0
      %1416 = vmatprep.subr.mxu0 0.0
      %1417 = vmatpush1.msra.mxu0 0.0
      %1418 = vmatprep.subr.mxu0 0.0
      %1419 = vmatpush1.msra.mxu0 0.0
      %1420 = vmatprep.subr.mxu0 0.0
      %1421 = vmatpush1.msra.mxu0 0.0
      %1422 = vmatprep.subr.mxu0 0.0
      %1423 = vmatpush1.msra.mxu0 0.0
      %1424 = vmatprep.subr.mxu0 0.0
      %1425 = vmatpush1.msra.mxu0 0.0
      %1426 = vmatprep.subr.mxu0 0.0
      %1427 = vmatpush1.msra.mxu0 0.0
      %1428 = vmatprep.subr.mxu0 0.0
      %1429 = vmatpush1.msra.mxu0 0.0
      %1430 = vmatprep.subr.mxu0 0.0
      %1431 = vmatpush1.msra.mxu0 0.0
      %1432 = vmatprep.subr.mxu0 0.0
      %1433 = vmatpush1.msra.mxu0 0.0
      %1434 = vmatprep.subr.mxu0 0.0
      %1435 = vmatpush1.msra.mxu0 0.0
      %1436 = vmatprep.subr.mxu0 0.0
      %1437 = vmatpush1.msra.mxu0 0.0
      %1438 = vmatprep.subr.mxu0 0.0
      %1439 = vmatpush1.msra.mxu0 0.0
      %1440 = vmatprep.mubr.f32.mxu0 0.0
      %1441 = vmatmul.mubr.f32.gmra.mrb[0].mxu0 %v1374
      %v1442 = vpop.f32.mrb[0].mxu0
      %v1443 = vadd.f32 0.0, %v1442
      %v1444 = vpop.f32.mrb[0].mxu0
      %1445 = vdwg.mxu0
      %v1447 = vrot.slane %v1443, 5
      %v1449 = vrot.slane %v1443, 2
      %v1451 = vrot.slane %v1443, 7
      %vm1453 = vcmask 1042432
      %v1454 = vsel %vm1453, %v1443, %v1447
      %v1455 = vsel %vm1129, %v1454, %v1449
      %v1456 = vsel %vm747, %v1449, %v1451
      %v1457 = vadd.s32 %v803, 8
      %v1458 = vmul.u32 %v805, 3
      %vm1459 = vcmp.ge.s32.totalorder %v803, %v1458
      %vm1460 = vcmp.ge.s32.totalorder %v1457, %v1458
      %v1461 = vadd.s32 %v805, 1
      %v1462 = vmul.u32 %v1461, 3
      %vm1463 = vcmp.lt.s32.totalorder %v803, %v1462
      %vm1464 = vcmp.lt.s32.totalorder %v1457, %v1462
      %vm1465 = vmand %vm1459, %vm1463
      %vm1466 = vmand %vm1460, %vm1464
      %v1467 = vsel %vm1465, 1, 0
      %v1468 = vsel %vm1466, 1, 0
      %v1469 = vcvt.s32.f32 %v1467
      %v1470 = vcvt.s32.f32 %v1468
      %1472 = vset.pattern.permute.xlu0 0
      %1473 = vperm.xlu0 %1472, %v1455
      %v1474 = vpop.permute.xlu0 %1473
      %1477 = vset.pattern.permute.xlu0 0
      %1478 = vperm.xlu0 %1477, %v1456
      %v1479 = vpop.permute.xlu0 %1478
      %v1481 = vmul.f32 %v1469, %v1474
      %v1482 = vmul.f32 %v1470, %v1479
      %vm1483 = vcmask 97280
      %v1485 = vsel %vm1483, %v526, 0
      %v1488 = vsel %vm818, %v1482, 0
      %1490 = vmatprep.subr.mxu0 0.0
      %1491 = vmatpush1.msra.mxu0 %v1481
      %1492 = vmatprep.subr.mxu0 0.0
      %1493 = vmatpush1.msra.mxu0 %v1488
      %1494 = vmatprep.subr.mxu0 0.0
      %1495 = vmatpush1.msra.mxu0 0.0
      %1496 = vmatprep.subr.mxu0 0.0
      %1497 = vmatpush1.msra.mxu0 0.0
      %1498 = vmatprep.subr.mxu0 0.0
      %1499 = vmatpush1.msra.mxu0 0.0
      %1500 = vmatprep.subr.mxu0 0.0
      %1501 = vmatpush1.msra.mxu0 0.0
      %1502 = vmatprep.subr.mxu0 0.0
      %1503 = vmatpush1.msra.mxu0 0.0
      %1504 = vmatprep.subr.mxu0 0.0
      %1505 = vmatpush1.msra.mxu0 0.0
      %1506 = vmatprep.subr.mxu0 0.0
      %1507 = vmatpush1.msra.mxu0 0.0
      %1508 = vmatprep.subr.mxu0 0.0
      %1509 = vmatpush1.msra.mxu0 0.0
      %1510 = vmatprep.subr.mxu0 0.0
      %1511 = vmatpush1.msra.mxu0 0.0
      %1512 = vmatprep.subr.mxu0 0.0
      %1513 = vmatpush1.msra.mxu0 0.0
      %1514 = vmatprep.subr.mxu0 0.0
      %1515 = vmatpush1.msra.mxu0 0.0
      %1516 = vmatprep.subr.mxu0 0.0
      %1517 = vmatpush1.msra.mxu0 0.0
      %1518 = vmatprep.subr.mxu0 0.0
      %1519 = vmatpush1.msra.mxu0 0.0
      %1520 = vmatprep.subr.mxu0 0.0
      %1521 = vmatpush1.msra.mxu0 0.0
      %1522 = vmatprep.subr.mxu0 0.0
      %1523 = vmatpush1.msra.mxu0 0.0
      %1524 = vmatprep.subr.mxu0 0.0
      %1525 = vmatpush1.msra.mxu0 0.0
      %1526 = vmatprep.subr.mxu0 0.0
      %1527 = vmatpush1.msra.mxu0 0.0
      %1528 = vmatprep.subr.mxu0 0.0
      %1529 = vmatpush1.msra.mxu0 0.0
      %1530 = vmatprep.subr.mxu0 0.0
      %1531 = vmatpush1.msra.mxu0 0.0
      %1532 = vmatprep.subr.mxu0 0.0
      %1533 = vmatpush1.msra.mxu0 0.0
      %1534 = vmatprep.subr.mxu0 0.0
      %1535 = vmatpush1.msra.mxu0 0.0
      %1536 = vmatprep.subr.mxu0 0.0
      %1537 = vmatpush1.msra.mxu0 0.0
      %1538 = vmatprep.subr.mxu0 0.0
      %1539 = vmatpush1.msra.mxu0 0.0
      %1540 = vmatprep.subr.mxu0 0.0
      %1541 = vmatpush1.msra.mxu0 0.0
      %1542 = vmatprep.subr.mxu0 0.0
      %1543 = vmatpush1.msra.mxu0 0.0
      %1544 = vmatprep.subr.mxu0 0.0
      %1545 = vmatpush1.msra.mxu0 0.0
      %1546 = vmatprep.subr.mxu0 0.0
      %1547 = vmatpush1.msra.mxu0 0.0
      %1548 = vmatprep.subr.mxu0 0.0
      %1549 = vmatpush1.msra.mxu0 0.0
      %1550 = vmatprep.subr.mxu0 0.0
      %1551 = vmatpush1.msra.mxu0 0.0
      %1552 = vmatprep.subr.mxu0 0.0
      %1553 = vmatpush1.msra.mxu0 0.0
      %1554 = vmatprep.mubr.f32.mxu0 0.0
      %1555 = vmatmul.mubr.f32.gmra.mrb[0].mxu0 %v1485
      %v1556 = vpop.f32.mrb[0].mxu0
      %v1557 = vadd.f32 0.0, %v1556
      %v1558 = vpop.f32.mrb[0].mxu0
      %1559 = vdwg.mxu0
      %1561 = vset.pattern.permute.xlu0 0
      %1562 = vperm.xlu0 %1561, %v1274
      %v1563 = vpop.permute.xlu0 %1562
      %v1565 = vlaneseq
      %v1566 = vshrl.u32 %v1565, 7
      %v1567 = vsub.s32 0, %v1566
      %v1568 = vrot.slane %v1348, %v1567
      %v1569 = vadd.f32 %v1563, %v1568
      %v1570 = vadd.f32 %v1569, %v1557
      %vm1571 = vcmp.gt.f32.partialorder %v1570, 0.0
      %v1572 = vmul.f32 %v1570, 0.2
      %v1573 = vsel %vm1571, %v1570, %v1572
      %vm1574 = vcmp.gt.f32.partialorder %v525, 0.0
      %v1575 = vsel %vm1574, %v1573, -9e+15
      %vm1576 = vcmask 27648
      %v1577 = vsel %vm1576, %v1575, -inf
      %1578 = vmax.xlane.f32.xlu0 %v1577
      %v1579 = vpop.xlane.xlu0 %1578
      %v1580 = vsub.f32 %v1575, %v1579
      %v1581 = vmul.f32 %v1580, 1.442695
      %v1582 = vpow.pop %v1581
      %v1583 = vsel %vm1576, %v1582, 0.0
      %1584 = vadd.xlane.f32.xlu0 %v1583
      %v1585 = vpop.xlane.xlu0 %1584
      %v1586 = vrcp.pop %v1585
      %v1587 = vmul.f32 %v1582, %v1586
      %v1589 = vsel %vm814, %v1587, 0
      %v1592 = vsel %vm818, %v1200, 0
      %1594 = vmatprep.subr.mxu0 0.0
      %1595 = vmatpush1.msra.mxu0 %v1592
      %1596 = vmatprep.subr.mxu0 0.0
      %1597 = vmatpush1.msra.mxu0 0.0
      %1598 = vmatprep.subr.mxu0 0.0
      %1599 = vmatpush1.msra.mxu0 0.0
      %1600 = vmatprep.subr.mxu0 0.0
      %1601 = vmatpush1.msra.mxu0 0.0
      %1602 = vmatprep.subr.mxu0 0.0
      %1603 = vmatpush1.msra.mxu0 0.0
      %1604 = vmatprep.subr.mxu0 0.0
      %1605 = vmatpush1.msra.mxu0 0.0
      %1606 = vmatprep.subr.mxu0 0.0
      %1607 = vmatpush1.msra.mxu0 0.0
      %1608 = vmatprep.subr.mxu0 0.0
      %1609 = vmatpush1.msra.mxu0 0.0
      %1610 = vmatprep.subr.mxu0 0.0
      %1611 = vmatpush1.msra.mxu0 0.0
      %1612 = vmatprep.subr.mxu0 0.0
      %1613 = vmatpush1.msra.mxu0 0.0
      %1614 = vmatprep.subr.mxu0 0.0
      %1615 = vmatpush1.msra.mxu0 0.0
      %1616 = vmatprep.subr.mxu0 0.0
      %1617 = vmatpush1.msra.mxu0 0.0
      %1618 = vmatprep.subr.mxu0 0.0
      %1619 = vmatpush1.msra.mxu0 0.0
      %1620 = vmatprep.subr.mxu0 0.0
      %1621 = vmatpush1.msra.mxu0 0.0
      %1622 = vmatprep.subr.mxu0 0.0
      %1623 = vmatpush1.msra.mxu0 0.0
      %1624 = vmatprep.subr.mxu0 0.0
      %1625 = vmatpush1.msra.mxu0 0.0
      %1626 = vmatprep.subr.mxu0 0.0
      %1627 = vmatpush1.msra.mxu0 0.0
      %1628 = vmatprep.subr.mxu0 0.0
      %1629 = vmatpush1.msra.mxu0 0.0
      %1630 = vmatprep.subr.mxu0 0.0
      %1631 = vmatpush1.msra.mxu0 0.0
      %1632 = vmatprep.subr.mxu0 0.0
      %1633 = vmatpush1.msra.mxu0 0.0
      %1634 = vmatprep.subr.mxu0 0.0
      %1635 = vmatpush1.msra.mxu0 0.0
      %1636 = vmatprep.subr.mxu0 0.0
      %1637 = vmatpush1.msra.mxu0 0.0
      %1638 = vmatprep.subr.mxu0 0.0
      %1639 = vmatpush1.msra.mxu0 0.0
      %1640 = vmatprep.subr.mxu0 0.0
      %1641 = vmatpush1.msra.mxu0 0.0
      %1642 = vmatprep.subr.mxu0 0.0
      %1643 = vmatpush1.msra.mxu0 0.0
      %1644 = vmatprep.subr.mxu0 0.0
      %1645 = vmatpush1.msra.mxu0 0.0
      %1646 = vmatprep.subr.mxu0 0.0
      %1647 = vmatpush1.msra.mxu0 0.0
      %1648 = vmatprep.subr.mxu0 0.0
      %1649 = vmatpush1.msra.mxu0 0.0
      %1650 = vmatprep.subr.mxu0 0.0
      %1651 = vmatpush1.msra.mxu0 0.0
      %1652 = vmatprep.subr.mxu0 0.0
      %1653 = vmatpush1.msra.mxu0 0.0
      %1654 = vmatprep.subr.mxu0 0.0
      %1655 = vmatpush1.msra.mxu0 0.0
      %1656 = vmatprep.subr.mxu0 0.0
      %1657 = vmatpush1.msra.mxu0 0.0
      %1658 = vmatprep.mubr.f32.mxu0 0.0
      %1659 = vmatmul.mubr.f32.gmra.mrb[0].mxu0 %v1589
      %v1660 = vpop.f32.mrb[0].mxu0
      %v1661 = vadd.f32 0.0, %v1660
      %v1662 = vpop.f32.mrb[0].mxu0
      %1663 = vdwg.mxu0
      %1664 = vset.pattern.permute.xlu0 1
      %1665 = vperm.xlu0 %1664, %v1455
      %v1666 = vpop.permute.xlu0 %1665
      %1668 = vset.pattern.permute.xlu0 1
      %1669 = vperm.xlu0 %1668, %v1456
      %v1670 = vpop.permute.xlu0 %1669
      %v1672 = vmul.f32 %v1469, %v1666
      %v1673 = vmul.f32 %v1470, %v1670
      %v1675 = vsel %vm818, %v1673, 0
      %1677 = vmatprep.subr.mxu0 0.0
      %1678 = vmatpush1.msra.mxu0 %v1672
      %1679 = vmatprep.subr.mxu0 0.0
      %1680 = vmatpush1.msra.mxu0 %v1675
      %1681 = vmatprep.subr.mxu0 0.0
      %1682 = vmatpush1.msra.mxu0 0.0
      %1683 = vmatprep.subr.mxu0 0.0
      %1684 = vmatpush1.msra.mxu0 0.0
      %1685 = vmatprep.subr.mxu0 0.0
      %1686 = vmatpush1.msra.mxu0 0.0
      %1687 = vmatprep.subr.mxu0 0.0
      %1688 = vmatpush1.msra.mxu0 0.0
      %1689 = vmatprep.subr.mxu0 0.0
      %1690 = vmatpush1.msra.mxu0 0.0
      %1691 = vmatprep.subr.mxu0 0.0
      %1692 = vmatpush1.msra.mxu0 0.0
      %1693 = vmatprep.subr.mxu0 0.0
      %1694 = vmatpush1.msra.mxu0 0.0
      %1695 = vmatprep.subr.mxu0 0.0
      %1696 = vmatpush1.msra.mxu0 0.0
      %1697 = vmatprep.subr.mxu0 0.0
      %1698 = vmatpush1.msra.mxu0 0.0
      %1699 = vmatprep.subr.mxu0 0.0
      %1700 = vmatpush1.msra.mxu0 0.0
      %1701 = vmatprep.subr.mxu0 0.0
      %1702 = vmatpush1.msra.mxu0 0.0
      %1703 = vmatprep.subr.mxu0 0.0
      %1704 = vmatpush1.msra.mxu0 0.0
      %1705 = vmatprep.subr.mxu0 0.0
      %1706 = vmatpush1.msra.mxu0 0.0
      %1707 = vmatprep.subr.mxu0 0.0
      %1708 = vmatpush1.msra.mxu0 0.0
      %1709 = vmatprep.subr.mxu0 0.0
      %1710 = vmatpush1.msra.mxu0 0.0
      %1711 = vmatprep.subr.mxu0 0.0
      %1712 = vmatpush1.msra.mxu0 0.0
      %1713 = vmatprep.subr.mxu0 0.0
      %1714 = vmatpush1.msra.mxu0 0.0
      %1715 = vmatprep.subr.mxu0 0.0
      %1716 = vmatpush1.msra.mxu0 0.0
      %1717 = vmatprep.subr.mxu0 0.0
      %1718 = vmatpush1.msra.mxu0 0.0
      %1719 = vmatprep.subr.mxu0 0.0
      %1720 = vmatpush1.msra.mxu0 0.0
      %1721 = vmatprep.subr.mxu0 0.0
      %1722 = vmatpush1.msra.mxu0 0.0
      %1723 = vmatprep.subr.mxu0 0.0
      %1724 = vmatpush1.msra.mxu0 0.0
      %1725 = vmatprep.subr.mxu0 0.0
      %1726 = vmatpush1.msra.mxu0 0.0
      %1727 = vmatprep.subr.mxu0 0.0
      %1728 = vmatpush1.msra.mxu0 0.0
      %1729 = vmatprep.subr.mxu0 0.0
      %1730 = vmatpush1.msra.mxu0 0.0
      %1731 = vmatprep.subr.mxu0 0.0
      %1732 = vmatpush1.msra.mxu0 0.0
      %1733 = vmatprep.subr.mxu0 0.0
      %1734 = vmatpush1.msra.mxu0 0.0
      %1735 = vmatprep.subr.mxu0 0.0
      %1736 = vmatpush1.msra.mxu0 0.0
      %1737 = vmatprep.subr.mxu0 0.0
      %1738 = vmatpush1.msra.mxu0 0.0
      %1739 = vmatprep.subr.mxu0 0.0
      %1740 = vmatpush1.msra.mxu0 0.0
      %1741 = vmatprep.mubr.f32.mxu0 0.0
      %1742 = vmatmul.mubr.f32.gmra.mrb[0].mxu0 %v1485
      %v1743 = vpop.f32.mrb[0].mxu0
      %v1744 = vadd.f32 0.0, %v1743
      %v1745 = vpop.f32.mrb[0].mxu0
      %1746 = vdwg.mxu0
      %1747 = vset.pattern.permute.xlu0 1
      %1748 = vperm.xlu0 %1747, %v1274
      %v1749 = vpop.permute.xlu0 %1748
      %v1751 = vlaneseq
      %v1752 = vshrl.u32 %v1751, 7
      %v1753 = vsub.s32 1, %v1752
      %v1754 = vrot.slane %v1348, %v1753
      %v1755 = vadd.f32 %v1749, %v1754
      %v1756 = vadd.f32 %v1755, %v1744
      %vm1757 = vcmp.gt.f32.partialorder %v1756, 0.0
      %v1758 = vmul.f32 %v1756, 0.2
      %v1759 = vsel %vm1757, %v1756, %v1758
      %v1760 = vsel %vm1574, %v1759, -9e+15
      %v1761 = vsel %vm1576, %v1760, -inf
      %1762 = vmax.xlane.f32.xlu0 %v1761
      %v1763 = vpop.xlane.xlu0 %1762
      %v1764 = vsub.f32 %v1760, %v1763
      %v1765 = vmul.f32 %v1764, 1.442695
      %v1766 = vpow.pop %v1765
      %v1767 = vsel %vm1576, %v1766, 0.0
      %1768 = vadd.xlane.f32.xlu0 %v1767
      %v1769 = vpop.xlane.xlu0 %1768
      %v1770 = vrcp.pop %v1769
      %v1771 = vmul.f32 %v1766, %v1770
      %1772 = vrot.lane.b32.xlu0 %v1200, 96
      %v1773 = vpop.permute.xlu0 %1772
      %v1775 = vsel %vm814, %v1771, 0
      %v1777 = vsel %vm818, %v1773, 0
      %1779 = vmatprep.subr.mxu0 0.0
      %1780 = vmatpush1.msra.mxu0 %v1777
      %1781 = vmatprep.subr.mxu0 0.0
      %1782 = vmatpush1.msra.mxu0 0.0
      %1783 = vmatprep.subr.mxu0 0.0
      %1784 = vmatpush1.msra.mxu0 0.0
      %1785 = vmatprep.subr.mxu0 0.0
      %1786 = vmatpush1.msra.mxu0 0.0
      %1787 = vmatprep.subr.mxu0 0.0
      %1788 = vmatpush1.msra.mxu0 0.0
      %1789 = vmatprep.subr.mxu0 0.0
      %1790 = vmatpush1.msra.mxu0 0.0
      %1791 = vmatprep.subr.mxu0 0.0
      %1792 = vmatpush1.msra.mxu0 0.0
      %1793 = vmatprep.subr.mxu0 0.0
      %1794 = vmatpush1.msra.mxu0 0.0
      %1795 = vmatprep.subr.mxu0 0.0
      %1796 = vmatpush1.msra.mxu0 0.0
      %1797 = vmatprep.subr.mxu0 0.0
      %1798 = vmatpush1.msra.mxu0 0.0
      %1799 = vmatprep.subr.mxu0 0.0
      %1800 = vmatpush1.msra.mxu0 0.0
      %1801 = vmatprep.subr.mxu0 0.0
      %1802 = vmatpush1.msra.mxu0 0.0
      %1803 = vmatprep.subr.mxu0 0.0
      %1804 = vmatpush1.msra.mxu0 0.0
      %1805 = vmatprep.subr.mxu0 0.0
      %1806 = vmatpush1.msra.mxu0 0.0
      %1807 = vmatprep.subr.mxu0 0.0
      %1808 = vmatpush1.msra.mxu0 0.0
      %1809 = vmatprep.subr.mxu0 0.0
      %1810 = vmatpush1.msra.mxu0 0.0
      %1811 = vmatprep.subr.mxu0 0.0
      %1812 = vmatpush1.msra.mxu0 0.0
      %1813 = vmatprep.subr.mxu0 0.0
      %1814 = vmatpush1.msra.mxu0 0.0
      %1815 = vmatprep.subr.mxu0 0.0
      %1816 = vmatpush1.msra.mxu0 0.0
      %1817 = vmatprep.subr.mxu0 0.0
      %1818 = vmatpush1.msra.mxu0 0.0
      %1819 = vmatprep.subr.mxu0 0.0
      %1820 = vmatpush1.msra.mxu0 0.0
      %1821 = vmatprep.subr.mxu0 0.0
      %1822 = vmatpush1.msra.mxu0 0.0
      %1823 = vmatprep.subr.mxu0 0.0
      %1824 = vmatpush1.msra.mxu0 0.0
      %1825 = vmatprep.subr.mxu0 0.0
      %1826 = vmatpush1.msra.mxu0 0.0
      %1827 = vmatprep.subr.mxu0 0.0
      %1828 = vmatpush1.msra.mxu0 0.0
      %1829 = vmatprep.subr.mxu0 0.0
      %1830 = vmatpush1.msra.mxu0 0.0
      %1831 = vmatprep.subr.mxu0 0.0
      %1832 = vmatpush1.msra.mxu0 0.0
      %1833 = vmatprep.subr.mxu0 0.0
      %1834 = vmatpush1.msra.mxu0 0.0
      %1835 = vmatprep.subr.mxu0 0.0
      %1836 = vmatpush1.msra.mxu0 0.0
      %1837 = vmatprep.subr.mxu0 0.0
      %1838 = vmatpush1.msra.mxu0 0.0
      %1839 = vmatprep.subr.mxu0 0.0
      %1840 = vmatpush1.msra.mxu0 0.0
      %1841 = vmatprep.subr.mxu0 0.0
      %1842 = vmatpush1.msra.mxu0 0.0
      %1843 = vmatprep.mubr.f32.mxu0 0.0
      %1844 = vmatmul.mubr.f32.gmra.mrb[0].mxu0 %v1775
      %v1845 = vpop.f32.mrb[0].mxu0
      %v1846 = vadd.f32 0.0, %v1845
      %v1847 = vpop.f32.mrb[0].mxu0
      %1848 = vdwg.mxu0
      %1849 = vset.pattern.permute.xlu0 2
      %1850 = vperm.xlu0 %1849, %v1455
      %v1851 = vpop.permute.xlu0 %1850
      %1853 = vset.pattern.permute.xlu0 2
      %1854 = vperm.xlu0 %1853, %v1456
      %v1855 = vpop.permute.xlu0 %1854
      %v1857 = vmul.f32 %v1469, %v1851
      %v1858 = vmul.f32 %v1470, %v1855
      %v1860 = vsel %vm818, %v1858, 0
      %1862 = vmatprep.subr.mxu0 0.0
      %1863 = vmatpush1.msra.mxu0 %v1857
      %1864 = vmatprep.subr.mxu0 0.0
      %1865 = vmatpush1.msra.mxu0 %v1860
      %1866 = vmatprep.subr.mxu0 0.0
      %1867 = vmatpush1.msra.mxu0 0.0
      %1868 = vmatprep.subr.mxu0 0.0
      %1869 = vmatpush1.msra.mxu0 0.0
      %1870 = vmatprep.subr.mxu0 0.0
      %1871 = vmatpush1.msra.mxu0 0.0
      %1872 = vmatprep.subr.mxu0 0.0
      %1873 = vmatpush1.msra.mxu0 0.0
      %1874 = vmatprep.subr.mxu0 0.0
      %1875 = vmatpush1.msra.mxu0 0.0
      %1876 = vmatprep.subr.mxu0 0.0
      %1877 = vmatpush1.msra.mxu0 0.0
      %1878 = vmatprep.subr.mxu0 0.0
      %1879 = vmatpush1.msra.mxu0 0.0
      %1880 = vmatprep.subr.mxu0 0.0
      %1881 = vmatpush1.msra.mxu0 0.0
      %1882 = vmatprep.subr.mxu0 0.0
      %1883 = vmatpush1.msra.mxu0 0.0
      %1884 = vmatprep.subr.mxu0 0.0
      %1885 = vmatpush1.msra.mxu0 0.0
      %1886 = vmatprep.subr.mxu0 0.0
      %1887 = vmatpush1.msra.mxu0 0.0
      %1888 = vmatprep.subr.mxu0 0.0
      %1889 = vmatpush1.msra.mxu0 0.0
      %1890 = vmatprep.subr.mxu0 0.0
      %1891 = vmatpush1.msra.mxu0 0.0
      %1892 = vmatprep.subr.mxu0 0.0
      %1893 = vmatpush1.msra.mxu0 0.0
      %1894 = vmatprep.subr.mxu0 0.0
      %1895 = vmatpush1.msra.mxu0 0.0
      %1896 = vmatprep.subr.mxu0 0.0
      %1897 = vmatpush1.msra.mxu0 0.0
      %1898 = vmatprep.subr.mxu0 0.0
      %1899 = vmatpush1.msra.mxu0 0.0
      %1900 = vmatprep.subr.mxu0 0.0
      %1901 = vmatpush1.msra.mxu0 0.0
      %1902 = vmatprep.subr.mxu0 0.0
      %1903 = vmatpush1.msra.mxu0 0.0
      %1904 = vmatprep.subr.mxu0 0.0
      %1905 = vmatpush1.msra.mxu0 0.0
      %1906 = vmatprep.subr.mxu0 0.0
      %1907 = vmatpush1.msra.mxu0 0.0
      %1908 = vmatprep.subr.mxu0 0.0
      %1909 = vmatpush1.msra.mxu0 0.0
      %1910 = vmatprep.subr.mxu0 0.0
      %1911 = vmatpush1.msra.mxu0 0.0
      %1912 = vmatprep.subr.mxu0 0.0
      %1913 = vmatpush1.msra.mxu0 0.0
      %1914 = vmatprep.subr.mxu0 0.0
      %1915 = vmatpush1.msra.mxu0 0.0
      %1916 = vmatprep.subr.mxu0 0.0
      %1917 = vmatpush1.msra.mxu0 0.0
      %1918 = vmatprep.subr.mxu0 0.0
      %1919 = vmatpush1.msra.mxu0 0.0
      %1920 = vmatprep.subr.mxu0 0.0
      %1921 = vmatpush1.msra.mxu0 0.0
      %1922 = vmatprep.subr.mxu0 0.0
      %1923 = vmatpush1.msra.mxu0 0.0
      %1924 = vmatprep.subr.mxu0 0.0
      %1925 = vmatpush1.msra.mxu0 0.0
      %1926 = vmatprep.mubr.f32.mxu0 0.0
      %1927 = vmatmul.mubr.f32.gmra.mrb[0].mxu0 %v1485
      %v1928 = vpop.f32.mrb[0].mxu0
      %v1929 = vadd.f32 0.0, %v1928
      %v1930 = vpop.f32.mrb[0].mxu0
      %1931 = vdwg.mxu0
      %1932 = vset.pattern.permute.xlu0 2
      %1933 = vperm.xlu0 %1932, %v1274
      %v1934 = vpop.permute.xlu0 %1933
      %v1936 = vlaneseq
      %v1937 = vshrl.u32 %v1936, 7
      %v1938 = vsub.s32 2, %v1937
      %v1939 = vrot.slane %v1348, %v1938
      %v1940 = vadd.f32 %v1934, %v1939
      %v1941 = vadd.f32 %v1940, %v1929
      %vm1942 = vcmp.gt.f32.partialorder %v1941, 0.0
      %v1943 = vmul.f32 %v1941, 0.2
      %v1944 = vsel %vm1942, %v1941, %v1943
      %v1945 = vsel %vm1574, %v1944, -9e+15
      %v1946 = vsel %vm1576, %v1945, -inf
      %1947 = vmax.xlane.f32.xlu0 %v1946
      %v1948 = vpop.xlane.xlu0 %1947
      %v1949 = vsub.f32 %v1945, %v1948
      %v1950 = vmul.f32 %v1949, 1.442695
      %v1951 = vpow.pop %v1950
      %v1952 = vsel %vm1576, %v1951, 0.0
      %1953 = vadd.xlane.f32.xlu0 %v1952
      %v1954 = vpop.xlane.xlu0 %1953
      %v1955 = vrcp.pop %v1954
      %v1956 = vmul.f32 %v1951, %v1955
      %1957 = vrot.lane.b32.xlu0 %v1200, 64
      %v1958 = vpop.permute.xlu0 %1957
      %v1960 = vsel %vm814, %v1956, 0
      %v1962 = vsel %vm818, %v1958, 0
      %1964 = vmatprep.subr.mxu0 0.0
      %1965 = vmatpush1.msra.mxu0 %v1962
      %1966 = vmatprep.subr.mxu0 0.0
      %1967 = vmatpush1.msra.mxu0 0.0
      %1968 = vmatprep.subr.mxu0 0.0
      %1969 = vmatpush1.msra.mxu0 0.0
      %1970 = vmatprep.subr.mxu0 0.0
      %1971 = vmatpush1.msra.mxu0 0.0
      %1972 = vmatprep.subr.mxu0 0.0
      %1973 = vmatpush1.msra.mxu0 0.0
      %1974 = vmatprep.subr.mxu0 0.0
      %1975 = vmatpush1.msra.mxu0 0.0
      %1976 = vmatprep.subr.mxu0 0.0
      %1977 = vmatpush1.msra.mxu0 0.0
      %1978 = vmatprep.subr.mxu0 0.0
      %1979 = vmatpush1.msra.mxu0 0.0
      %1980 = vmatprep.subr.mxu0 0.0
      %1981 = vmatpush1.msra.mxu0 0.0
      %1982 = vmatprep.subr.mxu0 0.0
      %1983 = vmatpush1.msra.mxu0 0.0
      %1984 = vmatprep.subr.mxu0 0.0
      %1985 = vmatpush1.msra.mxu0 0.0
      %1986 = vmatprep.subr.mxu0 0.0
      %1987 = vmatpush1.msra.mxu0 0.0
      %1988 = vmatprep.subr.mxu0 0.0
      %1989 = vmatpush1.msra.mxu0 0.0
      %1990 = vmatprep.subr.mxu0 0.0
      %1991 = vmatpush1.msra.mxu0 0.0
      %1992 = vmatprep.subr.mxu0 0.0
      %1993 = vmatpush1.msra.mxu0 0.0
      %1994 = vmatprep.subr.mxu0 0.0
      %1995 = vmatpush1.msra.mxu0 0.0
      %1996 = vmatprep.subr.mxu0 0.0
      %1997 = vmatpush1.msra.mxu0 0.0
      %1998 = vmatprep.subr.mxu0 0.0
      %1999 = vmatpush1.msra.mxu0 0.0
      %2000 = vmatprep.subr.mxu0 0.0
      %2001 = vmatpush1.msra.mxu0 0.0
      %2002 = vmatprep.subr.mxu0 0.0
      %2003 = vmatpush1.msra.mxu0 0.0
      %2004 = vmatprep.subr.mxu0 0.0
      %2005 = vmatpush1.msra.mxu0 0.0
      %2006 = vmatprep.subr.mxu0 0.0
      %2007 = vmatpush1.msra.mxu0 0.0
      %2008 = vmatprep.subr.mxu0 0.0
      %2009 = vmatpush1.msra.mxu0 0.0
      %2010 = vmatprep.subr.mxu0 0.0
      %2011 = vmatpush1.msra.mxu0 0.0
      %2012 = vmatprep.subr.mxu0 0.0
      %2013 = vmatpush1.msra.mxu0 0.0
      %2014 = vmatprep.subr.mxu0 0.0
      %2015 = vmatpush1.msra.mxu0 0.0
      %2016 = vmatprep.subr.mxu0 0.0
      %2017 = vmatpush1.msra.mxu0 0.0
      %2018 = vmatprep.subr.mxu0 0.0
      %2019 = vmatpush1.msra.mxu0 0.0
      %2020 = vmatprep.subr.mxu0 0.0
      %2021 = vmatpush1.msra.mxu0 0.0
      %2022 = vmatprep.subr.mxu0 0.0
      %2023 = vmatpush1.msra.mxu0 0.0
      %2024 = vmatprep.subr.mxu0 0.0
      %2025 = vmatpush1.msra.mxu0 0.0
      %2026 = vmatprep.subr.mxu0 0.0
      %2027 = vmatpush1.msra.mxu0 0.0
      %2028 = vmatprep.mubr.f32.mxu0 0.0
      %2029 = vmatmul.mubr.f32.gmra.mrb[0].mxu0 %v1960
      %v2030 = vpop.f32.mrb[0].mxu0
      %v2031 = vadd.f32 0.0, %v2030
      %v2032 = vpop.f32.mrb[0].mxu0
      %2033 = vdwg.mxu0
      %2034 = vset.pattern.permute.xlu0 3
      %2035 = vperm.xlu0 %2034, %v1455
      %v2036 = vpop.permute.xlu0 %2035
      %2038 = vset.pattern.permute.xlu0 3
      %2039 = vperm.xlu0 %2038, %v1456
      %v2040 = vpop.permute.xlu0 %2039
      %v2042 = vmul.f32 %v1469, %v2036
      %v2043 = vmul.f32 %v1470, %v2040
      %v2045 = vsel %vm818, %v2043, 0
      %2047 = vmatprep.subr.mxu0 0.0
      %2048 = vmatpush1.msra.mxu0 %v2042
      %2049 = vmatprep.subr.mxu0 0.0
      %2050 = vmatpush1.msra.mxu0 %v2045
      %2051 = vmatprep.subr.mxu0 0.0
      %2052 = vmatpush1.msra.mxu0 0.0
      %2053 = vmatprep.subr.mxu0 0.0
      %2054 = vmatpush1.msra.mxu0 0.0
      %2055 = vmatprep.subr.mxu0 0.0
      %2056 = vmatpush1.msra.mxu0 0.0
      %2057 = vmatprep.subr.mxu0 0.0
      %2058 = vmatpush1.msra.mxu0 0.0
      %2059 = vmatprep.subr.mxu0 0.0
      %2060 = vmatpush1.msra.mxu0 0.0
      %2061 = vmatprep.subr.mxu0 0.0
      %2062 = vmatpush1.msra.mxu0 0.0
      %2063 = vmatprep.subr.mxu0 0.0
      %2064 = vmatpush1.msra.mxu0 0.0
      %2065 = vmatprep.subr.mxu0 0.0
      %2066 = vmatpush1.msra.mxu0 0.0
      %2067 = vmatprep.subr.mxu0 0.0
      %2068 = vmatpush1.msra.mxu0 0.0
      %2069 = vmatprep.subr.mxu0 0.0
      %2070 = vmatpush1.msra.mxu0 0.0
      %2071 = vmatprep.subr.mxu0 0.0
      %2072 = vmatpush1.msra.mxu0 0.0
      %2073 = vmatprep.subr.mxu0 0.0
      %2074 = vmatpush1.msra.mxu0 0.0
      %2075 = vmatprep.subr.mxu0 0.0
      %2076 = vmatpush1.msra.mxu0 0.0
      %2077 = vmatprep.subr.mxu0 0.0
      %2078 = vmatpush1.msra.mxu0 0.0
      %2079 = vmatprep.subr.mxu0 0.0
      %2080 = vmatpush1.msra.mxu0 0.0
      %2081 = vmatprep.subr.mxu0 0.0
      %2082 = vmatpush1.msra.mxu0 0.0
      %2083 = vmatprep.subr.mxu0 0.0
      %2084 = vmatpush1.msra.mxu0 0.0
      %2085 = vmatprep.subr.mxu0 0.0
      %2086 = vmatpush1.msra.mxu0 0.0
      %2087 = vmatprep.subr.mxu0 0.0
      %2088 = vmatpush1.msra.mxu0 0.0
      %2089 = vmatprep.subr.mxu0 0.0
      %2090 = vmatpush1.msra.mxu0 0.0
      %2091 = vmatprep.subr.mxu0 0.0
      %2092 = vmatpush1.msra.mxu0 0.0
      %2093 = vmatprep.subr.mxu0 0.0
      %2094 = vmatpush1.msra.mxu0 0.0
      %2095 = vmatprep.subr.mxu0 0.0
      %2096 = vmatpush1.msra.mxu0 0.0
      %2097 = vmatprep.subr.mxu0 0.0
      %2098 = vmatpush1.msra.mxu0 0.0
      %2099 = vmatprep.subr.mxu0 0.0
      %2100 = vmatpush1.msra.mxu0 0.0
      %2101 = vmatprep.subr.mxu0 0.0
      %2102 = vmatpush1.msra.mxu0 0.0
      %2103 = vmatprep.subr.mxu0 0.0
      %2104 = vmatpush1.msra.mxu0 0.0
      %2105 = vmatprep.subr.mxu0 0.0
      %2106 = vmatpush1.msra.mxu0 0.0
      %2107 = vmatprep.subr.mxu0 0.0
      %2108 = vmatpush1.msra.mxu0 0.0
      %2109 = vmatprep.subr.mxu0 0.0
      %2110 = vmatpush1.msra.mxu0 0.0
      %2111 = vmatprep.mubr.f32.mxu0 0.0
      %2112 = vmatmul.mubr.f32.gmra.mrb[0].mxu0 %v1485
      %v2113 = vpop.f32.mrb[0].mxu0
      %v2114 = vadd.f32 0.0, %v2113
      %v2115 = vpop.f32.mrb[0].mxu0
      %2116 = vdwg.mxu0
      %2117 = vset.pattern.permute.xlu0 3
      %2118 = vperm.xlu0 %2117, %v1274
      %v2119 = vpop.permute.xlu0 %2118
      %v2121 = vlaneseq
      %v2122 = vshrl.u32 %v2121, 7
      %v2123 = vsub.s32 3, %v2122
      %v2124 = vrot.slane %v1348, %v2123
      %v2125 = vadd.f32 %v2119, %v2124
      %v2126 = vadd.f32 %v2125, %v2114
      %vm2127 = vcmp.gt.f32.partialorder %v2126, 0.0
      %v2128 = vmul.f32 %v2126, 0.2
      %v2129 = vsel %vm2127, %v2126, %v2128
      %v2130 = vsel %vm1574, %v2129, -9e+15
      %v2131 = vsel %vm1576, %v2130, -inf
      %2132 = vmax.xlane.f32.xlu0 %v2131
      %v2133 = vpop.xlane.xlu0 %2132
      %v2134 = vsub.f32 %v2130, %v2133
      %v2135 = vmul.f32 %v2134, 1.442695
      %v2136 = vpow.pop %v2135
      %v2137 = vsel %vm1576, %v2136, 0.0
      %2138 = vadd.xlane.f32.xlu0 %v2137
      %v2139 = vpop.xlane.xlu0 %2138
      %v2140 = vrcp.pop %v2139
      %v2141 = vmul.f32 %v2136, %v2140
      %2142 = vrot.lane.b32.xlu0 %v1200, 32
      %v2143 = vpop.permute.xlu0 %2142
      %v2145 = vsel %vm814, %v2141, 0
      %v2147 = vsel %vm818, %v2143, 0
      %2149 = vmatprep.subr.mxu0 0.0
      %2150 = vmatpush1.msra.mxu0 %v2147
      %2151 = vmatprep.subr.mxu0 0.0
      %2152 = vmatpush1.msra.mxu0 0.0
      %2153 = vmatprep.subr.mxu0 0.0
      %2154 = vmatpush1.msra.mxu0 0.0
      %2155 = vmatprep.subr.mxu0 0.0
      %2156 = vmatpush1.msra.mxu0 0.0
      %2157 = vmatprep.subr.mxu0 0.0
      %2158 = vmatpush1.msra.mxu0 0.0
      %2159 = vmatprep.subr.mxu0 0.0
      %2160 = vmatpush1.msra.mxu0 0.0
      %2161 = vmatprep.subr.mxu0 0.0
      %2162 = vmatpush1.msra.mxu0 0.0
      %2163 = vmatprep.subr.mxu0 0.0
      %2164 = vmatpush1.msra.mxu0 0.0
      %2165 = vmatprep.subr.mxu0 0.0
      %2166 = vmatpush1.msra.mxu0 0.0
      %2167 = vmatprep.subr.mxu0 0.0
      %2168 = vmatpush1.msra.mxu0 0.0
      %2169 = vmatprep.subr.mxu0 0.0
      %2170 = vmatpush1.msra.mxu0 0.0
      %2171 = vmatprep.subr.mxu0 0.0
      %2172 = vmatpush1.msra.mxu0 0.0
      %2173 = vmatprep.subr.mxu0 0.0
      %2174 = vmatpush1.msra.mxu0 0.0
      %2175 = vmatprep.subr.mxu0 0.0
      %2176 = vmatpush1.msra.mxu0 0.0
      %2177 = vmatprep.subr.mxu0 0.0
      %2178 = vmatpush1.msra.mxu0 0.0
      %2179 = vmatprep.subr.mxu0 0.0
      %2180 = vmatpush1.msra.mxu0 0.0
      %2181 = vmatprep.subr.mxu0 0.0
      %2182 = vmatpush1.msra.mxu0 0.0
      %2183 = vmatprep.subr.mxu0 0.0
      %2184 = vmatpush1.msra.mxu0 0.0
      %2185 = vmatprep.subr.mxu0 0.0
      %2186 = vmatpush1.msra.mxu0 0.0
      %2187 = vmatprep.subr.mxu0 0.0
      %2188 = vmatpush1.msra.mxu0 0.0
      %2189 = vmatprep.subr.mxu0 0.0
      %2190 = vmatpush1.msra.mxu0 0.0
      %2191 = vmatprep.subr.mxu0 0.0
      %2192 = vmatpush1.msra.mxu0 0.0
      %2193 = vmatprep.subr.mxu0 0.0
      %2194 = vmatpush1.msra.mxu0 0.0
      %2195 = vmatprep.subr.mxu0 0.0
      %2196 = vmatpush1.msra.mxu0 0.0
      %2197 = vmatprep.subr.mxu0 0.0
      %2198 = vmatpush1.msra.mxu0 0.0
      %2199 = vmatprep.subr.mxu0 0.0
      %2200 = vmatpush1.msra.mxu0 0.0
      %2201 = vmatprep.subr.mxu0 0.0
      %2202 = vmatpush1.msra.mxu0 0.0
      %2203 = vmatprep.subr.mxu0 0.0
      %2204 = vmatpush1.msra.mxu0 0.0
      %2205 = vmatprep.subr.mxu0 0.0
      %2206 = vmatpush1.msra.mxu0 0.0
      %2207 = vmatprep.subr.mxu0 0.0
      %2208 = vmatpush1.msra.mxu0 0.0
      %2209 = vmatprep.subr.mxu0 0.0
      %2210 = vmatpush1.msra.mxu0 0.0
      %2211 = vmatprep.subr.mxu0 0.0
      %2212 = vmatpush1.msra.mxu0 0.0
      %2213 = vmatprep.mubr.f32.mxu0 0.0
      %2214 = vmatmul.mubr.f32.gmra.mrb[0].mxu0 %v2145
      %v2215 = vpop.f32.mrb[0].mxu0
      %v2216 = vadd.f32 0.0, %v2215
      %v2217 = vpop.f32.mrb[0].mxu0
      %2218 = vdwg.mxu0
      %2220 = vrot.lane.b32.xlu0 %v1846, 32
      %v2221 = vpop.permute.xlu0 %2220
      %2224 = vrot.lane.b32.xlu0 %v2031, 64
      %v2225 = vpop.permute.xlu0 %2224
      %2228 = vrot.lane.b32.xlu0 %v2216, 96
      %v2229 = vpop.permute.xlu0 %2228
      %vm2231 = vcmask 261120
      %v2232 = vsel %vm2231, %v1661, %v2221
      %vm2233 = vcmask 523264
      %v2234 = vsel %vm2233, %v2232, %v2225
      %vm2235 = vcmask 785408
      %v2236 = vsel %vm2235, %v2234, %v2229
      %vm2237 = vcmp.gt.f32.partialorder %v2236, 0.0
      %v2238 = vmul.f32 %v2236, 1.442695
      %v2239 = vpow.pop %v2238
      %v2240 = vsub.f32 %v2239, 1.0
      %v2241 = vsel %vm2237, %v2236, %v2240
      %2242 = vst [vmem:[%s521] sm:$0xf] %v2241
      %p2243 = scmp.lt.s32.totalorder %s32, 1
      %s2244 = scalar_select %p2243, %s32, 1
      %s2245 = smul.addr %s2244, 8
      %s2246 = scalar_lea.vmem %s13, %s2245
      %p2247 = scmp.lt.s32.totalorder %s32, 1
      %s2248 = scalar_select %p2247, %s32, 1
      %s2249 = smul.addr %s2248, 4
      %s2250 = scalar_lea.vmem %s14, %s2249
      // Predicated region
      $region69: #{dual_attention_forward.2} parent=67 // pred_check
        %p2251 = pneg %p327
      $region70: #{dual_attention_forward.2} parent=67 // pred_check_branch
        %2253 = sbr.rel (%p2251) target = $region72
      $region71: #{dual_attention_forward.2} parent=67 // pred_region
        _
      $region72: #{dual_attention_forward.2} parent=67 // pred_fallthru
        _
      // Predicated region
      $region73: #{dual_attention_forward.2} parent=67 // pred_check
        %p2254 = pneg %p353
      $region74: #{dual_attention_forward.2} parent=67 // pred_check_branch
        %2256 = sbr.rel (%p2254) target = $region76
      $region75: #{dual_attention_forward.2} parent=67 // pred_region
        _
      $region76: #{dual_attention_forward.2} parent=67 // pred_fallthru
        _
    $region68: #{dual_attention_forward.2} parent=5 // pred_fallthru
      _
    %p2257 = scmp.le.s32.totalorder 2, %s27
    // Predicated region
    $region77: #{dual_attention_forward.2} parent=5 // pred_check
      %p2258 = pneg %p2257
    $region78: #{dual_attention_forward.2} parent=5 // pred_check_branch
      %2260 = sbr.rel (%p2258) target = $region80
    $region79: #{dual_attention_forward.2} parent=5 // pred_region
      %s2261 = ssub.s32 %s27, 2
      // Predicated region
      $region81: #{dual_attention_forward.2} parent=79 // pred_check
        %p2262 = pneg %p333
      $region82: #{dual_attention_forward.2} parent=79 // pred_check_branch
        %2264 = sbr.rel (%p2262) target = $region84
      $region83: #{dual_attention_forward.2} parent=79 // pred_region
        %p2265 = scmp.lt.s32.totalorder %s33, 1
        %s2266 = scalar_select %p2265, %s33, 1
        %s2267 = smul.addr %s2266, 8
        %s2268 = scalar_lea.vmem %s13, %s2267
      $region84: #{dual_attention_forward.2} parent=79 // pred_fallthru
        _
      // Predicated region
      $region85: #{dual_attention_forward.2} parent=79 // pred_check
        %p2269 = pneg %p359
      $region86: #{dual_attention_forward.2} parent=79 // pred_check_branch
        %2271 = sbr.rel (%p2269) target = $region88
      $region87: #{dual_attention_forward.2} parent=79 // pred_region
        %p2272 = scmp.lt.s32.totalorder %s33, 1
        %s2273 = scalar_select %p2272, %s33, 1
        %s2274 = smul.addr %s2273, 4
        %s2275 = scalar_lea.vmem %s14, %s2274
      $region88: #{dual_attention_forward.2} parent=79 // pred_fallthru
        _
    $region80: #{dual_attention_forward.2} parent=5 // pred_fallthru
      _
  $region6: #{dual_attention_forward.2} parent=0 // loop_footer
    %s31 = sadd.s32 1, %s27
  $region7: #{dual_attention_forward.2} parent=0 // loop_footer_branch
    %26 = sbr.rel target = $region3
  $region8: #{dual_attention_forward.2} parent=0 // loop_exit
    _

// kernel: dual_attention_forward.3
$region0: #{dual_attention_forward.3}
  #allocation0 [shape = 'u32[]', space=smem, size = 0x4, offset = 0x4, fixed_abs, tag = 'smem constant byte address 0x4 - core index']
  #allocation1 [shape = 'u32[144,128]{1,0:T(1,128)}', space=vmem, size = 0x12000, scoped, tag = 'internal scratch']
  #allocation2 [shape = 's32[1]{0}', space=sflag, size = 0x4, scoped, tag = 'scoped memory for dual_attention_forward.3']
  #allocation3 [shape = 'u8[1024]{0}', space=smem, size = 0x400, scoped, tag = 'prefetched SMEM operand 0']
  %s0 = inlined_call_operand.vmem [shape: s32[2,3], index: 0, kind: input, shape index: {}]
  %s1 = inlined_call_operand.vmem [shape: f32[2,8,128], index: 1, kind: input, shape index: {}]
  %s2 = inlined_call_operand.vmem [shape: f32[2,8,3], index: 2, kind: input, shape index: {}]
  %s3 = inlined_call_operand.vmem [shape: f32[2,4,128], index: 3, kind: input, shape index: {}]
  %s4 = inlined_call_operand.vmem [shape: f32[2,4,4], index: 4, kind: input, shape index: {}]
  %s5 = inlined_call_operand.vmem [shape: f32[2,4,12], index: 5, kind: input, shape index: {}]
  %s6 = inlined_call_operand.vmem [shape: f32[128,64], index: 6, kind: input, shape index: {}]
  %s7 = inlined_call_operand.vmem [shape: f32[128,4], index: 7, kind: input, shape index: {}]
  %s8 = inlined_call_operand.vmem [shape: f32[128,4], index: 8, kind: input, shape index: {}]
  %s9 = inlined_call_operand.vmem [shape: f32[128,64], index: 9, kind: input, shape index: {}]
  %s10 = inlined_call_operand.vmem [shape: f32[128,4], index: 10, kind: input, shape index: {}]
  %s11 = inlined_call_operand.vmem [shape: f32[4,128], index: 11, kind: input, shape index: {}]
  %s12 = inlined_call_operand.vmem [shape: f32[128,4], index: 12, kind: input, shape index: {}]
  %s13 = inlined_call_operand.hbm [shape: f32[2,8,16], index: 13, kind: output, shape index: {0}]
  %s14 = inlined_call_operand.hbm [shape: f32[2,4,16], index: 14, kind: output, shape index: {1}]
  %s15 = inlined_call_operand.hbm [shape: f32[2,1,16], index: 15, kind: output, shape index: {2}]
  %s16 = inlined_call_operand.hbm [shape: f32[2,1,16], index: 16, kind: output, shape index: {3}]
  %17 = xla_tuple %s13, %s14, %s15, %s16
  %s18 = sld [smem:[#allocation0]]
  $region105: #{dual_attention_forward.3} parent=0
    _
  %s20 = ssub.s32 1, %s18
  %s21 = scalar_select 0, %s20, %s18
  %s22 = sshll.u32 %s0, 4
  %s23 = int_to_ptr.vmem [resolvable:$true] %s22
  %25 = dma.vmem_to_smem %s23, 32, [#allocation3], [#allocation2]
  %26 = dma.done [#allocation2], 32
  %27 = sfence
  $region1: #{dual_attention_forward.3} parent=0
    #allocation4 [shape = 'u8[8192]{0}', space=vmem, size = 0x2000, scoped, tag = 'output window, operand 0']
    #allocation5 [shape = 's32[2]{0}', space=sflag, size = 0x8, scoped, tag = 'scoped memory for dual_attention_forward.3']
    #allocation6 [shape = 'u8[4096]{0}', space=vmem, size = 0x1000, scoped, tag = 'output window, operand 1']
    #allocation7 [shape = 's32[2]{0}', space=sflag, size = 0x8, scoped, tag = 'scoped memory for dual_attention_forward.3']
    #allocation8 [shape = 'u8[1024]{0}', space=vmem, size = 0x400, scoped, tag = 'output window, operand 2']
    #allocation9 [shape = 'u8[1024]{0}', space=vmem, size = 0x400, scoped, tag = 'output window, operand 3']
    #allocation10 [shape = 's32[2]{0}', space=sflag, size = 0x8, scoped, tag = 'scoped memory for dual_attention_forward.3']
    %28 = vsyncpa [#allocation5], 0
    %s29 = scalar_lea.sflag [#allocation5], 1
    %30 = vsyncpa %s29, 0
    %31 = vsyncpa [#allocation7], 0
    %s32 = scalar_lea.sflag [#allocation7], 1
    %33 = vsyncpa %s32, 0
    %34 = vsyncpa [#allocation10], 0
    %s35 = scalar_lea.sflag [#allocation10], 1
    %36 = vsyncpa %s35, 0
    loop: start=0, step=1, limit=4
    $region2: #{dual_attention_forward.3} parent=1 // loop_pre_header
      _
    $region3: #{dual_attention_forward.3} parent=1 // loop_header
      %s38 = sphi 0, %s42
      %p39 = scmp.ge.s32.totalorder %s38, 4
      %s48 = sphi 0, %s50
      %s51 = sphi 0, %s48
      %s52 = sphi 0, %s51
      %s68 = sphi 0, %s52
      %s74 = sphi 0, %s76
      %s77 = sphi 0, %s74
      %s78 = sphi 0, %s77
      %s94 = sphi 0, %s78
      %s100 = sphi 0, %s102
      %s103 = sphi 0, %s100
      %s104 = sphi 0, %s103
      %s120 = sphi 0, %s104
      %s126 = sphi 0, %s128
      %s129 = sphi 0, %s126
      %s130 = sphi 0, %s129
      %s146 = sphi 0, %s130
      %s152 = sphi 0, %s154
      %s155 = sphi 0, %s152
      %s156 = sphi 0, %s155
      %s172 = sphi 0, %s156
      %s176 = sphi 0, %s176
      %s178 = sphi 0, %s176
      %s179 = sphi 0, %s178
      %s193 = sphi 0, %s179
      %s197 = sphi 0, %s197
      %s199 = sphi 0, %s197
      %s200 = sphi 0, %s199
      %s214 = sphi 0, %s200
      %s218 = sphi 0, %s218
      %s220 = sphi 0, %s218
      %s221 = sphi 0, %s220
      %s235 = sphi 0, %s221
      %s239 = sphi 0, %s239
      %s241 = sphi 0, %s239
      %s242 = sphi 0, %s241
      %s256 = sphi 0, %s242
      %s260 = sphi 0, %s260
      %s262 = sphi 0, %s260
      %s263 = sphi 0, %s262
      %s277 = sphi 0, %s263
      %s281 = sphi 0, %s281
      %s283 = sphi 0, %s281
      %s284 = sphi 0, %s283
      %s298 = sphi 0, %s284
      %s302 = sphi 0, %s302
      %s304 = sphi 0, %s302
      %s305 = sphi 0, %s304
      %s319 = sphi 0, %s305
      %s325 = sphi 0, %s327
      %s328 = sphi 0, %s325
      %s329 = sphi 0, %s328
      %s345 = sphi 0, %s329
      %s351 = sphi 0, %s353
      %s354 = sphi 0, %s351
      %s355 = sphi 0, %s354
      %s371 = sphi 0, %s355
      %s377 = sphi 0, %s379
      %s380 = sphi 0, %s377
      %s381 = sphi 0, %s380
      %s397 = sphi 0, %s381
      %s403 = sphi 0, %s405
      %s406 = sphi 0, %s403
      %s407 = sphi 0, %s406
      %s423 = sphi 0, %s407
    $region4: #{dual_attention_forward.3} parent=1 // loop_header_branch
      %41 = sbr.rel (%p39) target = $region8
    $region5: #{dual_attention_forward.3} parent=1 // loop_body
      %s43 = ssub.s32 %s38, 1
      %s44 = ssub.s32 %s38, 2
      %s45 = sadd.s32 %s38, 1
      %s46 = ssub.s32 %s38, %s45
      %p47 = scmp.eq.s32.totalorder %s46, 0
      %s49 = sadd.s32 %s48, 1
      %s50 = scalar_select %p47, %s48, %s49
      %p53 = pneg %p47
      %p54 = scmp.eq.s32.totalorder %s38, 1
      %p55 = por %p53, %p54
      %p56 = scmp.ne.s32.totalorder %s48, %s51
      %p57 = scmp.eq.s32.totalorder %s38, 0
      %p58 = por %p56, %p57
      %p59 = scmp.ne.s32.totalorder %s48, %s51
      %p60 = scmp.eq.s32.totalorder %s43, 1
      %p61 = por %p59, %p60
      %p62 = scmp.ne.s32.totalorder %s51, %s52
      %p63 = scmp.eq.s32.totalorder %s43, 0
      %p64 = por %p62, %p63
      %p65 = scmp.ne.s32.totalorder %s51, %s52
      %p66 = scmp.eq.s32.totalorder %s44, 1
      %p67 = por %p65, %p66
      %p69 = scmp.ne.s32.totalorder %s52, %s68
      %p70 = scmp.eq.s32.totalorder %s44, 0
      %p71 = por %p69, %p70
      %s72 = ssub.s32 %s38, %s45
      %p73 = scmp.eq.s32.totalorder %s72, 0
      %s75 = sadd.s32 %s74, 1
      %s76 = scalar_select %p73, %s74, %s75
      %p79 = pneg %p73
      %p80 = scmp.eq.s32.totalorder %s38, 1
      %p81 = por %p79, %p80
      %p82 = scmp.ne.s32.totalorder %s74, %s77
      %p83 = scmp.eq.s32.totalorder %s38, 0
      %p84 = por %p82, %p83
      %p85 = scmp.ne.s32.totalorder %s74, %s77
      %p86 = scmp.eq.s32.totalorder %s43, 1
      %p87 = por %p85, %p86
      %p88 = scmp.ne.s32.totalorder %s77, %s78
      %p89 = scmp.eq.s32.totalorder %s43, 0
      %p90 = por %p88, %p89
      %p91 = scmp.ne.s32.totalorder %s77, %s78
      %p92 = scmp.eq.s32.totalorder %s44, 1
      %p93 = por %p91, %p92
      %p95 = scmp.ne.s32.totalorder %s78, %s94
      %p96 = scmp.eq.s32.totalorder %s44, 0
      %p97 = por %p95, %p96
      %s98 = ssub.s32 %s38, %s45
      %p99 = scmp.eq.s32.totalorder %s98, 0
      %s101 = sadd.s32 %s100, 1
      %s102 = scalar_select %p99, %s100, %s101
      %p105 = pneg %p99
      %p106 = scmp.eq.s32.totalorder %s38, 1
      %p107 = por %p105, %p106
      %p108 = scmp.ne.s32.totalorder %s100, %s103
      %p109 = scmp.eq.s32.totalorder %s38, 0
      %p110 = por %p108, %p109
      %p111 = scmp.ne.s32.totalorder %s100, %s103
      %p112 = scmp.eq.s32.totalorder %s43, 1
      %p113 = por %p111, %p112
      %p114 = scmp.ne.s32.totalorder %s103, %s104
      %p115 = scmp.eq.s32.totalorder %s43, 0
      %p116 = por %p114, %p115
      %p117 = scmp.ne.s32.totalorder %s103, %s104
      %p118 = scmp.eq.s32.totalorder %s44, 1
      %p119 = por %p117, %p118
      %p121 = scmp.ne.s32.totalorder %s104, %s120
      %p122 = scmp.eq.s32.totalorder %s44, 0
      %p123 = por %p121, %p122
      %s124 = ssub.s32 %s38, %s45
      %p125 = scmp.eq.s32.totalorder %s124, 0
      %s127 = sadd.s32 %s126, 1
      %s128 = scalar_select %p125, %s126, %s127
      %p131 = pneg %p125
      %p132 = scmp.eq.s32.totalorder %s38, 1
      %p133 = por %p131, %p132
      %p134 = scmp.ne.s32.totalorder %s126, %s129
      %p135 = scmp.eq.s32.totalorder %s38, 0
      %p136 = por %p134, %p135
      %p137 = scmp.ne.s32.totalorder %s126, %s129
      %p138 = scmp.eq.s32.totalorder %s43, 1
      %p139 = por %p137, %p138
      %p140 = scmp.ne.s32.totalorder %s129, %s130
      %p141 = scmp.eq.s32.totalorder %s43, 0
      %p142 = por %p140, %p141
      %p143 = scmp.ne.s32.totalorder %s129, %s130
      %p144 = scmp.eq.s32.totalorder %s44, 1
      %p145 = por %p143, %p144
      %p147 = scmp.ne.s32.totalorder %s130, %s146
      %p148 = scmp.eq.s32.totalorder %s44, 0
      %p149 = por %p147, %p148
      %s150 = ssub.s32 %s38, %s45
      %p151 = scmp.eq.s32.totalorder %s150, 0
      %s153 = sadd.s32 %s152, 1
      %s154 = scalar_select %p151, %s152, %s153
      %p157 = pneg %p151
      %p158 = scmp.eq.s32.totalorder %s38, 1
      %p159 = por %p157, %p158
      %p160 = scmp.ne.s32.totalorder %s152, %s155
      %p161 = scmp.eq.s32.totalorder %s38, 0
      %p162 = por %p160, %p161
      %p163 = scmp.ne.s32.totalorder %s152, %s155
      %p164 = scmp.eq.s32.totalorder %s43, 1
      %p165 = por %p163, %p164
      %p166 = scmp.ne.s32.totalorder %s155, %s156
      %p167 = scmp.eq.s32.totalorder %s43, 0
      %p168 = por %p166, %p167
      %p169 = scmp.ne.s32.totalorder %s155, %s156
      %p170 = scmp.eq.s32.totalorder %s44, 1
      %p171 = por %p169, %p170
      %p173 = scmp.ne.s32.totalorder %s156, %s172
      %p174 = scmp.eq.s32.totalorder %s44, 0
      %p175 = por %p173, %p174
      %s177 = sadd.s32 %s176, 1
      %p180 = scmp.eq.s32.totalorder %s38, 1
      %p181 = scmp.ne.s32.totalorder %s176, %s178
      %p182 = scmp.eq.s32.totalorder %s38, 0
      %p183 = por %p181, %p182
      %p184 = scmp.ne.s32.totalorder %s176, %s178
      %p185 = scmp.eq.s32.totalorder %s43, 1
      %p186 = por %p184, %p185
      %p187 = scmp.ne.s32.totalorder %s178, %s179
      %p188 = scmp.eq.s32.totalorder %s43, 0
      %p189 = por %p187, %p188
      %p190 = scmp.ne.s32.totalorder %s178, %s179
      %p191 = scmp.eq.s32.totalorder %s44, 1
      %p192 = por %p190, %p191
      %p194 = scmp.ne.s32.totalorder %s179, %s193
      %p195 = scmp.eq.s32.totalorder %s44, 0
      %p196 = por %p194, %p195
      %s198 = sadd.s32 %s197, 1
      %p201 = scmp.eq.s32.totalorder %s38, 1
      %p202 = scmp.ne.s32.totalorder %s197, %s199
      %p203 = scmp.eq.s32.totalorder %s38, 0
      %p204 = por %p202, %p203
      %p205 = scmp.ne.s32.totalorder %s197, %s199
      %p206 = scmp.eq.s32.totalorder %s43, 1
      %p207 = por %p205, %p206
      %p208 = scmp.ne.s32.totalorder %s199, %s200
      %p209 = scmp.eq.s32.totalorder %s43, 0
      %p210 = por %p208, %p209
      %p211 = scmp.ne.s32.totalorder %s199, %s200
      %p212 = scmp.eq.s32.totalorder %s44, 1
      %p213 = por %p211, %p212
      %p215 = scmp.ne.s32.totalorder %s200, %s214
      %p216 = scmp.eq.s32.totalorder %s44, 0
      %p217 = por %p215, %p216
      %s219 = sadd.s32 %s218, 1
      %p222 = scmp.eq.s32.totalorder %s38, 1
      %p223 = scmp.ne.s32.totalorder %s218, %s220
      %p224 = scmp.eq.s32.totalorder %s38, 0
      %p225 = por %p223, %p224
      %p226 = scmp.ne.s32.totalorder %s218, %s220
      %p227 = scmp.eq.s32.totalorder %s43, 1
      %p228 = por %p226, %p227
      %p229 = scmp.ne.s32.totalorder %s220, %s221
      %p230 = scmp.eq.s32.totalorder %s43, 0
      %p231 = por %p229, %p230
      %p232 = scmp.ne.s32.totalorder %s220, %s221
      %p233 = scmp.eq.s32.totalorder %s44, 1
      %p234 = por %p232, %p233
      %p236 = scmp.ne.s32.totalorder %s221, %s235
      %p237 = scmp.eq.s32.totalorder %s44, 0
      %p238 = por %p236, %p237
      %s240 = sadd.s32 %s239, 1
      %p243 = scmp.eq.s32.totalorder %s38, 1
      %p244 = scmp.ne.s32.totalorder %s239, %s241
      %p245 = scmp.eq.s32.totalorder %s38, 0
      %p246 = por %p244, %p245
      %p247 = scmp.ne.s32.totalorder %s239, %s241
      %p248 = scmp.eq.s32.totalorder %s43, 1
      %p249 = por %p247, %p248
      %p250 = scmp.ne.s32.totalorder %s241, %s242
      %p251 = scmp.eq.s32.totalorder %s43, 0
      %p252 = por %p250, %p251
      %p253 = scmp.ne.s32.totalorder %s241, %s242
      %p254 = scmp.eq.s32.totalorder %s44, 1
      %p255 = por %p253, %p254
      %p257 = scmp.ne.s32.totalorder %s242, %s256
      %p258 = scmp.eq.s32.totalorder %s44, 0
      %p259 = por %p257, %p258
      %s261 = sadd.s32 %s260, 1
      %p264 = scmp.eq.s32.totalorder %s38, 1
      %p265 = scmp.ne.s32.totalorder %s260, %s262
      %p266 = scmp.eq.s32.totalorder %s38, 0
      %p267 = por %p265, %p266
      %p268 = scmp.ne.s32.totalorder %s260, %s262
      %p269 = scmp.eq.s32.totalorder %s43, 1
      %p270 = por %p268, %p269
      %p271 = scmp.ne.s32.totalorder %s262, %s263
      %p272 = scmp.eq.s32.totalorder %s43, 0
      %p273 = por %p271, %p272
      %p274 = scmp.ne.s32.totalorder %s262, %s263
      %p275 = scmp.eq.s32.totalorder %s44, 1
      %p276 = por %p274, %p275
      %p278 = scmp.ne.s32.totalorder %s263, %s277
      %p279 = scmp.eq.s32.totalorder %s44, 0
      %p280 = por %p278, %p279
      %s282 = sadd.s32 %s281, 1
      %p285 = scmp.eq.s32.totalorder %s38, 1
      %p286 = scmp.ne.s32.totalorder %s281, %s283
      %p287 = scmp.eq.s32.totalorder %s38, 0
      %p288 = por %p286, %p287
      %p289 = scmp.ne.s32.totalorder %s281, %s283
      %p290 = scmp.eq.s32.totalorder %s43, 1
      %p291 = por %p289, %p290
      %p292 = scmp.ne.s32.totalorder %s283, %s284
      %p293 = scmp.eq.s32.totalorder %s43, 0
      %p294 = por %p292, %p293
      %p295 = scmp.ne.s32.totalorder %s283, %s284
      %p296 = scmp.eq.s32.totalorder %s44, 1
      %p297 = por %p295, %p296
      %p299 = scmp.ne.s32.totalorder %s284, %s298
      %p300 = scmp.eq.s32.totalorder %s44, 0
      %p301 = por %p299, %p300
      %s303 = sadd.s32 %s302, 1
      %p306 = scmp.eq.s32.totalorder %s38, 1
      %p307 = scmp.ne.s32.totalorder %s302, %s304
      %p308 = scmp.eq.s32.totalorder %s38, 0
      %p309 = por %p307, %p308
      %p310 = scmp.ne.s32.totalorder %s302, %s304
      %p311 = scmp.eq.s32.totalorder %s43, 1
      %p312 = por %p310, %p311
      %p313 = scmp.ne.s32.totalorder %s304, %s305
      %p314 = scmp.eq.s32.totalorder %s43, 0
      %p315 = por %p313, %p314
      %p316 = scmp.ne.s32.totalorder %s304, %s305
      %p317 = scmp.eq.s32.totalorder %s44, 1
      %p318 = por %p316, %p317
      %p320 = scmp.ne.s32.totalorder %s305, %s319
      %p321 = scmp.eq.s32.totalorder %s44, 0
      %p322 = por %p320, %p321
      %s323 = ssub.s32 %s38, %s45
      %p324 = scmp.eq.s32.totalorder %s323, 0
      %s326 = sadd.s32 %s325, 1
      %s327 = scalar_select %p324, %s325, %s326
      %p330 = pneg %p324
      %p331 = scmp.eq.s32.totalorder %s38, 1
      %p332 = por %p330, %p331
      %p333 = scmp.ne.s32.totalorder %s325, %s328
      %p334 = scmp.eq.s32.totalorder %s38, 0
      %p335 = por %p333, %p334
      %p336 = scmp.ne.s32.totalorder %s325, %s328
      %p337 = scmp.eq.s32.totalorder %s43, 1
      %p338 = por %p336, %p337
      %p339 = scmp.ne.s32.totalorder %s328, %s329
      %p340 = scmp.eq.s32.totalorder %s43, 0
      %p341 = por %p339, %p340
      %p342 = scmp.ne.s32.totalorder %s328, %s329
      %p343 = scmp.eq.s32.totalorder %s44, 1
      %p344 = por %p342, %p343
      %p346 = scmp.ne.s32.totalorder %s329, %s345
      %p347 = scmp.eq.s32.totalorder %s44, 0
      %p348 = por %p346, %p347
      %s349 = ssub.s32 %s38, %s45
      %p350 = scmp.eq.s32.totalorder %s349, 0
      %s352 = sadd.s32 %s351, 1
      %s353 = scalar_select %p350, %s351, %s352
      %p356 = pneg %p350
      %p357 = scmp.eq.s32.totalorder %s38, 1
      %p358 = por %p356, %p357
      %p359 = scmp.ne.s32.totalorder %s351, %s354
      %p360 = scmp.eq.s32.totalorder %s38, 0
      %p361 = por %p359, %p360
      %p362 = scmp.ne.s32.totalorder %s351, %s354
      %p363 = scmp.eq.s32.totalorder %s43, 1
      %p364 = por %p362, %p363
      %p365 = scmp.ne.s32.totalorder %s354, %s355
      %p366 = scmp.eq.s32.totalorder %s43, 0
      %p367 = por %p365, %p366
      %p368 = scmp.ne.s32.totalorder %s354, %s355
      %p369 = scmp.eq.s32.totalorder %s44, 1
      %p370 = por %p368, %p369
      %p372 = scmp.ne.s32.totalorder %s355, %s371
      %p373 = scmp.eq.s32.totalorder %s44, 0
      %p374 = por %p372, %p373
      %s375 = ssub.s32 %s38, %s45
      %p376 = scmp.eq.s32.totalorder %s375, 0
      %s378 = sadd.s32 %s377, 1
      %s379 = scalar_select %p376, %s377, %s378
      %p382 = pneg %p376
      %p383 = scmp.eq.s32.totalorder %s38, 1
      %p384 = por %p382, %p383
      %p385 = scmp.ne.s32.totalorder %s377, %s380
      %p386 = scmp.eq.s32.totalorder %s38, 0
      %p387 = por %p385, %p386
      %p388 = scmp.ne.s32.totalorder %s377, %s380
      %p389 = scmp.eq.s32.totalorder %s43, 1
      %p390 = por %p388, %p389
      %p391 = scmp.ne.s32.totalorder %s380, %s381
      %p392 = scmp.eq.s32.totalorder %s43, 0
      %p393 = por %p391, %p392
      %p394 = scmp.ne.s32.totalorder %s380, %s381
      %p395 = scmp.eq.s32.totalorder %s44, 1
      %p396 = por %p394, %p395
      %p398 = scmp.ne.s32.totalorder %s381, %s397
      %p399 = scmp.eq.s32.totalorder %s44, 0
      %p400 = por %p398, %p399
      %s401 = ssub.s32 %s38, %s45
      %p402 = scmp.eq.s32.totalorder %s401, 0
      %s404 = sadd.s32 %s403, 1
      %s405 = scalar_select %p402, %s403, %s404
      %p408 = pneg %p402
      %p409 = scmp.eq.s32.totalorder %s38, 1
      %p410 = por %p408, %p409
      %p411 = scmp.ne.s32.totalorder %s403, %s406
      %p412 = scmp.eq.s32.totalorder %s38, 0
      %p413 = por %p411, %p412
      %p414 = scmp.ne.s32.totalorder %s403, %s406
      %p415 = scmp.eq.s32.totalorder %s43, 1
      %p416 = por %p414, %p415
      %p417 = scmp.ne.s32.totalorder %s406, %s407
      %p418 = scmp.eq.s32.totalorder %s43, 0
      %p419 = por %p417, %p418
      %p420 = scmp.ne.s32.totalorder %s406, %s407
      %p421 = scmp.eq.s32.totalorder %s44, 1
      %p422 = por %p420, %p421
      %p424 = scmp.ne.s32.totalorder %s407, %s423
      %p425 = scmp.eq.s32.totalorder %s44, 0
      %p426 = por %p424, %p425
      %p427 = scmp.le.s32.totalorder 1, %s38
      %p428 = scmp.lt.s32.totalorder %s38, 3
      %p429 = pnand %p427, %p428
      %p430 = pneg %p429
      // Predicated region
      $region9: #{dual_attention_forward.3} parent=5 // pred_check
        _
      $region10: #{dual_attention_forward.3} parent=5 // pred_check_branch
        %432 = sbr.rel (%p429) target = $region12
      $region11: #{dual_attention_forward.3} parent=5 // pred_region
        %s433 = ssub.s32 %s38, 1
        // Predicated region
        $region13: #{dual_attention_forward.3} parent=11 // pred_check
          %p434 = pneg %p189
        $region14: #{dual_attention_forward.3} parent=11 // pred_check_branch
          %436 = sbr.rel (%p434) target = $region16
        $region15: #{dual_attention_forward.3} parent=11 // pred_region
          _
        $region16: #{dual_attention_forward.3} parent=11 // pred_fallthru
          _
        // Predicated region
        $region17: #{dual_attention_forward.3} parent=11 // pred_check
          %p437 = pneg %p210
        $region18: #{dual_attention_forward.3} parent=11 // pred_check_branch
          %439 = sbr.rel (%p437) target = $region20
        $region19: #{dual_attention_forward.3} parent=11 // pred_region
          _
        $region20: #{dual_attention_forward.3} parent=11 // pred_fallthru
          _
        // Predicated region
        $region21: #{dual_attention_forward.3} parent=11 // pred_check
          %p440 = pneg %p231
        $region22: #{dual_attention_forward.3} parent=11 // pred_check_branch
          %442 = sbr.rel (%p440) target = $region24
        $region23: #{dual_attention_forward.3} parent=11 // pred_region
          _
        $region24: #{dual_attention_forward.3} parent=11 // pred_fallthru
          _
        // Predicated region
        $region25: #{dual_attention_forward.3} parent=11 // pred_check
          %p443 = pneg %p252
        $region26: #{dual_attention_forward.3} parent=11 // pred_check_branch
          %445 = sbr.rel (%p443) target = $region28
        $region27: #{dual_attention_forward.3} parent=11 // pred_region
          _
        $region28: #{dual_attention_forward.3} parent=11 // pred_fallthru
          _
        // Predicated region
        $region29: #{dual_attention_forward.3} parent=11 // pred_check
          %p446 = pneg %p273
        $region30: #{dual_attention_forward.3} parent=11 // pred_check_branch
          %448 = sbr.rel (%p446) target = $region32
        $region31: #{dual_attention_forward.3} parent=11 // pred_region
          _
        $region32: #{dual_attention_forward.3} parent=11 // pred_fallthru
          _
        // Predicated region
        $region33: #{dual_attention_forward.3} parent=11 // pred_check
          %p449 = pneg %p294
        $region34: #{dual_attention_forward.3} parent=11 // pred_check_branch
          %451 = sbr.rel (%p449) target = $region36
        $region35: #{dual_attention_forward.3} parent=11 // pred_region
          _
        $region36: #{dual_attention_forward.3} parent=11 // pred_fallthru
          _
        // Predicated region
        $region37: #{dual_attention_forward.3} parent=11 // pred_check
          %p452 = pneg %p315
        $region38: #{dual_attention_forward.3} parent=11 // pred_check_branch
          %454 = sbr.rel (%p452) target = $region40
        $region39: #{dual_attention_forward.3} parent=11 // pred_region
          _
        $region40: #{dual_attention_forward.3} parent=11 // pred_fallthru
          _
      $region12: #{dual_attention_forward.3} parent=5 // pred_fallthru
        _
      %p455 = scmp.lt.s32.totalorder %s38, 2
      // Predicated region
      $region41: #{dual_attention_forward.3} parent=5 // pred_check
        %p456 = pneg %p455
      $region42: #{dual_attention_forward.3} parent=5 // pred_check_branch
        %458 = sbr.rel (%p456) target = $region44
      $region43: #{dual_attention_forward.3} parent=5 // pred_region
        // Predicated region
        $region45: #{dual_attention_forward.3} parent=43 // pred_check
          %p459 = pneg %p58
        $region46: #{dual_attention_forward.3} parent=43 // pred_check_branch
          %461 = sbr.rel (%p459) target = $region48
        $region47: #{dual_attention_forward.3} parent=43 // pred_region
          %p462 = scmp.lt.s32.totalorder %s38, 1
          %s463 = scalar_select %p462, %s38, 1
          %s464 = smul.addr %s463, 8
          %s465 = scalar_lea.vmem %s1, %s464
        $region48: #{dual_attention_forward.3} parent=43 // pred_fallthru
          _
        // Predicated region
        $region49: #{dual_attention_forward.3} parent=43 // pred_check
          %p466 = pneg %p84
        $region50: #{dual_attention_forward.3} parent=43 // pred_check_branch
          %468 = sbr.rel (%p466) target = $region52
        $region51: #{dual_attention_forward.3} parent=43 // pred_region
          %p469 = scmp.lt.s32.totalorder %s38, 1
          %s470 = scalar_select %p469, %s38, 1
          %s471 = smul.addr %s470, 8
          %s472 = scalar_lea.vmem %s2, %s471
        $region52: #{dual_attention_forward.3} parent=43 // pred_fallthru
          _
        // Predicated region
        $region53: #{dual_attention_forward.3} parent=43 // pred_check
          %p473 = pneg %p110
        $region54: #{dual_attention_forward.3} parent=43 // pred_check_branch
          %475 = sbr.rel (%p473) target = $region56
        $region55: #{dual_attention_forward.3} parent=43 // pred_region
          %p476 = scmp.lt.s32.totalorder %s38, 1
          %s477 = scalar_select %p476, %s38, 1
          %s478 = smul.addr %s477, 4
          %s479 = scalar_lea.vmem %s3, %s478
        $region56: #{dual_attention_forward.3} parent=43 // pred_fallthru
          _
        // Predicated region
        $region57: #{dual_attention_forward.3} parent=43 // pred_check
          %p480 = pneg %p136
        $region58: #{dual_attention_forward.3} parent=43 // pred_check_branch
          %482 = sbr.rel (%p480) target = $region60
        $region59: #{dual_attention_forward.3} parent=43 // pred_region
          %p483 = scmp.lt.s32.totalorder %s38, 1
          %s484 = scalar_select %p483, %s38, 1
          %s485 = smul.addr %s484, 4
          %s486 = scalar_lea.vmem %s4, %s485
        $region60: #{dual_attention_forward.3} parent=43 // pred_fallthru
          _
        // Predicated region
        $region61: #{dual_attention_forward.3} parent=43 // pred_check
          %p487 = pneg %p162
        $region62: #{dual_attention_forward.3} parent=43 // pred_check_branch
          %489 = sbr.rel (%p487) target = $region64
        $region63: #{dual_attention_forward.3} parent=43 // pred_region
          %p490 = scmp.lt.s32.totalorder %s38, 1
          %s491 = scalar_select %p490, %s38, 1
          %s492 = smul.addr %s491, 4
          %s493 = scalar_lea.vmem %s5, %s492
        $region64: #{dual_attention_forward.3} parent=43 // pred_fallthru
          _
      $region44: #{dual_attention_forward.3} parent=5 // pred_fallthru
        _
      %p494 = scmp.le.s32.totalorder 1, %s38
      %p495 = scmp.lt.s32.totalorder %s38, 3
      %p496 = pnand %p494, %p495
      %p497 = pneg %p496
      // Predicated region
      $region65: #{dual_attention_forward.3} parent=5 // pred_check
        _
      $region66: #{dual_attention_forward.3} parent=5 // pred_check_branch
        %499 = sbr.rel (%p496) target = $region68
      $region67: #{dual_attention_forward.3} parent=5 // pred_region
        %s500 = ssub.s32 %s38, 1
        %p501 = scmp.lt.s32.totalorder %s43, 1
        %s502 = scalar_select %p501, %s43, 1
        %s503 = smul.addr %s502, 8
        %s504 = scalar_lea.vmem %s1, %s503
        %p505 = pneg %p64
        %p506 = pneg %p61
        %p507 = scmp.lt.s32.totalorder %s43, 1
        %s508 = scalar_select %p507, %s43, 1
        %s509 = smul.addr %s508, 8
        %s510 = scalar_lea.vmem %s2, %s509
        %p511 = pneg %p90
        %p512 = pneg %p87
        %p513 = scmp.lt.s32.totalorder %s43, 1
        %s514 = scalar_select %p513, %s43, 1
        %s515 = smul.addr %s514, 4
        %s516 = scalar_lea.vmem %s3, %s515
        %p517 = pneg %p116
        %p518 = pneg %p113
        %p519 = scmp.lt.s32.totalorder %s43, 1
        %s520 = scalar_select %p519, %s43, 1
        %s521 = smul.addr %s520, 4
        %s522 = scalar_lea.vmem %s4, %s521
        %p523 = pneg %p142
        %p524 = pneg %p139
        %p525 = scmp.lt.s32.totalorder %s43, 1
        %s526 = scalar_select %p525, %s43, 1
        %s527 = smul.addr %s526, 4
        %s528 = scalar_lea.vmem %s5, %s527
        %p529 = pneg %p168
        %p530 = pneg %p165
        %p531 = pneg %p189
        %p532 = pneg %p186
        %p533 = pneg %p210
        %p534 = pneg %p207
        %p535 = pneg %p231
        %p536 = pneg %p228
        %p537 = pneg %p252
        %p538 = pneg %p249
        %p539 = pneg %p273
        %p540 = pneg %p270
        %p541 = pneg %p294
        %p542 = pneg %p291
        %p543 = pneg %p315
        %p544 = pneg %p312
        %p545 = pneg %p341
        %p546 = pneg %p338
        %s547 = sand.u32 %s328, 1
        %s548 = scalar_lea.sflag [#allocation5], %s547
        %s549 = sand.u32 %s328, 1
        %s550 = smul.addr %s549, 8
        %s551 = scalar_lea.vmem [#allocation4], %s550
        %p552 = pneg %p367
        %p553 = pneg %p364
        %s554 = sand.u32 %s43, 1
        %s555 = scalar_lea.sflag [#allocation7], %s554
        %s556 = sand.u32 %s354, 1
        %s557 = smul.addr %s556, 4
        %s558 = scalar_lea.vmem [#allocation6], %s557
        %p559 = pneg %p393
        %p560 = pneg %p390
        %s561 = sand.u32 %s43, 1
        %s562 = scalar_lea.sflag [#allocation7], %s561
        %s563 = sand.u32 %s380, 1
        %s564 = scalar_lea.vmem [#allocation8], %s563
        %p565 = pneg %p419
        %p566 = pneg %p416
        %s567 = sand.u32 %s406, 1
        %s568 = scalar_lea.sflag [#allocation10], %s567
        %s569 = sand.u32 %s406, 1
        %s570 = scalar_lea.vmem [#allocation9], %s569
        %p571 = scmp.lt.s32.totalorder %s43, 1
        %s572 = scalar_select %p571, %s43, 1
        %s573 = smul.addr %s572, 8
        %s574 = scalar_lea.vmem %s1, %s573
        %p575 = scmp.lt.s32.totalorder %s43, 1
        %s576 = scalar_select %p575, %s43, 1
        %s577 = smul.addr %s576, 8
        %s578 = scalar_lea.vmem %s2, %s577
        %p579 = scmp.lt.s32.totalorder %s43, 1
        %s580 = scalar_select %p579, %s43, 1
        %s581 = smul.addr %s580, 4
        %s582 = scalar_lea.vmem %s3, %s581
        %p583 = scmp.lt.s32.totalorder %s43, 1
        %s584 = scalar_select %p583, %s43, 1
        %s585 = smul.addr %s584, 4
        %s586 = scalar_lea.vmem %s4, %s585
        %p587 = scmp.lt.s32.totalorder %s43, 1
        %s588 = scalar_select %p587, %s43, 1
        %s589 = smul.addr %s588, 4
        %s590 = scalar_lea.vmem %s5, %s589
        %v591 = vld [vmem:[%s574] sm:$0xff]
        %v592 = vld [vmem:[%s582] sm:$0xf]
        %v593 = vld [vmem:[%s578] sm:$0xff]
        %v594 = vld [vmem:[%s586] sm:$0xf]
        %v595 = vld [vmem:[%s590] sm:$0xf]
        %v596 = vld [vmem:[%s6] sm:$0xff]
        %v597 = vld [vmem:[%s6 + $0x8] sm:$0xff]
        %v598 = vld [vmem:[%s6 + $0x10] sm:$0xff]
        %v599 = vld [vmem:[%s6 + $0x18] sm:$0xff]
        %v600 = vld [vmem:[%s6 + $0x20] sm:$0xff]
        %v601 = vld [vmem:[%s6 + $0x28] sm:$0xff]
        %v602 = vld [vmem:[%s6 + $0x30] sm:$0xff]
        %v603 = vld [vmem:[%s6 + $0x38] sm:$0xff]
        %v604 = vld [vmem:[%s6 + $0x40] sm:$0xff]
        %v605 = vld [vmem:[%s6 + $0x48] sm:$0xff]
        %v606 = vld [vmem:[%s6 + $0x50] sm:$0xff]
        %v607 = vld [vmem:[%s6 + $0x58] sm:$0xff]
        %v608 = vld [vmem:[%s6 + $0x60] sm:$0xff]
        %v609 = vld [vmem:[%s6 + $0x68] sm:$0xff]
        %v610 = vld [vmem:[%s6 + $0x70] sm:$0xff]
        %v611 = vld [vmem:[%s6 + $0x78] sm:$0xff]
        %612 = vmatprep.subr.mxu0 0.0
        %613 = vmatpush1.msra.mxu0 %v596
        %614 = vmatprep.subr.mxu0 0.0
        %615 = vmatpush1.msra.mxu0 %v597
        %616 = vmatprep.subr.mxu0 0.0
        %617 = vmatpush1.msra.mxu0 %v598
        %618 = vmatprep.subr.mxu0 0.0
        %619 = vmatpush1.msra.mxu0 %v599
        %620 = vmatprep.subr.mxu0 0.0
        %621 = vmatpush1.msra.mxu0 %v600
        %622 = vmatprep.subr.mxu0 0.0
        %623 = vmatpush1.msra.mxu0 %v601
        %624 = vmatprep.subr.mxu0 0.0
        %625 = vmatpush1.msra.mxu0 %v602
        %626 = vmatprep.subr.mxu0 0.0
        %627 = vmatpush1.msra.mxu0 %v603
        %628 = vmatprep.subr.mxu0 0.0
        %629 = vmatpush1.msra.mxu0 %v604
        %630 = vmatprep.subr.mxu0 0.0
        %631 = vmatpush1.msra.mxu0 %v605
        %632 = vmatprep.subr.mxu0 0.0
        %633 = vmatpush1.msra.mxu0 %v606
        %634 = vmatprep.subr.mxu0 0.0
        %635 = vmatpush1.msra.mxu0 %v607
        %636 = vmatprep.subr.mxu0 0.0
        %637 = vmatpush1.msra.mxu0 %v608
        %638 = vmatprep.subr.mxu0 0.0
        %639 = vmatpush1.msra.mxu0 %v609
        %640 = vmatprep.subr.mxu0 0.0
        %641 = vmatpush1.msra.mxu0 %v610
        %642 = vmatprep.subr.mxu0 0.0
        %643 = vmatpush1.msra.mxu0 %v611
        %644 = vmatprep.subr.mxu0 0.0
        %645 = vmatpush1.msra.mxu0 0.0
        %646 = vmatprep.subr.mxu0 0.0
        %647 = vmatpush1.msra.mxu0 0.0
        %648 = vmatprep.subr.mxu0 0.0
        %649 = vmatpush1.msra.mxu0 0.0
        %650 = vmatprep.subr.mxu0 0.0
        %651 = vmatpush1.msra.mxu0 0.0
        %652 = vmatprep.subr.mxu0 0.0
        %653 = vmatpush1.msra.mxu0 0.0
        %654 = vmatprep.subr.mxu0 0.0
        %655 = vmatpush1.msra.mxu0 0.0
        %656 = vmatprep.subr.mxu0 0.0
        %657 = vmatpush1.msra.mxu0 0.0
        %658 = vmatprep.subr.mxu0 0.0
        %659 = vmatpush1.msra.mxu0 0.0
        %660 = vmatprep.subr.mxu0 0.0
        %661 = vmatpush1.msra.mxu0 0.0
        %662 = vmatprep.subr.mxu0 0.0
        %663 = vmatpush1.msra.mxu0 0.0
        %664 = vmatprep.subr.mxu0 0.0
        %665 = vmatpush1.msra.mxu0 0.0
        %666 = vmatprep.subr.mxu0 0.0
        %667 = vmatpush1.msra.mxu0 0.0
        %668 = vmatprep.subr.mxu0 0.0
        %669 = vmatpush1.msra.mxu0 0.0
        %670 = vmatprep.subr.mxu0 0.0
        %671 = vmatpush1.msra.mxu0 0.0
        %672 = vmatprep.subr.mxu0 0.0
        %673 = vmatpush1.msra.mxu0 0.0
        %674 = vmatprep.subr.mxu0 0.0
        %675 = vmatpush1.msra.mxu0 0.0
        %676 = vmatprep.mubr.f32.mxu0 0.0
        %677 = vmatmul.mubr.f32.gmra.mrb[0].mxu0 %v591
        %v678 = vpop.f32.mrb[0].mxu0
        %v679 = vadd.f32 0.0, %v678
        %v680 = vpop.f32.mrb[0].mxu0
        %681 = vdwg.mxu0
        %v682 = vld [vmem:[%s7] sm:$0xff]
        %v683 = vld [vmem:[%s7 + $0x8] sm:$0xff]
        %v684 = vld [vmem:[%s7 + $0x10] sm:$0xff]
        %v685 = vld [vmem:[%s7 + $0x18] sm:$0xff]
        %v686 = vld [vmem:[%s7 + $0x20] sm:$0xff]
        %v687 = vld [vmem:[%s7 + $0x28] sm:$0xff]
        %v688 = vld [vmem:[%s7 + $0x30] sm:$0xff]
        %v689 = vld [vmem:[%s7 + $0x38] sm:$0xff]
        %v690 = vld [vmem:[%s7 + $0x40] sm:$0xff]
        %v691 = vld [vmem:[%s7 + $0x48] sm:$0xff]
        %v692 = vld [vmem:[%s7 + $0x50] sm:$0xff]
        %v693 = vld [vmem:[%s7 + $0x58] sm:$0xff]
        %v694 = vld [vmem:[%s7 + $0x60] sm:$0xff]
        %v695 = vld [vmem:[%s7 + $0x68] sm:$0xff]
        %v696 = vld [vmem:[%s7 + $0x70] sm:$0xff]
        %v697 = vld [vmem:[%s7 + $0x78] sm:$0xff]
        %698 = vmatprep.subr.mxu0 0.0
        %699 = vmatpush1.msra.mxu0 %v682
        %700 = vmatprep.subr.mxu0 0.0
        %701 = vmatpush1.msra.mxu0 %v683
        %702 = vmatprep.subr.mxu0 0.0
        %703 = vmatpush1.msra.mxu0 %v684
        %704 = vmatprep.subr.mxu0 0.0
        %705 = vmatpush1.msra.mxu0 %v685
        %706 = vmatprep.subr.mxu0 0.0
        %707 = vmatpush1.msra.mxu0 %v686
        %708 = vmatprep.subr.mxu0 0.0
        %709 = vmatpush1.msra.mxu0 %v687
        %710 = vmatprep.subr.mxu0 0.0
        %711 = vmatpush1.msra.mxu0 %v688
        %712 = vmatprep.subr.mxu0 0.0
        %713 = vmatpush1.msra.mxu0 %v689
        %714 = vmatprep.subr.mxu0 0.0
        %715 = vmatpush1.msra.mxu0 %v690
        %716 = vmatprep.subr.mxu0 0.0
        %717 = vmatpush1.msra.mxu0 %v691
        %718 = vmatprep.subr.mxu0 0.0
        %719 = vmatpush1.msra.mxu0 %v692
        %720 = vmatprep.subr.mxu0 0.0
        %721 = vmatpush1.msra.mxu0 %v693
        %722 = vmatprep.subr.mxu0 0.0
        %723 = vmatpush1.msra.mxu0 %v694
        %724 = vmatprep.subr.mxu0 0.0
        %725 = vmatpush1.msra.mxu0 %v695
        %726 = vmatprep.subr.mxu0 0.0
        %727 = vmatpush1.msra.mxu0 %v696
        %728 = vmatprep.subr.mxu0 0.0
        %729 = vmatpush1.msra.mxu0 %v697
        %730 = vmatprep.subr.mxu0 0.0
        %731 = vmatpush1.msra.mxu0 0.0
        %732 = vmatprep.subr.mxu0 0.0
        %733 = vmatpush1.msra.mxu0 0.0
        %734 = vmatprep.subr.mxu0 0.0
        %735 = vmatpush1.msra.mxu0 0.0
        %736 = vmatprep.subr.mxu0 0.0
        %737 = vmatpush1.msra.mxu0 0.0
        %738 = vmatprep.subr.mxu0 0.0
        %739 = vmatpush1.msra.mxu0 0.0
        %740 = vmatprep.subr.mxu0 0.0
        %741 = vmatpush1.msra.mxu0 0.0
        %742 = vmatprep.subr.mxu0 0.0
        %743 = vmatpush1.msra.mxu0 0.0
        %744 = vmatprep.subr.mxu0 0.0
        %745 = vmatpush1.msra.mxu0 0.0
        %746 = vmatprep.subr.mxu0 0.0
        %747 = vmatpush1.msra.mxu0 0.0
        %748 = vmatprep.subr.mxu0 0.0
        %749 = vmatpush1.msra.mxu0 0.0
        %750 = vmatprep.subr.mxu0 0.0
        %751 = vmatpush1.msra.mxu0 0.0
        %752 = vmatprep.subr.mxu0 0.0
        %753 = vmatpush1.msra.mxu0 0.0
        %754 = vmatprep.subr.mxu0 0.0
        %755 = vmatpush1.msra.mxu0 0.0
        %756 = vmatprep.subr.mxu0 0.0
        %757 = vmatpush1.msra.mxu0 0.0
        %758 = vmatprep.subr.mxu0 0.0
        %759 = vmatpush1.msra.mxu0 0.0
        %760 = vmatprep.subr.mxu0 0.0
        %761 = vmatpush1.msra.mxu0 0.0
        %762 = vmatprep.mubr.f32.mxu0 0.0
        %763 = vmatmul.mubr.f32.gmra.mrb[0].mxu0 %v591
        %v764 = vpop.f32.mrb[0].mxu0
        %v765 = vadd.f32 0.0, %v764
        %v766 = vpop.f32.mrb[0].mxu0
        %767 = vdwg.mxu0
        %v768 = vld [vmem:[%s8] sm:$0xff]
        %v769 = vld [vmem:[%s8 + $0x8] sm:$0xff]
        %v770 = vld [vmem:[%s8 + $0x10] sm:$0xff]
        %v771 = vld [vmem:[%s8 + $0x18] sm:$0xff]
        %v772 = vld [vmem:[%s8 + $0x20] sm:$0xff]
        %v773 = vld [vmem:[%s8 + $0x28] sm:$0xff]
        %v774 = vld [vmem:[%s8 + $0x30] sm:$0xff]
        %v775 = vld [vmem:[%s8 + $0x38] sm:$0xff]
        %v776 = vld [vmem:[%s8 + $0x40] sm:$0xff]
        %v777 = vld [vmem:[%s8 + $0x48] sm:$0xff]
        %v778 = vld [vmem:[%s8 + $0x50] sm:$0xff]
        %v779 = vld [vmem:[%s8 + $0x58] sm:$0xff]
        %v780 = vld [vmem:[%s8 + $0x60] sm:$0xff]
        %v781 = vld [vmem:[%s8 + $0x68] sm:$0xff]
        %v782 = vld [vmem:[%s8 + $0x70] sm:$0xff]
        %v783 = vld [vmem:[%s8 + $0x78] sm:$0xff]
        %784 = vmatprep.subr.mxu0 0.0
        %785 = vmatpush1.msra.mxu0 %v768
        %786 = vmatprep.subr.mxu0 0.0
        %787 = vmatpush1.msra.mxu0 %v769
        %788 = vmatprep.subr.mxu0 0.0
        %789 = vmatpush1.msra.mxu0 %v770
        %790 = vmatprep.subr.mxu0 0.0
        %791 = vmatpush1.msra.mxu0 %v771
        %792 = vmatprep.subr.mxu0 0.0
        %793 = vmatpush1.msra.mxu0 %v772
        %794 = vmatprep.subr.mxu0 0.0
        %795 = vmatpush1.msra.mxu0 %v773
        %796 = vmatprep.subr.mxu0 0.0
        %797 = vmatpush1.msra.mxu0 %v774
        %798 = vmatprep.subr.mxu0 0.0
        %799 = vmatpush1.msra.mxu0 %v775
        %800 = vmatprep.subr.mxu0 0.0
        %801 = vmatpush1.msra.mxu0 %v776
        %802 = vmatprep.subr.mxu0 0.0
        %803 = vmatpush1.msra.mxu0 %v777
        %804 = vmatprep.subr.mxu0 0.0
        %805 = vmatpush1.msra.mxu0 %v778
        %806 = vmatprep.subr.mxu0 0.0
        %807 = vmatpush1.msra.mxu0 %v779
        %808 = vmatprep.subr.mxu0 0.0
        %809 = vmatpush1.msra.mxu0 %v780
        %810 = vmatprep.subr.mxu0 0.0
        %811 = vmatpush1.msra.mxu0 %v781
        %812 = vmatprep.subr.mxu0 0.0
        %813 = vmatpush1.msra.mxu0 %v782
        %814 = vmatprep.subr.mxu0 0.0
        %815 = vmatpush1.msra.mxu0 %v783
        %816 = vmatprep.subr.mxu0 0.0
        %817 = vmatpush1.msra.mxu0 0.0
        %818 = vmatprep.subr.mxu0 0.0
        %819 = vmatpush1.msra.mxu0 0.0
        %820 = vmatprep.subr.mxu0 0.0
        %821 = vmatpush1.msra.mxu0 0.0
        %822 = vmatprep.subr.mxu0 0.0
        %823 = vmatpush1.msra.mxu0 0.0
        %824 = vmatprep.subr.mxu0 0.0
        %825 = vmatpush1.msra.mxu0 0.0
        %826 = vmatprep.subr.mxu0 0.0
        %827 = vmatpush1.msra.mxu0 0.0
        %828 = vmatprep.subr.mxu0 0.0
        %829 = vmatpush1.msra.mxu0 0.0
        %830 = vmatprep.subr.mxu0 0.0
        %831 = vmatpush1.msra.mxu0 0.0
        %832 = vmatprep.subr.mxu0 0.0
        %833 = vmatpush1.msra.mxu0 0.0
        %834 = vmatprep.subr.mxu0 0.0
        %835 = vmatpush1.msra.mxu0 0.0
        %836 = vmatprep.subr.mxu0 0.0
        %837 = vmatpush1.msra.mxu0 0.0
        %838 = vmatprep.subr.mxu0 0.0
        %839 = vmatpush1.msra.mxu0 0.0
        %840 = vmatprep.subr.mxu0 0.0
        %841 = vmatpush1.msra.mxu0 0.0
        %842 = vmatprep.subr.mxu0 0.0
        %843 = vmatpush1.msra.mxu0 0.0
        %844 = vmatprep.subr.mxu0 0.0
        %845 = vmatpush1.msra.mxu0 0.0
        %846 = vmatprep.subr.mxu0 0.0
        %847 = vmatpush1.msra.mxu0 0.0
        %848 = vmatprep.mubr.f32.mxu0 0.0
        %849 = vmatmul.mubr.f32.gmra.mrb[0].mxu0 %v591
        %v850 = vpop.f32.mrb[0].mxu0
        %v851 = vadd.f32 0.0, %v850
        %v852 = vpop.f32.mrb[0].mxu0
        %853 = vdwg.mxu0
        %v855 = vrot.slane %v679, 7
        %vm857 = vcmask 1040384
        %v858 = vsel %vm857, %v679, %v855
        %v859 = vrot.slane %v679, 1
        %vm861 = vcmask 1046528
        %v862 = vsel %vm861, %v859, %v679
        %v864 = vrot.slane %v851, 7
        %v866 = vsel %vm857, %v851, %v864
        %v867 = vrot.slane %v851, 1
        %v869 = vsel %vm861, %v867, %v851
        %vm870 = vcmp.gt.f32.partialorder %v593, 0.5
        %v871 = vadd.f32 %v765, %v866
        %vm872 = vcmp.gt.f32.partialorder %v871, 0.0
        %v873 = vmul.f32 %v871, 0.2
        %v874 = vsel %vm872, %v871, %v873
        %v875 = vsel %vm870, 1, 0
        %876 = vset.pattern.permute.xlu0 0
        %877 = vperm.xlu0 %876, %v875
        %v878 = vpop.permute.xlu0 %877
        %vm879 = vcmp.eq.s32.totalorder %v878, 1
        %v880 = vsel %vm879, -9e+15, %v874
        %v881 = vadd.f32 %v765, %v851
        %vm882 = vcmp.gt.f32.partialorder %v881, 0.0
        %v883 = vmul.f32 %v881, 0.2
        %v884 = vsel %vm882, %v881, %v883
        %885 = vset.pattern.permute.xlu0 1
        %886 = vperm.xlu0 %885, %v875
        %v887 = vpop.permute.xlu0 %886
        %vm888 = vcmp.eq.s32.totalorder %v887, 1
        %v889 = vsel %vm888, -9e+15, %v884
        %v890 = vadd.f32 %v765, %v869
        %vm891 = vcmp.gt.f32.partialorder %v890, 0.0
        %v892 = vmul.f32 %v890, 0.2
        %v893 = vsel %vm891, %v890, %v892
        %894 = vset.pattern.permute.xlu0 2
        %895 = vperm.xlu0 %894, %v875
        %v896 = vpop.permute.xlu0 %895
        %vm897 = vcmp.eq.s32.totalorder %v896, 1
        %v898 = vsel %vm897, -9e+15, %v893
        %v899 = vmax.f32 %v880, %v889
        %v900 = vmax.f32 %v899, %v898
        %v901 = vsub.f32 %v880, %v900
        %v902 = vmul.f32 %v901, 1.442695
        %v903 = vpow.pop %v902
        %v904 = vsub.f32 %v889, %v900
        %v905 = vmul.f32 %v904, 1.442695
        %v906 = vpow.pop %v905
        %v907 = vsub.f32 %v898, %v900
        %v908 = vmul.f32 %v907, 1.442695
        %v909 = vpow.pop %v908
        %v910 = vadd.f32 %v903, %v906
        %v911 = vadd.f32 %v910, %v909
        %v912 = vlaneseq
        %v913 = vshrl.u32 %v912, 7
        %v914 = vlaneseq
        %v915 = vand.u32 %v914, 127
        %v916 = vmul.u32 %v913, 16
        %vm917 = vcmp.ge.s32.totalorder %v915, %v916
        %v918 = vadd.s32 %v913, 1
        %v919 = vmul.u32 %v918, 16
        %vm920 = vcmp.lt.s32.totalorder %v915, %v919
        %vm921 = vmand %vm917, %vm920
        %v922 = vsel %vm921, 1, 0
        %v923 = vcvt.s32.f32 %v922
        %vm924 = vcmask 31744
        %v926 = vsel %vm924, %v903, 0
        %vm928 = vcmask 1043456
        %v930 = vsel %vm928, %v923, 0
        %932 = vmatprep.subr.mxu0 0.0
        %933 = vmatpush1.msra.mxu0 %v930
        %934 = vmatprep.subr.mxu0 0.0
        %935 = vmatpush1.msra.mxu0 0.0
        %936 = vmatprep.subr.mxu0 0.0
        %937 = vmatpush1.msra.mxu0 0.0
        %938 = vmatprep.subr.mxu0 0.0
        %939 = vmatpush1.msra.mxu0 0.0
        %940 = vmatprep.subr.mxu0 0.0
        %941 = vmatpush1.msra.mxu0 0.0
        %942 = vmatprep.subr.mxu0 0.0
        %943 = vmatpush1.msra.mxu0 0.0
        %944 = vmatprep.subr.mxu0 0.0
        %945 = vmatpush1.msra.mxu0 0.0
        %946 = vmatprep.subr.mxu0 0.0
        %947 = vmatpush1.msra.mxu0 0.0
        %948 = vmatprep.subr.mxu0 0.0
        %949 = vmatpush1.msra.mxu0 0.0
        %950 = vmatprep.subr.mxu0 0.0
        %951 = vmatpush1.msra.mxu0 0.0
        %952 = vmatprep.subr.mxu0 0.0
        %953 = vmatpush1.msra.mxu0 0.0
        %954 = vmatprep.subr.mxu0 0.0
        %955 = vmatpush1.msra.mxu0 0.0
        %956 = vmatprep.subr.mxu0 0.0
        %957 = vmatpush1.msra.mxu0 0.0
        %958 = vmatprep.subr.mxu0 0.0
        %959 = vmatpush1.msra.mxu0 0.0
        %960 = vmatprep.subr.mxu0 0.0
        %961 = vmatpush1.msra.mxu0 0.0
        %962 = vmatprep.subr.mxu0 0.0
        %963 = vmatpush1.msra.mxu0 0.0
        %964 = vmatprep.subr.mxu0 0.0
        %965 = vmatpush1.msra.mxu0 0.0
        %966 = vmatprep.subr.mxu0 0.0
        %967 = vmatpush1.msra.mxu0 0.0
        %968 = vmatprep.subr.mxu0 0.0
        %969 = vmatpush1.msra.mxu0 0.0
        %970 = vmatprep.subr.mxu0 0.0
        %971 = vmatpush1.msra.mxu0 0.0
        %972 = vmatprep.subr.mxu0 0.0
        %973 = vmatpush1.msra.mxu0 0.0
        %974 = vmatprep.subr.mxu0 0.0
        %975 = vmatpush1.msra.mxu0 0.0
        %976 = vmatprep.subr.mxu0 0.0
        %977 = vmatpush1.msra.mxu0 0.0
        %978 = vmatprep.subr.mxu0 0.0
        %979 = vmatpush1.msra.mxu0 0.0
        %980 = vmatprep.subr.mxu0 0.0
        %981 = vmatpush1.msra.mxu0 0.0
        %982 = vmatprep.subr.mxu0 0.0
        %983 = vmatpush1.msra.mxu0 0.0
        %984 = vmatprep.subr.mxu0 0.0
        %985 = vmatpush1.msra.mxu0 0.0
        %986 = vmatprep.subr.mxu0 0.0
        %987 = vmatpush1.msra.mxu0 0.0
        %988 = vmatprep.subr.mxu0 0.0
        %989 = vmatpush1.msra.mxu0 0.0
        %990 = vmatprep.subr.mxu0 0.0
        %991 = vmatpush1.msra.mxu0 0.0
        %992 = vmatprep.subr.mxu0 0.0
        %993 = vmatpush1.msra.mxu0 0.0
        %994 = vmatprep.subr.mxu0 0.0
        %995 = vmatpush1.msra.mxu0 0.0
        %996 = vmatprep.mubr.f32.mxu0 0.0
        %997 = vmatmul.mubr.f32.gmra.mrb[0].mxu0 %v926
        %v998 = vpop.f32.mrb[0].mxu0
        %v999 = vadd.f32 0.0, %v998
        %v1000 = vpop.f32.mrb[0].mxu0
        %1001 = vdwg.mxu0
        %v1002 = vmul.f32 %v999, %v858
        %v1004 = vsel %vm924, %v906, 0
        %1006 = vmatprep.subr.mxu0 0.0
        %1007 = vmatpush1.msra.mxu0 %v930
        %1008 = vmatprep.subr.mxu0 0.0
        %1009 = vmatpush1.msra.mxu0 0.0
        %1010 = vmatprep.subr.mxu0 0.0
        %1011 = vmatpush1.msra.mxu0 0.0
        %1012 = vmatprep.subr.mxu0 0.0
        %1013 = vmatpush1.msra.mxu0 0.0
        %1014 = vmatprep.subr.mxu0 0.0
        %1015 = vmatpush1.msra.mxu0 0.0
        %1016 = vmatprep.subr.mxu0 0.0
        %1017 = vmatpush1.msra.mxu0 0.0
        %1018 = vmatprep.subr.mxu0 0.0
        %1019 = vmatpush1.msra.mxu0 0.0
        %1020 = vmatprep.subr.mxu0 0.0
        %1021 = vmatpush1.msra.mxu0 0.0
        %1022 = vmatprep.subr.mxu0 0.0
        %1023 = vmatpush1.msra.mxu0 0.0
        %1024 = vmatprep.subr.mxu0 0.0
        %1025 = vmatpush1.msra.mxu0 0.0
        %1026 = vmatprep.subr.mxu0 0.0
        %1027 = vmatpush1.msra.mxu0 0.0
        %1028 = vmatprep.subr.mxu0 0.0
        %1029 = vmatpush1.msra.mxu0 0.0
        %1030 = vmatprep.subr.mxu0 0.0
        %1031 = vmatpush1.msra.mxu0 0.0
        %1032 = vmatprep.subr.mxu0 0.0
        %1033 = vmatpush1.msra.mxu0 0.0
        %1034 = vmatprep.subr.mxu0 0.0
        %1035 = vmatpush1.msra.mxu0 0.0
        %1036 = vmatprep.subr.mxu0 0.0
        %1037 = vmatpush1.msra.mxu0 0.0
        %1038 = vmatprep.subr.mxu0 0.0
        %1039 = vmatpush1.msra.mxu0 0.0
        %1040 = vmatprep.subr.mxu0 0.0
        %1041 = vmatpush1.msra.mxu0 0.0
        %1042 = vmatprep.subr.mxu0 0.0
        %1043 = vmatpush1.msra.mxu0 0.0
        %1044 = vmatprep.subr.mxu0 0.0
        %1045 = vmatpush1.msra.mxu0 0.0
        %1046 = vmatprep.subr.mxu0 0.0
        %1047 = vmatpush1.msra.mxu0 0.0
        %1048 = vmatprep.subr.mxu0 0.0
        %1049 = vmatpush1.msra.mxu0 0.0
        %1050 = vmatprep.subr.mxu0 0.0
        %1051 = vmatpush1.msra.mxu0 0.0
        %1052 = vmatprep.subr.mxu0 0.0
        %1053 = vmatpush1.msra.mxu0 0.0
        %1054 = vmatprep.subr.mxu0 0.0
        %1055 = vmatpush1.msra.mxu0 0.0
        %1056 = vmatprep.subr.mxu0 0.0
        %1057 = vmatpush1.msra.mxu0 0.0
        %1058 = vmatprep.subr.mxu0 0.0
        %1059 = vmatpush1.msra.mxu0 0.0
        %1060 = vmatprep.subr.mxu0 0.0
        %1061 = vmatpush1.msra.mxu0 0.0
        %1062 = vmatprep.subr.mxu0 0.0
        %1063 = vmatpush1.msra.mxu0 0.0
        %1064 = vmatprep.subr.mxu0 0.0
        %1065 = vmatpush1.msra.mxu0 0.0
        %1066 = vmatprep.subr.mxu0 0.0
        %1067 = vmatpush1.msra.mxu0 0.0
        %1068 = vmatprep.subr.mxu0 0.0
        %1069 = vmatpush1.msra.mxu0 0.0
        %1070 = vmatprep.mubr.f32.mxu0 0.0
        %1071 = vmatmul.mubr.f32.gmra.mrb[0].mxu0 %v1004
        %v1072 = vpop.f32.mrb[0].mxu0
        %v1073 = vadd.f32 0.0, %v1072
        %v1074 = vpop.f32.mrb[0].mxu0
        %1075 = vdwg.mxu0
        %v1076 = vmul.f32 %v1073, %v679
        %v1077 = vadd.f32 %v1002, %v1076
        %v1079 = vsel %vm924, %v909, 0
        %1081 = vmatprep.subr.mxu0 0.0
        %1082 = vmatpush1.msra.mxu0 %v930
        %1083 = vmatprep.subr.mxu0 0.0
        %1084 = vmatpush1.msra.mxu0 0.0
        %1085 = vmatprep.subr.mxu0 0.0
        %1086 = vmatpush1.msra.mxu0 0.0
        %1087 = vmatprep.subr.mxu0 0.0
        %1088 = vmatpush1.msra.mxu0 0.0
        %1089 = vmatprep.subr.mxu0 0.0
        %1090 = vmatpush1.msra.mxu0 0.0
        %1091 = vmatprep.subr.mxu0 0.0
        %1092 = vmatpush1.msra.mxu0 0.0
        %1093 = vmatprep.subr.mxu0 0.0
        %1094 = vmatpush1.msra.mxu0 0.0
        %1095 = vmatprep.subr.mxu0 0.0
        %1096 = vmatpush1.msra.mxu0 0.0
        %1097 = vmatprep.subr.mxu0 0.0
        %1098 = vmatpush1.msra.mxu0 0.0
        %1099 = vmatprep.subr.mxu0 0.0
        %1100 = vmatpush1.msra.mxu0 0.0
        %1101 = vmatprep.subr.mxu0 0.0
        %1102 = vmatpush1.msra.mxu0 0.0
        %1103 = vmatprep.subr.mxu0 0.0
        %1104 = vmatpush1.msra.mxu0 0.0
        %1105 = vmatprep.subr.mxu0 0.0
        %1106 = vmatpush1.msra.mxu0 0.0
        %1107 = vmatprep.subr.mxu0 0.0
        %1108 = vmatpush1.msra.mxu0 0.0
        %1109 = vmatprep.subr.mxu0 0.0
        %1110 = vmatpush1.msra.mxu0 0.0
        %1111 = vmatprep.subr.mxu0 0.0
        %1112 = vmatpush1.msra.mxu0 0.0
        %1113 = vmatprep.subr.mxu0 0.0
        %1114 = vmatpush1.msra.mxu0 0.0
        %1115 = vmatprep.subr.mxu0 0.0
        %1116 = vmatpush1.msra.mxu0 0.0
        %1117 = vmatprep.subr.mxu0 0.0
        %1118 = vmatpush1.msra.mxu0 0.0
        %1119 = vmatprep.subr.mxu0 0.0
        %1120 = vmatpush1.msra.mxu0 0.0
        %1121 = vmatprep.subr.mxu0 0.0
        %1122 = vmatpush1.msra.mxu0 0.0
        %1123 = vmatprep.subr.mxu0 0.0
        %1124 = vmatpush1.msra.mxu0 0.0
        %1125 = vmatprep.subr.mxu0 0.0
        %1126 = vmatpush1.msra.mxu0 0.0
        %1127 = vmatprep.subr.mxu0 0.0
        %1128 = vmatpush1.msra.mxu0 0.0
        %1129 = vmatprep.subr.mxu0 0.0
        %1130 = vmatpush1.msra.mxu0 0.0
        %1131 = vmatprep.subr.mxu0 0.0
        %1132 = vmatpush1.msra.mxu0 0.0
        %1133 = vmatprep.subr.mxu0 0.0
        %1134 = vmatpush1.msra.mxu0 0.0
        %1135 = vmatprep.subr.mxu0 0.0
        %1136 = vmatpush1.msra.mxu0 0.0
        %1137 = vmatprep.subr.mxu0 0.0
        %1138 = vmatpush1.msra.mxu0 0.0
        %1139 = vmatprep.subr.mxu0 0.0
        %1140 = vmatpush1.msra.mxu0 0.0
        %1141 = vmatprep.subr.mxu0 0.0
        %1142 = vmatpush1.msra.mxu0 0.0
        %1143 = vmatprep.subr.mxu0 0.0
        %1144 = vmatpush1.msra.mxu0 0.0
        %1145 = vmatprep.mubr.f32.mxu0 0.0
        %1146 = vmatmul.mubr.f32.gmra.mrb[0].mxu0 %v1079
        %v1147 = vpop.f32.mrb[0].mxu0
        %v1148 = vadd.f32 0.0, %v1147
        %v1149 = vpop.f32.mrb[0].mxu0
        %1150 = vdwg.mxu0
        %v1151 = vmul.f32 %v1148, %v862
        %v1152 = vadd.f32 %v1077, %v1151
        %v1154 = vsel %vm924, %v911, 0
        %1156 = vmatprep.subr.mxu0 0.0
        %1157 = vmatpush1.msra.mxu0 %v930
        %1158 = vmatprep.subr.mxu0 0.0
        %1159 = vmatpush1.msra.mxu0 0.0
        %1160 = vmatprep.subr.mxu0 0.0
        %1161 = vmatpush1.msra.mxu0 0.0
        %1162 = vmatprep.subr.mxu0 0.0
        %1163 = vmatpush1.msra.mxu0 0.0
        %1164 = vmatprep.subr.mxu0 0.0
        %1165 = vmatpush1.msra.mxu0 0.0
        %1166 = vmatprep.subr.mxu0 0.0
        %1167 = vmatpush1.msra.mxu0 0.0
        %1168 = vmatprep.subr.mxu0 0.0
        %1169 = vmatpush1.msra.mxu0 0.0
        %1170 = vmatprep.subr.mxu0 0.0
        %1171 = vmatpush1.msra.mxu0 0.0
        %1172 = vmatprep.subr.mxu0 0.0
        %1173 = vmatpush1.msra.mxu0 0.0
        %1174 = vmatprep.subr.mxu0 0.0
        %1175 = vmatpush1.msra.mxu0 0.0
        %1176 = vmatprep.subr.mxu0 0.0
        %1177 = vmatpush1.msra.mxu0 0.0
        %1178 = vmatprep.subr.mxu0 0.0
        %1179 = vmatpush1.msra.mxu0 0.0
        %1180 = vmatprep.subr.mxu0 0.0
        %1181 = vmatpush1.msra.mxu0 0.0
        %1182 = vmatprep.subr.mxu0 0.0
        %1183 = vmatpush1.msra.mxu0 0.0
        %1184 = vmatprep.subr.mxu0 0.0
        %1185 = vmatpush1.msra.mxu0 0.0
        %1186 = vmatprep.subr.mxu0 0.0
        %1187 = vmatpush1.msra.mxu0 0.0
        %1188 = vmatprep.subr.mxu0 0.0
        %1189 = vmatpush1.msra.mxu0 0.0
        %1190 = vmatprep.subr.mxu0 0.0
        %1191 = vmatpush1.msra.mxu0 0.0
        %1192 = vmatprep.subr.mxu0 0.0
        %1193 = vmatpush1.msra.mxu0 0.0
        %1194 = vmatprep.subr.mxu0 0.0
        %1195 = vmatpush1.msra.mxu0 0.0
        %1196 = vmatprep.subr.mxu0 0.0
        %1197 = vmatpush1.msra.mxu0 0.0
        %1198 = vmatprep.subr.mxu0 0.0
        %1199 = vmatpush1.msra.mxu0 0.0
        %1200 = vmatprep.subr.mxu0 0.0
        %1201 = vmatpush1.msra.mxu0 0.0
        %1202 = vmatprep.subr.mxu0 0.0
        %1203 = vmatpush1.msra.mxu0 0.0
        %1204 = vmatprep.subr.mxu0 0.0
        %1205 = vmatpush1.msra.mxu0 0.0
        %1206 = vmatprep.subr.mxu0 0.0
        %1207 = vmatpush1.msra.mxu0 0.0
        %1208 = vmatprep.subr.mxu0 0.0
        %1209 = vmatpush1.msra.mxu0 0.0
        %1210 = vmatprep.subr.mxu0 0.0
        %1211 = vmatpush1.msra.mxu0 0.0
        %1212 = vmatprep.subr.mxu0 0.0
        %1213 = vmatpush1.msra.mxu0 0.0
        %1214 = vmatprep.subr.mxu0 0.0
        %1215 = vmatpush1.msra.mxu0 0.0
        %1216 = vmatprep.subr.mxu0 0.0
        %1217 = vmatpush1.msra.mxu0 0.0
        %1218 = vmatprep.subr.mxu0 0.0
        %1219 = vmatpush1.msra.mxu0 0.0
        %1220 = vmatprep.mubr.f32.mxu0 0.0
        %1221 = vmatmul.mubr.f32.gmra.mrb[0].mxu0 %v1154
        %v1222 = vpop.f32.mrb[0].mxu0
        %v1223 = vadd.f32 0.0, %v1222
        %v1224 = vpop.f32.mrb[0].mxu0
        %1225 = vdwg.mxu0
        %v1226 = vrcp.pop %v1223
        %v1227 = vmul.f32 %v1152, %v1226
        %1229 = vrot.lane.b32.xlu0 %v1227, 112
        %v1230 = vpop.permute.xlu0 %1229
        %v1232 = vadd.f32 %v1227, %v1230
        %1233 = vrot.lane.b32.xlu0 %v1227, 96
        %v1234 = vpop.permute.xlu0 %1233
        %v1236 = vadd.f32 %v1232, %v1234
        %1237 = vrot.lane.b32.xlu0 %v1227, 80
        %v1238 = vpop.permute.xlu0 %1237
        %v1240 = vadd.f32 %v1236, %v1238
        %v1241 = vrcp.pop 4.0
        %v1242 = vmul.f32 %v1240, %v1241
        %vm1243 = vcmp.gt.f32.partialorder %v1242, 0.0
        %v1244 = vmul.f32 %v1242, 1.442695
        %v1245 = vpow.pop %v1244
        %v1246 = vsub.f32 %v1245, 1.0
        %v1247 = vsel %vm1243, %v1242, %v1246
        %vm1248 = vcmask 130048
        %1249 = vst.msk [vmem:[%s551] sm:$0xff] %vm1248, %v1247
        %v1250 = vld [vmem:[%s9] sm:$0xff]
        %v1251 = vld [vmem:[%s9 + $0x8] sm:$0xff]
        %v1252 = vld [vmem:[%s9 + $0x10] sm:$0xff]
        %v1253 = vld [vmem:[%s9 + $0x18] sm:$0xff]
        %v1254 = vld [vmem:[%s9 + $0x20] sm:$0xff]
        %v1255 = vld [vmem:[%s9 + $0x28] sm:$0xff]
        %v1256 = vld [vmem:[%s9 + $0x30] sm:$0xff]
        %v1257 = vld [vmem:[%s9 + $0x38] sm:$0xff]
        %v1258 = vld [vmem:[%s9 + $0x40] sm:$0xff]
        %v1259 = vld [vmem:[%s9 + $0x48] sm:$0xff]
        %v1260 = vld [vmem:[%s9 + $0x50] sm:$0xff]
        %v1261 = vld [vmem:[%s9 + $0x58] sm:$0xff]
        %v1262 = vld [vmem:[%s9 + $0x60] sm:$0xff]
        %v1263 = vld [vmem:[%s9 + $0x68] sm:$0xff]
        %v1264 = vld [vmem:[%s9 + $0x70] sm:$0xff]
        %v1265 = vld [vmem:[%s9 + $0x78] sm:$0xff]
        %1266 = vmatprep.subr.mxu0 0.0
        %1267 = vmatpush1.msra.mxu0 %v1250
        %1268 = vmatprep.subr.mxu0 0.0
        %1269 = vmatpush1.msra.mxu0 %v1251
        %1270 = vmatprep.subr.mxu0 0.0
        %1271 = vmatpush1.msra.mxu0 %v1252
        %1272 = vmatprep.subr.mxu0 0.0
        %1273 = vmatpush1.msra.mxu0 %v1253
        %1274 = vmatprep.subr.mxu0 0.0
        %1275 = vmatpush1.msra.mxu0 %v1254
        %1276 = vmatprep.subr.mxu0 0.0
        %1277 = vmatpush1.msra.mxu0 %v1255
        %1278 = vmatprep.subr.mxu0 0.0
        %1279 = vmatpush1.msra.mxu0 %v1256
        %1280 = vmatprep.subr.mxu0 0.0
        %1281 = vmatpush1.msra.mxu0 %v1257
        %1282 = vmatprep.subr.mxu0 0.0
        %1283 = vmatpush1.msra.mxu0 %v1258
        %1284 = vmatprep.subr.mxu0 0.0
        %1285 = vmatpush1.msra.mxu0 %v1259
        %1286 = vmatprep.subr.mxu0 0.0
        %1287 = vmatpush1.msra.mxu0 %v1260
        %1288 = vmatprep.subr.mxu0 0.0
        %1289 = vmatpush1.msra.mxu0 %v1261
        %1290 = vmatprep.subr.mxu0 0.0
        %1291 = vmatpush1.msra.mxu0 %v1262
        %1292 = vmatprep.subr.mxu0 0.0
        %1293 = vmatpush1.msra.mxu0 %v1263
        %1294 = vmatprep.subr.mxu0 0.0
        %1295 = vmatpush1.msra.mxu0 %v1264
        %1296 = vmatprep.subr.mxu0 0.0
        %1297 = vmatpush1.msra.mxu0 %v1265
        %1298 = vmatprep.subr.mxu0 0.0
        %1299 = vmatpush1.msra.mxu0 0.0
        %1300 = vmatprep.subr.mxu0 0.0
        %1301 = vmatpush1.msra.mxu0 0.0
        %1302 = vmatprep.subr.mxu0 0.0
        %1303 = vmatpush1.msra.mxu0 0.0
        %1304 = vmatprep.subr.mxu0 0.0
        %1305 = vmatpush1.msra.mxu0 0.0
        %1306 = vmatprep.subr.mxu0 0.0
        %1307 = vmatpush1.msra.mxu0 0.0
        %1308 = vmatprep.subr.mxu0 0.0
        %1309 = vmatpush1.msra.mxu0 0.0
        %1310 = vmatprep.subr.mxu0 0.0
        %1311 = vmatpush1.msra.mxu0 0.0
        %1312 = vmatprep.subr.mxu0 0.0
        %1313 = vmatpush1.msra.mxu0 0.0
        %1314 = vmatprep.subr.mxu0 0.0
        %1315 = vmatpush1.msra.mxu0 0.0
        %1316 = vmatprep.subr.mxu0 0.0
        %1317 = vmatpush1.msra.mxu0 0.0
        %1318 = vmatprep.subr.mxu0 0.0
        %1319 = vmatpush1.msra.mxu0 0.0
        %1320 = vmatprep.subr.mxu0 0.0
        %1321 = vmatpush1.msra.mxu0 0.0
        %1322 = vmatprep.subr.mxu0 0.0
        %1323 = vmatpush1.msra.mxu0 0.0
        %1324 = vmatprep.subr.mxu0 0.0
        %1325 = vmatpush1.msra.mxu0 0.0
        %1326 = vmatprep.subr.mxu0 0.0
        %1327 = vmatpush1.msra.mxu0 0.0
        %1328 = vmatprep.subr.mxu0 0.0
        %1329 = vmatpush1.msra.mxu0 0.0
        %1330 = vmatprep.mubr.f32.mxu0 0.0
        %1331 = vmatmul.mubr.f32.gmra.mrb[0].mxu0 %v592
        %v1332 = vpop.f32.mrb[0].mxu0
        %v1333 = vadd.f32 0.0, %v1332
        %v1334 = vpop.f32.mrb[0].mxu0
        %1335 = vdwg.mxu0
        %v1336 = vld [vmem:[%s10] sm:$0xff]
        %v1337 = vld [vmem:[%s10 + $0x8] sm:$0xff]
        %v1338 = vld [vmem:[%s10 + $0x10] sm:$0xff]
        %v1339 = vld [vmem:[%s10 + $0x18] sm:$0xff]
        %v1340 = vld [vmem:[%s10 + $0x20] sm:$0xff]
        %v1341 = vld [vmem:[%s10 + $0x28] sm:$0xff]
        %v1342 = vld [vmem:[%s10 + $0x30] sm:$0xff]
        %v1343 = vld [vmem:[%s10 + $0x38] sm:$0xff]
        %v1344 = vld [vmem:[%s10 + $0x40] sm:$0xff]
        %v1345 = vld [vmem:[%s10 + $0x48] sm:$0xff]
        %v1346 = vld [vmem:[%s10 + $0x50] sm:$0xff]
        %v1347 = vld [vmem:[%s10 + $0x58] sm:$0xff]
        %v1348 = vld [vmem:[%s10 + $0x60] sm:$0xff]
        %v1349 = vld [vmem:[%s10 + $0x68] sm:$0xff]
        %v1350 = vld [vmem:[%s10 + $0x70] sm:$0xff]
        %v1351 = vld [vmem:[%s10 + $0x78] sm:$0xff]
        %1352 = vmatprep.subr.mxu0 0.0
        %1353 = vmatpush1.msra.mxu0 %v1336
        %1354 = vmatprep.subr.mxu0 0.0
        %1355 = vmatpush1.msra.mxu0 %v1337
        %1356 = vmatprep.subr.mxu0 0.0
        %1357 = vmatpush1.msra.mxu0 %v1338
        %1358 = vmatprep.subr.mxu0 0.0
        %1359 = vmatpush1.msra.mxu0 %v1339
        %1360 = vmatprep.subr.mxu0 0.0
        %1361 = vmatpush1.msra.mxu0 %v1340
        %1362 = vmatprep.subr.mxu0 0.0
        %1363 = vmatpush1.msra.mxu0 %v1341
        %1364 = vmatprep.subr.mxu0 0.0
        %1365 = vmatpush1.msra.mxu0 %v1342
        %1366 = vmatprep.subr.mxu0 0.0
        %1367 = vmatpush1.msra.mxu0 %v1343
        %1368 = vmatprep.subr.mxu0 0.0
        %1369 = vmatpush1.msra.mxu0 %v1344
        %1370 = vmatprep.subr.mxu0 0.0
        %1371 = vmatpush1.msra.mxu0 %v1345
        %1372 = vmatprep.subr.mxu0 0.0
        %1373 = vmatpush1.msra.mxu0 %v1346
        %1374 = vmatprep.subr.mxu0 0.0
        %1375 = vmatpush1.msra.mxu0 %v1347
        %1376 = vmatprep.subr.mxu0 0.0
        %1377 = vmatpush1.msra.mxu0 %v1348
        %1378 = vmatprep.subr.mxu0 0.0
        %1379 = vmatpush1.msra.mxu0 %v1349
        %1380 = vmatprep.subr.mxu0 0.0
        %1381 = vmatpush1.msra.mxu0 %v1350
        %1382 = vmatprep.subr.mxu0 0.0
        %1383 = vmatpush1.msra.mxu0 %v1351
        %1384 = vmatprep.subr.mxu0 0.0
        %1385 = vmatpush1.msra.mxu0 0.0
        %1386 = vmatprep.subr.mxu0 0.0
        %1387 = vmatpush1.msra.mxu0 0.0
        %1388 = vmatprep.subr.mxu0 0.0
        %1389 = vmatpush1.msra.mxu0 0.0
        %1390 = vmatprep.subr.mxu0 0.0
        %1391 = vmatpush1.msra.mxu0 0.0
        %1392 = vmatprep.subr.mxu0 0.0
        %1393 = vmatpush1.msra.mxu0 0.0
        %1394 = vmatprep.subr.mxu0 0.0
        %1395 = vmatpush1.msra.mxu0 0.0
        %1396 = vmatprep.subr.mxu0 0.0
        %1397 = vmatpush1.msra.mxu0 0.0
        %1398 = vmatprep.subr.mxu0 0.0
        %1399 = vmatpush1.msra.mxu0 0.0
        %1400 = vmatprep.subr.mxu0 0.0
        %1401 = vmatpush1.msra.mxu0 0.0
        %1402 = vmatprep.subr.mxu0 0.0
        %1403 = vmatpush1.msra.mxu0 0.0
        %1404 = vmatprep.subr.mxu0 0.0
        %1405 = vmatpush1.msra.mxu0 0.0
        %1406 = vmatprep.subr.mxu0 0.0
        %1407 = vmatpush1.msra.mxu0 0.0
        %1408 = vmatprep.subr.mxu0 0.0
        %1409 = vmatpush1.msra.mxu0 0.0
        %1410 = vmatprep.subr.mxu0 0.0
        %1411 = vmatpush1.msra.mxu0 0.0
        %1412 = vmatprep.subr.mxu0 0.0
        %1413 = vmatpush1.msra.mxu0 0.0
        %1414 = vmatprep.subr.mxu0 0.0
        %1415 = vmatpush1.msra.mxu0 0.0
        %1416 = vmatprep.mubr.f32.mxu0 0.0
        %1417 = vmatmul.mubr.f32.gmra.mrb[0].mxu0 %v592
        %v1418 = vpop.f32.mrb[0].mxu0
        %v1419 = vadd.f32 0.0, %v1418
        %v1420 = vpop.f32.mrb[0].mxu0
        %1421 = vdwg.mxu0
        %v1422 = vld [vmem:[%s11] sm:$0xf]
        %1423 = vmatprep.subr.mxu0 0.0
        %1424 = vmatpush1.xpose.msra.mxu0 %v592
        %1425 = vmatprep.subr.mxu0 0.0
        %1426 = vmatpush1.xpose.msra.mxu0 0.0
        %1427 = vmatprep.subr.mxu0 0.0
        %1428 = vmatpush1.xpose.msra.mxu0 0.0
        %1429 = vmatprep.subr.mxu0 0.0
        %1430 = vmatpush1.xpose.msra.mxu0 0.0
        %1431 = vmatprep.subr.mxu0 0.0
        %1432 = vmatpush1.xpose.msra.mxu0 0.0
        %1433 = vmatprep.subr.mxu0 0.0
        %1434 = vmatpush1.xpose.msra.mxu0 0.0
        %1435 = vmatprep.subr.mxu0 0.0
        %1436 = vmatpush1.xpose.msra.mxu0 0.0
        %1437 = vmatprep.subr.mxu0 0.0
        %1438 = vmatpush1.xpose.msra.mxu0 0.0
        %1439 = vmatprep.subr.mxu0 0.0
        %1440 = vmatpush1.xpose.msra.mxu0 0.0
        %1441 = vmatprep.subr.mxu0 0.0
        %1442 = vmatpush1.xpose.msra.mxu0 0.0
        %1443 = vmatprep.subr.mxu0 0.0
        %1444 = vmatpush1.xpose.msra.mxu0 0.0
        %1445 = vmatprep.subr.mxu0 0.0
        %1446 = vmatpush1.xpose.msra.mxu0 0.0
        %1447 = vmatprep.subr.mxu0 0.0
        %1448 = vmatpush1.xpose.msra.mxu0 0.0
        %1449 = vmatprep.subr.mxu0 0.0
        %1450 = vmatpush1.xpose.msra.mxu0 0.0
        %1451 = vmatprep.subr.mxu0 0.0
        %1452 = vmatpush1.xpose.msra.mxu0 0.0
        %1453 = vmatprep.subr.mxu0 0.0
        %1454 = vmatpush1.xpose.msra.mxu0 0.0
        %1455 = vmatprep.subr.mxu0 0.0
        %1456 = vmatpush1.xpose.msra.mxu0 0.0
        %1457 = vmatprep.subr.mxu0 0.0
        %1458 = vmatpush1.xpose.msra.mxu0 0.0
        %1459 = vmatprep.subr.mxu0 0.0
        %1460 = vmatpush1.xpose.msra.mxu0 0.0
        %1461 = vmatprep.subr.mxu0 0.0
        %1462 = vmatpush1.xpose.msra.mxu0 0.0
        %1463 = vmatprep.subr.mxu0 0.0
        %1464 = vmatpush1.xpose.msra.mxu0 0.0
        %1465 = vmatprep.subr.mxu0 0.0
        %1466 = vmatpush1.xpose.msra.mxu0 0.0
        %1467 = vmatprep.subr.mxu0 0.0
        %1468 = vmatpush1.xpose.msra.mxu0 0.0
        %1469 = vmatprep.subr.mxu0 0.0
        %1470 = vmatpush1.xpose.msra.mxu0 0.0
        %1471 = vmatprep.subr.mxu0 0.0
        %1472 = vmatpush1.xpose.msra.mxu0 0.0
        %1473 = vmatprep.subr.mxu0 0.0
        %1474 = vmatpush1.xpose.msra.mxu0 0.0
        %1475 = vmatprep.subr.mxu0 0.0
        %1476 = vmatpush1.xpose.msra.mxu0 0.0
        %1477 = vmatprep.subr.mxu0 0.0
        %1478 = vmatpush1.xpose.msra.mxu0 0.0
        %1479 = vmatprep.subr.mxu0 0.0
        %1480 = vmatpush1.xpose.msra.mxu0 0.0
        %1481 = vmatprep.subr.mxu0 0.0
        %1482 = vmatpush1.xpose.msra.mxu0 0.0
        %1483 = vmatprep.subr.mxu0 0.0
        %1484 = vmatpush1.xpose.msra.mxu0 0.0
        %1485 = vmatprep.subr.mxu0 0.0
        %1486 = vmatpush1.xpose.msra.mxu0 0.0
        %1487 = vmatprep.mubr.f32.mxu0 0.0
        %1488 = vmatmul.mubr.f32.gmra.mrb[0].mxu0 %v1422
        %v1489 = vpop.f32.mrb[0].mxu0
        %v1490 = vadd.f32 0.0, %v1489
        %v1491 = vpop.f32.mrb[0].mxu0
        %1492 = vdwg.mxu0
        %s1493 = smul.u32 %s43, 128
        %s1494 = sld [smem:[#allocation3 + %s1493]]
        %s1495 = scalar_lea.vmem %s574, %s1494
        %v1496 = vld [vmem:[%s1495] sm:$0x1]
        %s1497 = sadd.s32 %s1493, 1
        %s1498 = sld [smem:[#allocation3 + %s1497]]
        %s1499 = scalar_lea.vmem %s574, %s1498
        %v1500 = vld [vmem:[%s1499] sm:$0x1]
        %s1501 = sadd.s32 %s1493, 2
        %s1502 = sld [smem:[#allocation3 + %s1501]]
        %s1503 = scalar_lea.vmem %s574, %s1502
        %v1504 = vld [vmem:[%s1503] sm:$0x1]
        %v1506 = vrot.slane %v1500, 7
        %v1509 = vrot.slane %v1504, 6
        %v1511 = vsel %vm857, %v1496, %v1506
        %vm1512 = vcmask 1041408
        %v1513 = vsel %vm1512, %v1511, %v1509
        %v1514 = vld [vmem:[%s12] sm:$0xff]
        %v1515 = vld [vmem:[%s12 + $0x8] sm:$0xff]
        %v1516 = vld [vmem:[%s12 + $0x10] sm:$0xff]
        %v1517 = vld [vmem:[%s12 + $0x18] sm:$0xff]
        %v1518 = vld [vmem:[%s12 + $0x20] sm:$0xff]
        %v1519 = vld [vmem:[%s12 + $0x28] sm:$0xff]
        %v1520 = vld [vmem:[%s12 + $0x30] sm:$0xff]
        %v1521 = vld [vmem:[%s12 + $0x38] sm:$0xff]
        %v1522 = vld [vmem:[%s12 + $0x40] sm:$0xff]
        %v1523 = vld [vmem:[%s12 + $0x48] sm:$0xff]
        %v1524 = vld [vmem:[%s12 + $0x50] sm:$0xff]
        %v1525 = vld [vmem:[%s12 + $0x58] sm:$0xff]
        %v1526 = vld [vmem:[%s12 + $0x60] sm:$0xff]
        %v1527 = vld [vmem:[%s12 + $0x68] sm:$0xff]
        %v1528 = vld [vmem:[%s12 + $0x70] sm:$0xff]
        %v1529 = vld [vmem:[%s12 + $0x78] sm:$0xff]
        %1530 = vmatprep.subr.mxu0 0.0
        %1531 = vmatpush1.msra.mxu0 %v1514
        %1532 = vmatprep.subr.mxu0 0.0
        %1533 = vmatpush1.msra.mxu0 %v1515
        %1534 = vmatprep.subr.mxu0 0.0
        %1535 = vmatpush1.msra.mxu0 %v1516
        %1536 = vmatprep.subr.mxu0 0.0
        %1537 = vmatpush1.msra.mxu0 %v1517
        %1538 = vmatprep.subr.mxu0 0.0
        %1539 = vmatpush1.msra.mxu0 %v1518
        %1540 = vmatprep.subr.mxu0 0.0
        %1541 = vmatpush1.msra.mxu0 %v1519
        %1542 = vmatprep.subr.mxu0 0.0
        %1543 = vmatpush1.msra.mxu0 %v1520
        %1544 = vmatprep.subr.mxu0 0.0
        %1545 = vmatpush1.msra.mxu0 %v1521
        %1546 = vmatprep.subr.mxu0 0.0
        %1547 = vmatpush1.msra.mxu0 %v1522
        %1548 = vmatprep.subr.mxu0 0.0
        %1549 = vmatpush1.msra.mxu0 %v1523
        %1550 = vmatprep.subr.mxu0 0.0
        %1551 = vmatpush1.msra.mxu0 %v1524
        %1552 = vmatprep.subr.mxu0 0.0
        %1553 = vmatpush1.msra.mxu0 %v1525
        %1554 = vmatprep.subr.mxu0 0.0
        %1555 = vmatpush1.msra.mxu0 %v1526
        %1556 = vmatprep.subr.mxu0 0.0
        %1557 = vmatpush1.msra.mxu0 %v1527
        %1558 = vmatprep.subr.mxu0 0.0
        %1559 = vmatpush1.msra.mxu0 %v1528
        %1560 = vmatprep.subr.mxu0 0.0
        %1561 = vmatpush1.msra.mxu0 %v1529
        %1562 = vmatprep.subr.mxu0 0.0
        %1563 = vmatpush1.msra.mxu0 0.0
        %1564 = vmatprep.subr.mxu0 0.0
        %1565 = vmatpush1.msra.mxu0 0.0
        %1566 = vmatprep.subr.mxu0 0.0
        %1567 = vmatpush1.msra.mxu0 0.0
        %1568 = vmatprep.subr.mxu0 0.0
        %1569 = vmatpush1.msra.mxu0 0.0
        %1570 = vmatprep.subr.mxu0 0.0
        %1571 = vmatpush1.msra.mxu0 0.0
        %1572 = vmatprep.subr.mxu0 0.0
        %1573 = vmatpush1.msra.mxu0 0.0
        %1574 = vmatprep.subr.mxu0 0.0
        %1575 = vmatpush1.msra.mxu0 0.0
        %1576 = vmatprep.subr.mxu0 0.0
        %1577 = vmatpush1.msra.mxu0 0.0
        %1578 = vmatprep.subr.mxu0 0.0
        %1579 = vmatpush1.msra.mxu0 0.0
        %1580 = vmatprep.subr.mxu0 0.0
        %1581 = vmatpush1.msra.mxu0 0.0
        %1582 = vmatprep.subr.mxu0 0.0
        %1583 = vmatpush1.msra.mxu0 0.0
        %1584 = vmatprep.subr.mxu0 0.0
        %1585 = vmatpush1.msra.mxu0 0.0
        %1586 = vmatprep.subr.mxu0 0.0
        %1587 = vmatpush1.msra.mxu0 0.0
        %1588 = vmatprep.subr.mxu0 0.0
        %1589 = vmatpush1.msra.mxu0 0.0
        %1590 = vmatprep.subr.mxu0 0.0
        %1591 = vmatpush1.msra.mxu0 0.0
        %1592 = vmatprep.subr.mxu0 0.0
        %1593 = vmatpush1.msra.mxu0 0.0
        %1594 = vmatprep.mubr.f32.mxu0 0.0
        %1595 = vmatmul.mubr.f32.gmra.mrb[0].mxu0 %v1513
        %v1596 = vpop.f32.mrb[0].mxu0
        %v1597 = vadd.f32 0.0, %v1596
        %v1598 = vpop.f32.mrb[0].mxu0
        %1599 = vdwg.mxu0
        %v1601 = vrot.slane %v1597, 5
        %v1603 = vrot.slane %v1597, 2
        %v1605 = vrot.slane %v1597, 7
        %vm1607 = vcmask 1042432
        %v1608 = vsel %vm1607, %v1597, %v1601
        %vm1609 = vcmask 1045504
        %v1610 = vsel %vm1609, %v1608, %v1603
        %v1611 = vsel %vm857, %v1603, %v1605
        %v1612 = vadd.s32 %v913, 8
        %v1613 = vmul.u32 %v915, 3
        %vm1614 = vcmp.ge.s32.totalorder %v913, %v1613
        %vm1615 = vcmp.ge.s32.totalorder %v1612, %v1613
        %v1616 = vadd.s32 %v915, 1
        %v1617 = vmul.u32 %v1616, 3
        %vm1618 = vcmp.lt.s32.totalorder %v913, %v1617
        %vm1619 = vcmp.lt.s32.totalorder %v1612, %v1617
        %vm1620 = vmand %vm1614, %vm1618
        %vm1621 = vmand %vm1615, %vm1619
        %v1622 = vsel %vm1620, 1, 0
        %v1623 = vsel %vm1621, 1, 0
        %v1624 = vcvt.s32.f32 %v1622
        %v1625 = vcvt.s32.f32 %v1623
        %1627 = vset.pattern.permute.xlu0 0
        %1628 = vperm.xlu0 %1627, %v1610
        %v1629 = vpop.permute.xlu0 %1628
        %1632 = vset.pattern.permute.xlu0 0
        %1633 = vperm.xlu0 %1632, %v1611
        %v1634 = vpop.permute.xlu0 %1633
        %v1636 = vmul.f32 %v1624, %v1629
        %v1637 = vmul.f32 %v1625, %v1634
        %vm1638 = vcmask 97280
        %v1640 = vsel %vm1638, %v595, 0
        %v1643 = vsel %vm928, %v1637, 0
        %1645 = vmatprep.subr.mxu0 0.0
        %1646 = vmatpush1.msra.mxu0 %v1636
        %1647 = vmatprep.subr.mxu0 0.0
        %1648 = vmatpush1.msra.mxu0 %v1643
        %1649 = vmatprep.subr.mxu0 0.0
        %1650 = vmatpush1.msra.mxu0 0.0
        %1651 = vmatprep.subr.mxu0 0.0
        %1652 = vmatpush1.msra.mxu0 0.0
        %1653 = vmatprep.subr.mxu0 0.0
        %1654 = vmatpush1.msra.mxu0 0.0
        %1655 = vmatprep.subr.mxu0 0.0
        %1656 = vmatpush1.msra.mxu0 0.0
        %1657 = vmatprep.subr.mxu0 0.0
        %1658 = vmatpush1.msra.mxu0 0.0
        %1659 = vmatprep.subr.mxu0 0.0
        %1660 = vmatpush1.msra.mxu0 0.0
        %1661 = vmatprep.subr.mxu0 0.0
        %1662 = vmatpush1.msra.mxu0 0.0
        %1663 = vmatprep.subr.mxu0 0.0
        %1664 = vmatpush1.msra.mxu0 0.0
        %1665 = vmatprep.subr.mxu0 0.0
        %1666 = vmatpush1.msra.mxu0 0.0
        %1667 = vmatprep.subr.mxu0 0.0
        %1668 = vmatpush1.msra.mxu0 0.0
        %1669 = vmatprep.subr.mxu0 0.0
        %1670 = vmatpush1.msra.mxu0 0.0
        %1671 = vmatprep.subr.mxu0 0.0
        %1672 = vmatpush1.msra.mxu0 0.0
        %1673 = vmatprep.subr.mxu0 0.0
        %1674 = vmatpush1.msra.mxu0 0.0
        %1675 = vmatprep.subr.mxu0 0.0
        %1676 = vmatpush1.msra.mxu0 0.0
        %1677 = vmatprep.subr.mxu0 0.0
        %1678 = vmatpush1.msra.mxu0 0.0
        %1679 = vmatprep.subr.mxu0 0.0
        %1680 = vmatpush1.msra.mxu0 0.0
        %1681 = vmatprep.subr.mxu0 0.0
        %1682 = vmatpush1.msra.mxu0 0.0
        %1683 = vmatprep.subr.mxu0 0.0
        %1684 = vmatpush1.msra.mxu0 0.0
        %1685 = vmatprep.subr.mxu0 0.0
        %1686 = vmatpush1.msra.mxu0 0.0
        %1687 = vmatprep.subr.mxu0 0.0
        %1688 = vmatpush1.msra.mxu0 0.0
        %1689 = vmatprep.subr.mxu0 0.0
        %1690 = vmatpush1.msra.mxu0 0.0
        %1691 = vmatprep.subr.mxu0 0.0
        %1692 = vmatpush1.msra.mxu0 0.0
        %1693 = vmatprep.subr.mxu0 0.0
        %1694 = vmatpush1.msra.mxu0 0.0
        %1695 = vmatprep.subr.mxu0 0.0
        %1696 = vmatpush1.msra.mxu0 0.0
        %1697 = vmatprep.subr.mxu0 0.0
        %1698 = vmatpush1.msra.mxu0 0.0
        %1699 = vmatprep.subr.mxu0 0.0
        %1700 = vmatpush1.msra.mxu0 0.0
        %1701 = vmatprep.subr.mxu0 0.0
        %1702 = vmatpush1.msra.mxu0 0.0
        %1703 = vmatprep.subr.mxu0 0.0
        %1704 = vmatpush1.msra.mxu0 0.0
        %1705 = vmatprep.subr.mxu0 0.0
        %1706 = vmatpush1.msra.mxu0 0.0
        %1707 = vmatprep.subr.mxu0 0.0
        %1708 = vmatpush1.msra.mxu0 0.0
        %1709 = vmatprep.mubr.f32.mxu0 0.0
        %1710 = vmatmul.mubr.f32.gmra.mrb[0].mxu0 %v1640
        %v1711 = vpop.f32.mrb[0].mxu0
        %v1712 = vadd.f32 0.0, %v1711
        %v1713 = vpop.f32.mrb[0].mxu0
        %1714 = vdwg.mxu0
        %1716 = vset.pattern.permute.xlu0 0
        %1717 = vperm.xlu0 %1716, %v1419
        %v1718 = vpop.permute.xlu0 %1717
        %v1720 = vlaneseq
        %v1721 = vshrl.u32 %v1720, 7
        %v1722 = vsub.s32 0, %v1721
        %v1723 = vrot.slane %v1490, %v1722
        %v1724 = vadd.f32 %v1718, %v1723
        %v1725 = vadd.f32 %v1724, %v1712
        %vm1726 = vcmp.gt.f32.partialorder %v1725, 0.0
        %v1727 = vmul.f32 %v1725, 0.2
        %v1728 = vsel %vm1726, %v1725, %v1727
        %vm1729 = vcmp.gt.f32.partialorder %v594, 0.0
        %v1730 = vsel %vm1729, %v1728, -9e+15
        %vm1731 = vcmask 27648
        %v1732 = vsel %vm1731, %v1730, -inf
        %1733 = vmax.xlane.f32.xlu0 %v1732
        %v1734 = vpop.xlane.xlu0 %1733
        %v1735 = vsub.f32 %v1730, %v1734
        %v1736 = vmul.f32 %v1735, 1.442695
        %v1737 = vpow.pop %v1736
        %v1738 = vsel %vm1731, %v1737, 0.0
        %1739 = vadd.xlane.f32.xlu0 %v1738
        %v1740 = vpop.xlane.xlu0 %1739
        %v1741 = vrcp.pop %v1740
        %v1742 = vmul.f32 %v1737, %v1741
        %1743 = vset.pattern.permute.xlu0 1
        %1744 = vperm.xlu0 %1743, %v1610
        %v1745 = vpop.permute.xlu0 %1744
        %1747 = vset.pattern.permute.xlu0 1
        %1748 = vperm.xlu0 %1747, %v1611
        %v1749 = vpop.permute.xlu0 %1748
        %v1751 = vmul.f32 %v1624, %v1745
        %v1752 = vmul.f32 %v1625, %v1749
        %v1754 = vsel %vm928, %v1752, 0
        %1756 = vmatprep.subr.mxu0 0.0
        %1757 = vmatpush1.msra.mxu0 %v1751
        %1758 = vmatprep.subr.mxu0 0.0
        %1759 = vmatpush1.msra.mxu0 %v1754
        %1760 = vmatprep.subr.mxu0 0.0
        %1761 = vmatpush1.msra.mxu0 0.0
        %1762 = vmatprep.subr.mxu0 0.0
        %1763 = vmatpush1.msra.mxu0 0.0
        %1764 = vmatprep.subr.mxu0 0.0
        %1765 = vmatpush1.msra.mxu0 0.0
        %1766 = vmatprep.subr.mxu0 0.0
        %1767 = vmatpush1.msra.mxu0 0.0
        %1768 = vmatprep.subr.mxu0 0.0
        %1769 = vmatpush1.msra.mxu0 0.0
        %1770 = vmatprep.subr.mxu0 0.0
        %1771 = vmatpush1.msra.mxu0 0.0
        %1772 = vmatprep.subr.mxu0 0.0
        %1773 = vmatpush1.msra.mxu0 0.0
        %1774 = vmatprep.subr.mxu0 0.0
        %1775 = vmatpush1.msra.mxu0 0.0
        %1776 = vmatprep.subr.mxu0 0.0
        %1777 = vmatpush1.msra.mxu0 0.0
        %1778 = vmatprep.subr.mxu0 0.0
        %1779 = vmatpush1.msra.mxu0 0.0
        %1780 = vmatprep.subr.mxu0 0.0
        %1781 = vmatpush1.msra.mxu0 0.0
        %1782 = vmatprep.subr.mxu0 0.0
        %1783 = vmatpush1.msra.mxu0 0.0
        %1784 = vmatprep.subr.mxu0 0.0
        %1785 = vmatpush1.msra.mxu0 0.0
        %1786 = vmatprep.subr.mxu0 0.0
        %1787 = vmatpush1.msra.mxu0 0.0
        %1788 = vmatprep.subr.mxu0 0.0
        %1789 = vmatpush1.msra.mxu0 0.0
        %1790 = vmatprep.subr.mxu0 0.0
        %1791 = vmatpush1.msra.mxu0 0.0
        %1792 = vmatprep.subr.mxu0 0.0
        %1793 = vmatpush1.msra.mxu0 0.0
        %1794 = vmatprep.subr.mxu0 0.0
        %1795 = vmatpush1.msra.mxu0 0.0
        %1796 = vmatprep.subr.mxu0 0.0
        %1797 = vmatpush1.msra.mxu0 0.0
        %1798 = vmatprep.subr.mxu0 0.0
        %1799 = vmatpush1.msra.mxu0 0.0
        %1800 = vmatprep.subr.mxu0 0.0
        %1801 = vmatpush1.msra.mxu0 0.0
        %1802 = vmatprep.subr.mxu0 0.0
        %1803 = vmatpush1.msra.mxu0 0.0
        %1804 = vmatprep.subr.mxu0 0.0
        %1805 = vmatpush1.msra.mxu0 0.0
        %1806 = vmatprep.subr.mxu0 0.0
        %1807 = vmatpush1.msra.mxu0 0.0
        %1808 = vmatprep.subr.mxu0 0.0
        %1809 = vmatpush1.msra.mxu0 0.0
        %1810 = vmatprep.subr.mxu0 0.0
        %1811 = vmatpush1.msra.mxu0 0.0
        %1812 = vmatprep.subr.mxu0 0.0
        %1813 = vmatpush1.msra.mxu0 0.0
        %1814 = vmatprep.subr.mxu0 0.0
        %1815 = vmatpush1.msra.mxu0 0.0
        %1816 = vmatprep.subr.mxu0 0.0
        %1817 = vmatpush1.msra.mxu0 0.0
        %1818 = vmatprep.subr.mxu0 0.0
        %1819 = vmatpush1.msra.mxu0 0.0
        %1820 = vmatprep.mubr.f32.mxu0 0.0
        %1821 = vmatmul.mubr.f32.gmra.mrb[0].mxu0 %v1640
        %v1822 = vpop.f32.mrb[0].mxu0
        %v1823 = vadd.f32 0.0, %v1822
        %v1824 = vpop.f32.mrb[0].mxu0
        %1825 = vdwg.mxu0
        %1826 = vset.pattern.permute.xlu0 1
        %1827 = vperm.xlu0 %1826, %v1419
        %v1828 = vpop.permute.xlu0 %1827
        %v1830 = vlaneseq
        %v1831 = vshrl.u32 %v1830, 7
        %v1832 = vsub.s32 1, %v1831
        %v1833 = vrot.slane %v1490, %v1832
        %v1834 = vadd.f32 %v1828, %v1833
        %v1835 = vadd.f32 %v1834, %v1823
        %vm1836 = vcmp.gt.f32.partialorder %v1835, 0.0
        %v1837 = vmul.f32 %v1835, 0.2
        %v1838 = vsel %vm1836, %v1835, %v1837
        %v1839 = vsel %vm1729, %v1838, -9e+15
        %v1840 = vsel %vm1731, %v1839, -inf
        %1841 = vmax.xlane.f32.xlu0 %v1840
        %v1842 = vpop.xlane.xlu0 %1841
        %v1843 = vsub.f32 %v1839, %v1842
        %v1844 = vmul.f32 %v1843, 1.442695
        %v1845 = vpow.pop %v1844
        %v1846 = vsel %vm1731, %v1845, 0.0
        %1847 = vadd.xlane.f32.xlu0 %v1846
        %v1848 = vpop.xlane.xlu0 %1847
        %v1849 = vrcp.pop %v1848
        %v1850 = vmul.f32 %v1845, %v1849
        %1852 = vrot.lane.b32.xlu0 %v1333, 112
        %v1853 = vpop.permute.xlu0 %1852
        %v1855 = vsel %vm924, %v1850, 0
        %v1857 = vsel %vm928, %v1853, 0
        %1859 = vmatprep.subr.mxu0 0.0
        %1860 = vmatpush1.msra.mxu0 %v1857
        %1861 = vmatprep.subr.mxu0 0.0
        %1862 = vmatpush1.msra.mxu0 0.0
        %1863 = vmatprep.subr.mxu0 0.0
        %1864 = vmatpush1.msra.mxu0 0.0
        %1865 = vmatprep.subr.mxu0 0.0
        %1866 = vmatpush1.msra.mxu0 0.0
        %1867 = vmatprep.subr.mxu0 0.0
        %1868 = vmatpush1.msra.mxu0 0.0
        %1869 = vmatprep.subr.mxu0 0.0
        %1870 = vmatpush1.msra.mxu0 0.0
        %1871 = vmatprep.subr.mxu0 0.0
        %1872 = vmatpush1.msra.mxu0 0.0
        %1873 = vmatprep.subr.mxu0 0.0
        %1874 = vmatpush1.msra.mxu0 0.0
        %1875 = vmatprep.subr.mxu0 0.0
        %1876 = vmatpush1.msra.mxu0 0.0
        %1877 = vmatprep.subr.mxu0 0.0
        %1878 = vmatpush1.msra.mxu0 0.0
        %1879 = vmatprep.subr.mxu0 0.0
        %1880 = vmatpush1.msra.mxu0 0.0
        %1881 = vmatprep.subr.mxu0 0.0
        %1882 = vmatpush1.msra.mxu0 0.0
        %1883 = vmatprep.subr.mxu0 0.0
        %1884 = vmatpush1.msra.mxu0 0.0
        %1885 = vmatprep.subr.mxu0 0.0
        %1886 = vmatpush1.msra.mxu0 0.0
        %1887 = vmatprep.subr.mxu0 0.0
        %1888 = vmatpush1.msra.mxu0 0.0
        %1889 = vmatprep.subr.mxu0 0.0
        %1890 = vmatpush1.msra.mxu0 0.0
        %1891 = vmatprep.subr.mxu0 0.0
        %1892 = vmatpush1.msra.mxu0 0.0
        %1893 = vmatprep.subr.mxu0 0.0
        %1894 = vmatpush1.msra.mxu0 0.0
        %1895 = vmatprep.subr.mxu0 0.0
        %1896 = vmatpush1.msra.mxu0 0.0
        %1897 = vmatprep.subr.mxu0 0.0
        %1898 = vmatpush1.msra.mxu0 0.0
        %1899 = vmatprep.subr.mxu0 0.0
        %1900 = vmatpush1.msra.mxu0 0.0
        %1901 = vmatprep.subr.mxu0 0.0
        %1902 = vmatpush1.msra.mxu0 0.0
        %1903 = vmatprep.subr.mxu0 0.0
        %1904 = vmatpush1.msra.mxu0 0.0
        %1905 = vmatprep.subr.mxu0 0.0
        %1906 = vmatpush1.msra.mxu0 0.0
        %1907 = vmatprep.subr.mxu0 0.0
        %1908 = vmatpush1.msra.mxu0 0.0
        %1909 = vmatprep.subr.mxu0 0.0
        %1910 = vmatpush1.msra.mxu0 0.0
        %1911 = vmatprep.subr.mxu0 0.0
        %1912 = vmatpush1.msra.mxu0 0.0
        %1913 = vmatprep.subr.mxu0 0.0
        %1914 = vmatpush1.msra.mxu0 0.0
        %1915 = vmatprep.subr.mxu0 0.0
        %1916 = vmatpush1.msra.mxu0 0.0
        %1917 = vmatprep.subr.mxu0 0.0
        %1918 = vmatpush1.msra.mxu0 0.0
        %1919 = vmatprep.subr.mxu0 0.0
        %1920 = vmatpush1.msra.mxu0 0.0
        %1921 = vmatprep.subr.mxu0 0.0
        %1922 = vmatpush1.msra.mxu0 0.0
        %1923 = vmatprep.mubr.f32.mxu0 0.0
        %1924 = vmatmul.mubr.f32.gmra.mrb[0].mxu0 %v1855
        %v1925 = vpop.f32.mrb[0].mxu0
        %v1926 = vadd.f32 0.0, %v1925
        %v1927 = vpop.f32.mrb[0].mxu0
        %1928 = vdwg.mxu0
        %1929 = vset.pattern.permute.xlu0 2
        %1930 = vperm.xlu0 %1929, %v1610
        %v1931 = vpop.permute.xlu0 %1930
        %1933 = vset.pattern.permute.xlu0 2
        %1934 = vperm.xlu0 %1933, %v1611
        %v1935 = vpop.permute.xlu0 %1934
        %v1937 = vmul.f32 %v1624, %v1931
        %v1938 = vmul.f32 %v1625, %v1935
        %v1940 = vsel %vm928, %v1938, 0
        %1942 = vmatprep.subr.mxu0 0.0
        %1943 = vmatpush1.msra.mxu0 %v1937
        %1944 = vmatprep.subr.mxu0 0.0
        %1945 = vmatpush1.msra.mxu0 %v1940
        %1946 = vmatprep.subr.mxu0 0.0
        %1947 = vmatpush1.msra.mxu0 0.0
        %1948 = vmatprep.subr.mxu0 0.0
        %1949 = vmatpush1.msra.mxu0 0.0
        %1950 = vmatprep.subr.mxu0 0.0
        %1951 = vmatpush1.msra.mxu0 0.0
        %1952 = vmatprep.subr.mxu0 0.0
        %1953 = vmatpush1.msra.mxu0 0.0
        %1954 = vmatprep.subr.mxu0 0.0
        %1955 = vmatpush1.msra.mxu0 0.0
        %1956 = vmatprep.subr.mxu0 0.0
        %1957 = vmatpush1.msra.mxu0 0.0
        %1958 = vmatprep.subr.mxu0 0.0
        %1959 = vmatpush1.msra.mxu0 0.0
        %1960 = vmatprep.subr.mxu0 0.0
        %1961 = vmatpush1.msra.mxu0 0.0
        %1962 = vmatprep.subr.mxu0 0.0
        %1963 = vmatpush1.msra.mxu0 0.0
        %1964 = vmatprep.subr.mxu0 0.0
        %1965 = vmatpush1.msra.mxu0 0.0
        %1966 = vmatprep.subr.mxu0 0.0
        %1967 = vmatpush1.msra.mxu0 0.0
        %1968 = vmatprep.subr.mxu0 0.0
        %1969 = vmatpush1.msra.mxu0 0.0
        %1970 = vmatprep.subr.mxu0 0.0
        %1971 = vmatpush1.msra.mxu0 0.0
        %1972 = vmatprep.subr.mxu0 0.0
        %1973 = vmatpush1.msra.mxu0 0.0
        %1974 = vmatprep.subr.mxu0 0.0
        %1975 = vmatpush1.msra.mxu0 0.0
        %1976 = vmatprep.subr.mxu0 0.0
        %1977 = vmatpush1.msra.mxu0 0.0
        %1978 = vmatprep.subr.mxu0 0.0
        %1979 = vmatpush1.msra.mxu0 0.0
        %1980 = vmatprep.subr.mxu0 0.0
        %1981 = vmatpush1.msra.mxu0 0.0
        %1982 = vmatprep.subr.mxu0 0.0
        %1983 = vmatpush1.msra.mxu0 0.0
        %1984 = vmatprep.subr.mxu0 0.0
        %1985 = vmatpush1.msra.mxu0 0.0
        %1986 = vmatprep.subr.mxu0 0.0
        %1987 = vmatpush1.msra.mxu0 0.0
        %1988 = vmatprep.subr.mxu0 0.0
        %1989 = vmatpush1.msra.mxu0 0.0
        %1990 = vmatprep.subr.mxu0 0.0
        %1991 = vmatpush1.msra.mxu0 0.0
        %1992 = vmatprep.subr.mxu0 0.0
        %1993 = vmatpush1.msra.mxu0 0.0
        %1994 = vmatprep.subr.mxu0 0.0
        %1995 = vmatpush1.msra.mxu0 0.0
        %1996 = vmatprep.subr.mxu0 0.0
        %1997 = vmatpush1.msra.mxu0 0.0
        %1998 = vmatprep.subr.mxu0 0.0
        %1999 = vmatpush1.msra.mxu0 0.0
        %2000 = vmatprep.subr.mxu0 0.0
        %2001 = vmatpush1.msra.mxu0 0.0
        %2002 = vmatprep.subr.mxu0 0.0
        %2003 = vmatpush1.msra.mxu0 0.0
        %2004 = vmatprep.subr.mxu0 0.0
        %2005 = vmatpush1.msra.mxu0 0.0
        %2006 = vmatprep.mubr.f32.mxu0 0.0
        %2007 = vmatmul.mubr.f32.gmra.mrb[0].mxu0 %v1640
        %v2008 = vpop.f32.mrb[0].mxu0
        %v2009 = vadd.f32 0.0, %v2008
        %v2010 = vpop.f32.mrb[0].mxu0
        %2011 = vdwg.mxu0
        %2012 = vset.pattern.permute.xlu0 2
        %2013 = vperm.xlu0 %2012, %v1419
        %v2014 = vpop.permute.xlu0 %2013
        %v2016 = vlaneseq
        %v2017 = vshrl.u32 %v2016, 7
        %v2018 = vsub.s32 2, %v2017
        %v2019 = vrot.slane %v1490, %v2018
        %v2020 = vadd.f32 %v2014, %v2019
        %v2021 = vadd.f32 %v2020, %v2009
        %vm2022 = vcmp.gt.f32.partialorder %v2021, 0.0
        %v2023 = vmul.f32 %v2021, 0.2
        %v2024 = vsel %vm2022, %v2021, %v2023
        %v2025 = vsel %vm1729, %v2024, -9e+15
        %v2026 = vsel %vm1731, %v2025, -inf
        %2027 = vmax.xlane.f32.xlu0 %v2026
        %v2028 = vpop.xlane.xlu0 %2027
        %v2029 = vsub.f32 %v2025, %v2028
        %v2030 = vmul.f32 %v2029, 1.442695
        %v2031 = vpow.pop %v2030
        %v2032 = vsel %vm1731, %v2031, 0.0
        %2033 = vadd.xlane.f32.xlu0 %v2032
        %v2034 = vpop.xlane.xlu0 %2033
        %v2035 = vrcp.pop %v2034
        %v2036 = vmul.f32 %v2031, %v2035
        %2037 = vrot.lane.b32.xlu0 %v1333, 96
        %v2038 = vpop.permute.xlu0 %2037
        %v2040 = vsel %vm924, %v2036, 0
        %v2042 = vsel %vm928, %v2038, 0
        %2044 = vmatprep.subr.mxu0 0.0
        %2045 = vmatpush1.msra.mxu0 %v2042
        %2046 = vmatprep.subr.mxu0 0.0
        %2047 = vmatpush1.msra.mxu0 0.0
        %2048 = vmatprep.subr.mxu0 0.0
        %2049 = vmatpush1.msra.mxu0 0.0
        %2050 = vmatprep.subr.mxu0 0.0
        %2051 = vmatpush1.msra.mxu0 0.0
        %2052 = vmatprep.subr.mxu0 0.0
        %2053 = vmatpush1.msra.mxu0 0.0
        %2054 = vmatprep.subr.mxu0 0.0
        %2055 = vmatpush1.msra.mxu0 0.0
        %2056 = vmatprep.subr.mxu0 0.0
        %2057 = vmatpush1.msra.mxu0 0.0
        %2058 = vmatprep.subr.mxu0 0.0
        %2059 = vmatpush1.msra.mxu0 0.0
        %2060 = vmatprep.subr.mxu0 0.0
        %2061 = vmatpush1.msra.mxu0 0.0
        %2062 = vmatprep.subr.mxu0 0.0
        %2063 = vmatpush1.msra.mxu0 0.0
        %2064 = vmatprep.subr.mxu0 0.0
        %2065 = vmatpush1.msra.mxu0 0.0
        %2066 = vmatprep.subr.mxu0 0.0
        %2067 = vmatpush1.msra.mxu0 0.0
        %2068 = vmatprep.subr.mxu0 0.0
        %2069 = vmatpush1.msra.mxu0 0.0
        %2070 = vmatprep.subr.mxu0 0.0
        %2071 = vmatpush1.msra.mxu0 0.0
        %2072 = vmatprep.subr.mxu0 0.0
        %2073 = vmatpush1.msra.mxu0 0.0
        %2074 = vmatprep.subr.mxu0 0.0
        %2075 = vmatpush1.msra.mxu0 0.0
        %2076 = vmatprep.subr.mxu0 0.0
        %2077 = vmatpush1.msra.mxu0 0.0
        %2078 = vmatprep.subr.mxu0 0.0
        %2079 = vmatpush1.msra.mxu0 0.0
        %2080 = vmatprep.subr.mxu0 0.0
        %2081 = vmatpush1.msra.mxu0 0.0
        %2082 = vmatprep.subr.mxu0 0.0
        %2083 = vmatpush1.msra.mxu0 0.0
        %2084 = vmatprep.subr.mxu0 0.0
        %2085 = vmatpush1.msra.mxu0 0.0
        %2086 = vmatprep.subr.mxu0 0.0
        %2087 = vmatpush1.msra.mxu0 0.0
        %2088 = vmatprep.subr.mxu0 0.0
        %2089 = vmatpush1.msra.mxu0 0.0
        %2090 = vmatprep.subr.mxu0 0.0
        %2091 = vmatpush1.msra.mxu0 0.0
        %2092 = vmatprep.subr.mxu0 0.0
        %2093 = vmatpush1.msra.mxu0 0.0
        %2094 = vmatprep.subr.mxu0 0.0
        %2095 = vmatpush1.msra.mxu0 0.0
        %2096 = vmatprep.subr.mxu0 0.0
        %2097 = vmatpush1.msra.mxu0 0.0
        %2098 = vmatprep.subr.mxu0 0.0
        %2099 = vmatpush1.msra.mxu0 0.0
        %2100 = vmatprep.subr.mxu0 0.0
        %2101 = vmatpush1.msra.mxu0 0.0
        %2102 = vmatprep.subr.mxu0 0.0
        %2103 = vmatpush1.msra.mxu0 0.0
        %2104 = vmatprep.subr.mxu0 0.0
        %2105 = vmatpush1.msra.mxu0 0.0
        %2106 = vmatprep.subr.mxu0 0.0
        %2107 = vmatpush1.msra.mxu0 0.0
        %2108 = vmatprep.mubr.f32.mxu0 0.0
        %2109 = vmatmul.mubr.f32.gmra.mrb[0].mxu0 %v2040
        %v2110 = vpop.f32.mrb[0].mxu0
        %v2111 = vadd.f32 0.0, %v2110
        %v2112 = vpop.f32.mrb[0].mxu0
        %2113 = vdwg.mxu0
        %2114 = vset.pattern.permute.xlu0 3
        %2115 = vperm.xlu0 %2114, %v1610
        %v2116 = vpop.permute.xlu0 %2115
        %2118 = vset.pattern.permute.xlu0 3
        %2119 = vperm.xlu0 %2118, %v1611
        %v2120 = vpop.permute.xlu0 %2119
        %v2122 = vmul.f32 %v1624, %v2116
        %v2123 = vmul.f32 %v1625, %v2120
        %v2125 = vsel %vm928, %v2123, 0
        %2127 = vmatprep.subr.mxu0 0.0
        %2128 = vmatpush1.msra.mxu0 %v2122
        %2129 = vmatprep.subr.mxu0 0.0
        %2130 = vmatpush1.msra.mxu0 %v2125
        %2131 = vmatprep.subr.mxu0 0.0
        %2132 = vmatpush1.msra.mxu0 0.0
        %2133 = vmatprep.subr.mxu0 0.0
        %2134 = vmatpush1.msra.mxu0 0.0
        %2135 = vmatprep.subr.mxu0 0.0
        %2136 = vmatpush1.msra.mxu0 0.0
        %2137 = vmatprep.subr.mxu0 0.0
        %2138 = vmatpush1.msra.mxu0 0.0
        %2139 = vmatprep.subr.mxu0 0.0
        %2140 = vmatpush1.msra.mxu0 0.0
        %2141 = vmatprep.subr.mxu0 0.0
        %2142 = vmatpush1.msra.mxu0 0.0
        %2143 = vmatprep.subr.mxu0 0.0
        %2144 = vmatpush1.msra.mxu0 0.0
        %2145 = vmatprep.subr.mxu0 0.0
        %2146 = vmatpush1.msra.mxu0 0.0
        %2147 = vmatprep.subr.mxu0 0.0
        %2148 = vmatpush1.msra.mxu0 0.0
        %2149 = vmatprep.subr.mxu0 0.0
        %2150 = vmatpush1.msra.mxu0 0.0
        %2151 = vmatprep.subr.mxu0 0.0
        %2152 = vmatpush1.msra.mxu0 0.0
        %2153 = vmatprep.subr.mxu0 0.0
        %2154 = vmatpush1.msra.mxu0 0.0
        %2155 = vmatprep.subr.mxu0 0.0
        %2156 = vmatpush1.msra.mxu0 0.0
        %2157 = vmatprep.subr.mxu0 0.0
        %2158 = vmatpush1.msra.mxu0 0.0
        %2159 = vmatprep.subr.mxu0 0.0
        %2160 = vmatpush1.msra.mxu0 0.0
        %2161 = vmatprep.subr.mxu0 0.0
        %2162 = vmatpush1.msra.mxu0 0.0
        %2163 = vmatprep.subr.mxu0 0.0
        %2164 = vmatpush1.msra.mxu0 0.0
        %2165 = vmatprep.subr.mxu0 0.0
        %2166 = vmatpush1.msra.mxu0 0.0
        %2167 = vmatprep.subr.mxu0 0.0
        %2168 = vmatpush1.msra.mxu0 0.0
        %2169 = vmatprep.subr.mxu0 0.0
        %2170 = vmatpush1.msra.mxu0 0.0
        %2171 = vmatprep.subr.mxu0 0.0
        %2172 = vmatpush1.msra.mxu0 0.0
        %2173 = vmatprep.subr.mxu0 0.0
        %2174 = vmatpush1.msra.mxu0 0.0
        %2175 = vmatprep.subr.mxu0 0.0
        %2176 = vmatpush1.msra.mxu0 0.0
        %2177 = vmatprep.subr.mxu0 0.0
        %2178 = vmatpush1.msra.mxu0 0.0
        %2179 = vmatprep.subr.mxu0 0.0
        %2180 = vmatpush1.msra.mxu0 0.0
        %2181 = vmatprep.subr.mxu0 0.0
        %2182 = vmatpush1.msra.mxu0 0.0
        %2183 = vmatprep.subr.mxu0 0.0
        %2184 = vmatpush1.msra.mxu0 0.0
        %2185 = vmatprep.subr.mxu0 0.0
        %2186 = vmatpush1.msra.mxu0 0.0
        %2187 = vmatprep.subr.mxu0 0.0
        %2188 = vmatpush1.msra.mxu0 0.0
        %2189 = vmatprep.subr.mxu0 0.0
        %2190 = vmatpush1.msra.mxu0 0.0
        %2191 = vmatprep.mubr.f32.mxu0 0.0
        %2192 = vmatmul.mubr.f32.gmra.mrb[0].mxu0 %v1640
        %v2193 = vpop.f32.mrb[0].mxu0
        %v2194 = vadd.f32 0.0, %v2193
        %v2195 = vpop.f32.mrb[0].mxu0
        %2196 = vdwg.mxu0
        %2197 = vset.pattern.permute.xlu0 3
        %2198 = vperm.xlu0 %2197, %v1419
        %v2199 = vpop.permute.xlu0 %2198
        %v2201 = vlaneseq
        %v2202 = vshrl.u32 %v2201, 7
        %v2203 = vsub.s32 3, %v2202
        %v2204 = vrot.slane %v1490, %v2203
        %v2205 = vadd.f32 %v2199, %v2204
        %v2206 = vadd.f32 %v2205, %v2194
        %vm2207 = vcmp.gt.f32.partialorder %v2206, 0.0
        %v2208 = vmul.f32 %v2206, 0.2
        %v2209 = vsel %vm2207, %v2206, %v2208
        %v2210 = vsel %vm1729, %v2209, -9e+15
        %v2211 = vsel %vm1731, %v2210, -inf
        %2212 = vmax.xlane.f32.xlu0 %v2211
        %v2213 = vpop.xlane.xlu0 %2212
        %v2214 = vsub.f32 %v2210, %v2213
        %v2215 = vmul.f32 %v2214, 1.442695
        %v2216 = vpow.pop %v2215
        %v2217 = vsel %vm1731, %v2216, 0.0
        %2218 = vadd.xlane.f32.xlu0 %v2217
        %v2219 = vpop.xlane.xlu0 %2218
        %v2220 = vrcp.pop %v2219
        %v2221 = vmul.f32 %v2216, %v2220
        %2222 = vrot.lane.b32.xlu0 %v1333, 80
        %v2223 = vpop.permute.xlu0 %2222
        %v2225 = vsel %vm924, %v2221, 0
        %v2227 = vsel %vm928, %v2223, 0
        %2229 = vmatprep.subr.mxu0 0.0
        %2230 = vmatpush1.msra.mxu0 %v2227
        %2231 = vmatprep.subr.mxu0 0.0
        %2232 = vmatpush1.msra.mxu0 0.0
        %2233 = vmatprep.subr.mxu0 0.0
        %2234 = vmatpush1.msra.mxu0 0.0
        %2235 = vmatprep.subr.mxu0 0.0
        %2236 = vmatpush1.msra.mxu0 0.0
        %2237 = vmatprep.subr.mxu0 0.0
        %2238 = vmatpush1.msra.mxu0 0.0
        %2239 = vmatprep.subr.mxu0 0.0
        %2240 = vmatpush1.msra.mxu0 0.0
        %2241 = vmatprep.subr.mxu0 0.0
        %2242 = vmatpush1.msra.mxu0 0.0
        %2243 = vmatprep.subr.mxu0 0.0
        %2244 = vmatpush1.msra.mxu0 0.0
        %2245 = vmatprep.subr.mxu0 0.0
        %2246 = vmatpush1.msra.mxu0 0.0
        %2247 = vmatprep.subr.mxu0 0.0
        %2248 = vmatpush1.msra.mxu0 0.0
        %2249 = vmatprep.subr.mxu0 0.0
        %2250 = vmatpush1.msra.mxu0 0.0
        %2251 = vmatprep.subr.mxu0 0.0
        %2252 = vmatpush1.msra.mxu0 0.0
        %2253 = vmatprep.subr.mxu0 0.0
        %2254 = vmatpush1.msra.mxu0 0.0
        %2255 = vmatprep.subr.mxu0 0.0
        %2256 = vmatpush1.msra.mxu0 0.0
        %2257 = vmatprep.subr.mxu0 0.0
        %2258 = vmatpush1.msra.mxu0 0.0
        %2259 = vmatprep.subr.mxu0 0.0
        %2260 = vmatpush1.msra.mxu0 0.0
        %2261 = vmatprep.subr.mxu0 0.0
        %2262 = vmatpush1.msra.mxu0 0.0
        %2263 = vmatprep.subr.mxu0 0.0
        %2264 = vmatpush1.msra.mxu0 0.0
        %2265 = vmatprep.subr.mxu0 0.0
        %2266 = vmatpush1.msra.mxu0 0.0
        %2267 = vmatprep.subr.mxu0 0.0
        %2268 = vmatpush1.msra.mxu0 0.0
        %2269 = vmatprep.subr.mxu0 0.0
        %2270 = vmatpush1.msra.mxu0 0.0
        %2271 = vmatprep.subr.mxu0 0.0
        %2272 = vmatpush1.msra.mxu0 0.0
        %2273 = vmatprep.subr.mxu0 0.0
        %2274 = vmatpush1.msra.mxu0 0.0
        %2275 = vmatprep.subr.mxu0 0.0
        %2276 = vmatpush1.msra.mxu0 0.0
        %2277 = vmatprep.subr.mxu0 0.0
        %2278 = vmatpush1.msra.mxu0 0.0
        %2279 = vmatprep.subr.mxu0 0.0
        %2280 = vmatpush1.msra.mxu0 0.0
        %2281 = vmatprep.subr.mxu0 0.0
        %2282 = vmatpush1.msra.mxu0 0.0
        %2283 = vmatprep.subr.mxu0 0.0
        %2284 = vmatpush1.msra.mxu0 0.0
        %2285 = vmatprep.subr.mxu0 0.0
        %2286 = vmatpush1.msra.mxu0 0.0
        %2287 = vmatprep.subr.mxu0 0.0
        %2288 = vmatpush1.msra.mxu0 0.0
        %2289 = vmatprep.subr.mxu0 0.0
        %2290 = vmatpush1.msra.mxu0 0.0
        %2291 = vmatprep.subr.mxu0 0.0
        %2292 = vmatpush1.msra.mxu0 0.0
        %2293 = vmatprep.mubr.f32.mxu0 0.0
        %2294 = vmatmul.mubr.f32.gmra.mrb[0].mxu0 %v2225
        %v2295 = vpop.f32.mrb[0].mxu0
        %v2296 = vadd.f32 0.0, %v2295
        %v2297 = vpop.f32.mrb[0].mxu0
        %2298 = vdwg.mxu0
        %v2300 = vsel %vm924, %v1742, 0
        %v2302 = vsel %vm928, %v1333, 0
        %2304 = vmatprep.subr.mxu0 0.0
        %2305 = vmatpush1.msra.mxu0 %v2302
        %2306 = vmatprep.subr.mxu0 0.0
        %2307 = vmatpush1.msra.mxu0 0.0
        %2308 = vmatprep.subr.mxu0 0.0
        %2309 = vmatpush1.msra.mxu0 0.0
        %2310 = vmatprep.subr.mxu0 0.0
        %2311 = vmatpush1.msra.mxu0 0.0
        %2312 = vmatprep.subr.mxu0 0.0
        %2313 = vmatpush1.msra.mxu0 0.0
        %2314 = vmatprep.subr.mxu0 0.0
        %2315 = vmatpush1.msra.mxu0 0.0
        %2316 = vmatprep.subr.mxu0 0.0
        %2317 = vmatpush1.msra.mxu0 0.0
        %2318 = vmatprep.subr.mxu0 0.0
        %2319 = vmatpush1.msra.mxu0 0.0
        %2320 = vmatprep.subr.mxu0 0.0
        %2321 = vmatpush1.msra.mxu0 0.0
        %2322 = vmatprep.subr.mxu0 0.0
        %2323 = vmatpush1.msra.mxu0 0.0
        %2324 = vmatprep.subr.mxu0 0.0
        %2325 = vmatpush1.msra.mxu0 0.0
        %2326 = vmatprep.subr.mxu0 0.0
        %2327 = vmatpush1.msra.mxu0 0.0
        %2328 = vmatprep.subr.mxu0 0.0
        %2329 = vmatpush1.msra.mxu0 0.0
        %2330 = vmatprep.subr.mxu0 0.0
        %2331 = vmatpush1.msra.mxu0 0.0
        %2332 = vmatprep.subr.mxu0 0.0
        %2333 = vmatpush1.msra.mxu0 0.0
        %2334 = vmatprep.subr.mxu0 0.0
        %2335 = vmatpush1.msra.mxu0 0.0
        %2336 = vmatprep.subr.mxu0 0.0
        %2337 = vmatpush1.msra.mxu0 0.0
        %2338 = vmatprep.subr.mxu0 0.0
        %2339 = vmatpush1.msra.mxu0 0.0
        %2340 = vmatprep.subr.mxu0 0.0
        %2341 = vmatpush1.msra.mxu0 0.0
        %2342 = vmatprep.subr.mxu0 0.0
        %2343 = vmatpush1.msra.mxu0 0.0
        %2344 = vmatprep.subr.mxu0 0.0
        %2345 = vmatpush1.msra.mxu0 0.0
        %2346 = vmatprep.subr.mxu0 0.0
        %2347 = vmatpush1.msra.mxu0 0.0
        %2348 = vmatprep.subr.mxu0 0.0
        %2349 = vmatpush1.msra.mxu0 0.0
        %2350 = vmatprep.subr.mxu0 0.0
        %2351 = vmatpush1.msra.mxu0 0.0
        %2352 = vmatprep.subr.mxu0 0.0
        %2353 = vmatpush1.msra.mxu0 0.0
        %2354 = vmatprep.subr.mxu0 0.0
        %2355 = vmatpush1.msra.mxu0 0.0
        %2356 = vmatprep.subr.mxu0 0.0
        %2357 = vmatpush1.msra.mxu0 0.0
        %2358 = vmatprep.subr.mxu0 0.0
        %2359 = vmatpush1.msra.mxu0 0.0
        %2360 = vmatprep.subr.mxu0 0.0
        %2361 = vmatpush1.msra.mxu0 0.0
        %2362 = vmatprep.subr.mxu0 0.0
        %2363 = vmatpush1.msra.mxu0 0.0
        %2364 = vmatprep.subr.mxu0 0.0
        %2365 = vmatpush1.msra.mxu0 0.0
        %2366 = vmatprep.subr.mxu0 0.0
        %2367 = vmatpush1.msra.mxu0 0.0
        %2368 = vmatprep.mubr.f32.mxu0 0.0
        %2369 = vmatmul.mubr.f32.gmra.mrb[0].mxu0 %v2300
        %v2370 = vpop.f32.mrb[0].mxu0
        %v2371 = vadd.f32 %v1926, %v2370
        %v2372 = vpop.f32.mrb[0].mxu0
        %2373 = vdwg.mxu0
        %v2374 = vadd.f32 %v2371, %v2111
        %v2375 = vadd.f32 %v2374, %v2296
        %v2376 = vmul.f32 %v2375, %v1241
        %vm2377 = vcmp.gt.f32.partialorder %v2376, 0.0
        %v2378 = vmul.f32 %v2376, 1.442695
        %v2379 = vpow.pop %v2378
        %v2380 = vsub.f32 %v2379, 1.0
        %v2381 = vsel %vm2377, %v2376, %v2380
        %vm2382 = vcmask 125952
        %2383 = vst.msk [vmem:[%s558] sm:$0xf] %vm2382, %v2381
        %v2384 = vand.u32 2147483647, %v1247
        %v2385 = vsel %vm1248, %v2384, -inf
        %2386 = vmax.xlane.f32.xlu0 %v2385
        %v2387 = vpop.xlane.xlu0 %2386
        %vm2388 = vcmp.gt.f32.partialorder %v2387, 0.0
        %v2389 = vsel %vm2388, 1, 0
        %v2390 = vcvt.s32.f32 %v2389
        %v2391 = vrot.slane %v2390, 4
        %v2392 = vadd.f32 %v2390, %v2391
        %v2393 = vrot.slane %v2392, 2
        %v2394 = vadd.f32 %v2392, %v2393
        %v2395 = vrot.slane %v2394, 1
        %v2396 = vadd.f32 %v2394, %v2395
        %v2397 = vmax.f32 %v2396, 1.0
        %v2398 = vsel %vm1248, %v1247, 0.0
        %v2399 = vrot.slane %v2398, 4
        %v2400 = vadd.f32 %v2398, %v2399
        %v2401 = vrot.slane %v2400, 2
        %v2402 = vadd.f32 %v2400, %v2401
        %v2403 = vrot.slane %v2402, 1
        %v2404 = vadd.f32 %v2402, %v2403
        %v2405 = vrcp.pop %v2397
        %v2406 = vmul.f32 %v2404, %v2405
        %vm2407 = vcmask 122880
        %2408 = vst.msk [vmem:[%s564] sm:$0x1] %vm2407, %v2406
        %v2409 = vand.u32 2147483647, %v2381
        %v2410 = vsel %vm2382, %v2409, -inf
        %2411 = vmax.xlane.f32.xlu0 %v2410
        %v2412 = vpop.xlane.xlu0 %2411
        %vm2413 = vcmp.gt.f32.partialorder %v2412, 0.0
        %v2414 = vsel %vm2413, 1, 0
        %v2415 = vcvt.s32.f32 %v2414
        %v2416 = vsel %vm928, %v2415, 0.0
        %v2417 = vrot.slane %v2416, 4
        %v2418 = vadd.f32 %v2416, %v2417
        %v2419 = vrot.slane %v2418, 2
        %v2420 = vadd.f32 %v2418, %v2419
        %v2421 = vrot.slane %v2420, 1
        %v2422 = vadd.f32 %v2420, %v2421
        %v2423 = vmax.f32 %v2422, 1.0
        %v2424 = vsel %vm2382, %v2381, 0.0
        %v2425 = vrot.slane %v2424, 4
        %v2426 = vadd.f32 %v2424, %v2425
        %v2427 = vrot.slane %v2426, 2
        %v2428 = vadd.f32 %v2426, %v2427
        %v2429 = vrot.slane %v2428, 1
        %v2430 = vadd.f32 %v2428, %v2429
        %v2431 = vrcp.pop %v2423
        %v2432 = vmul.f32 %v2430, %v2431
        %2433 = vst.msk [vmem:[%s570] sm:$0x1] %vm2407, %v2432
        %s2434 = sand.u32 %s328, 1
        %s2435 = scalar_lea.sflag [#allocation5], %s2434
        %s2436 = sand.u32 %s328, 1
        %s2437 = smul.addr %s2436, 8
        %s2438 = scalar_lea.vmem [#allocation4], %s2437
        %s2439 = sand.u32 %s43, 1
        %s2440 = scalar_lea.sflag [#allocation7], %s2439
        %s2441 = sand.u32 %s354, 1
        %s2442 = smul.addr %s2441, 4
        %s2443 = scalar_lea.vmem [#allocation6], %s2442
        %s2444 = sand.u32 %s43, 1
        %s2445 = scalar_lea.sflag [#allocation7], %s2444
        %s2446 = sand.u32 %s380, 1
        %s2447 = scalar_lea.vmem [#allocation8], %s2446
        %s2448 = sand.u32 %s406, 1
        %s2449 = scalar_lea.sflag [#allocation10], %s2448
        %s2450 = sand.u32 %s406, 1
        %s2451 = scalar_lea.vmem [#allocation9], %s2450
        // Predicated region
        $region69: #{dual_attention_forward.3} parent=67 // pred_check
          %p2452 = pneg %p338
        $region70: #{dual_attention_forward.3} parent=67 // pred_check_branch
          %2454 = sbr.rel (%p2452) target = $region72
        $region71: #{dual_attention_forward.3} parent=67 // pred_region
          %s2456 = ssub.s32 128, 128
          %2457 = vsyncadd %s2435, %s2456
          %s2458 = smul.addr %s43, 128
          %s2459 = scalar_lea.hbm %s13, %s2458
          %s2461 = sshll.u32 %s2438, 4
          %s2462 = int_to_ptr.vmem [resolvable:$true] %s2461
          %2464 = dma.vmem_to_hbm [thread:$0]  %s2462, 128, %s2459, %s2435
        $region72: #{dual_attention_forward.3} parent=67 // pred_fallthru
          _
        // Predicated region
        $region73: #{dual_attention_forward.3} parent=67 // pred_check
          %p2465 = pneg %p364
        $region74: #{dual_attention_forward.3} parent=67 // pred_check_branch
          %2467 = sbr.rel (%p2465) target = $region76
        $region75: #{dual_attention_forward.3} parent=67 // pred_region
          %s2469 = ssub.s32 64, 64
          %2470 = vsyncadd %s2440, %s2469
          %s2471 = smul.addr %s43, 64
          %s2472 = scalar_lea.hbm %s14, %s2471
          %s2474 = sshll.u32 %s2443, 4
          %s2475 = int_to_ptr.vmem [resolvable:$true] %s2474
          %2477 = dma.vmem_to_hbm [thread:$0]  %s2475, 64, %s2472, %s2440
        $region76: #{dual_attention_forward.3} parent=67 // pred_fallthru
          _
        // Predicated region
        $region77: #{dual_attention_forward.3} parent=67 // pred_check
          %p2478 = pneg %p390
        $region78: #{dual_attention_forward.3} parent=67 // pred_check_branch
          %2480 = sbr.rel (%p2478) target = $region80
        $region79: #{dual_attention_forward.3} parent=67 // pred_region
          %s2482 = ssub.s32 16, 16
          %2483 = vsyncadd %s2445, %s2482
          %s2484 = smul.addr %s43, 16
          %s2485 = scalar_lea.hbm %s15, %s2484
          %s2487 = sshll.u32 %s2447, 4
          %s2488 = int_to_ptr.vmem [resolvable:$true] %s2487
          %2490 = dma.vmem_to_hbm [thread:$0]  %s2488, 16, %s2485, %s2445
        $region80: #{dual_attention_forward.3} parent=67 // pred_fallthru
          _
        // Predicated region
        $region81: #{dual_attention_forward.3} parent=67 // pred_check
          %p2491 = pneg %p416
        $region82: #{dual_attention_forward.3} parent=67 // pred_check_branch
          %2493 = sbr.rel (%p2491) target = $region84
        $region83: #{dual_attention_forward.3} parent=67 // pred_region
          %s2495 = ssub.s32 16, 16
          %2496 = vsyncadd %s2449, %s2495
          %s2497 = smul.addr %s43, 16
          %s2498 = scalar_lea.hbm %s16, %s2497
          %s2500 = sshll.u32 %s2451, 4
          %s2501 = int_to_ptr.vmem [resolvable:$true] %s2500
          %2503 = dma.vmem_to_hbm [thread:$0]  %s2501, 16, %s2498, %s2449
        $region84: #{dual_attention_forward.3} parent=67 // pred_fallthru
          _
      $region68: #{dual_attention_forward.3} parent=5 // pred_fallthru
        _
      %p2504 = scmp.le.s32.totalorder 2, %s38
      // Predicated region
      $region85: #{dual_attention_forward.3} parent=5 // pred_check
        %p2505 = pneg %p2504
      $region86: #{dual_attention_forward.3} parent=5 // pred_check_branch
        %2507 = sbr.rel (%p2505) target = $region88
      $region87: #{dual_attention_forward.3} parent=5 // pred_region
        %s2508 = ssub.s32 %s38, 2
        // Predicated region
        $region89: #{dual_attention_forward.3} parent=87 // pred_check
          %p2509 = pneg %p344
        $region90: #{dual_attention_forward.3} parent=87 // pred_check_branch
          %2511 = sbr.rel (%p2509) target = $region92
        $region91: #{dual_attention_forward.3} parent=87 // pred_region
          %s2512 = sand.u32 %s329, 1
          %s2513 = scalar_lea.sflag [#allocation5], %s2512
          %s2514 = sand.u32 %s329, 1
          %s2515 = smul.addr %s2514, 8
          %s2516 = scalar_lea.vmem [#allocation4], %s2515
          %2517 = dma.done %s2513, 128
        $region92: #{dual_attention_forward.3} parent=87 // pred_fallthru
          _
        // Predicated region
        $region93: #{dual_attention_forward.3} parent=87 // pred_check
          %p2518 = pneg %p370
        $region94: #{dual_attention_forward.3} parent=87 // pred_check_branch
          %2520 = sbr.rel (%p2518) target = $region96
        $region95: #{dual_attention_forward.3} parent=87 // pred_region
          %s2521 = sand.u32 %s44, 1
          %s2522 = scalar_lea.sflag [#allocation7], %s2521
          %s2523 = sand.u32 %s355, 1
          %s2524 = smul.addr %s2523, 4
          %s2525 = scalar_lea.vmem [#allocation6], %s2524
          %2526 = dma.done %s2522, 64
        $region96: #{dual_attention_forward.3} parent=87 // pred_fallthru
          _
        // Predicated region
        $region97: #{dual_attention_forward.3} parent=87 // pred_check
          %p2527 = pneg %p396
        $region98: #{dual_attention_forward.3} parent=87 // pred_check_branch
          %2529 = sbr.rel (%p2527) target = $region100
        $region99: #{dual_attention_forward.3} parent=87 // pred_region
          %s2530 = sand.u32 %s44, 1
          %s2531 = scalar_lea.sflag [#allocation7], %s2530
          %s2532 = sand.u32 %s381, 1
          %s2533 = scalar_lea.vmem [#allocation8], %s2532
          %2534 = dma.done %s2531, 16
        $region100: #{dual_attention_forward.3} parent=87 // pred_fallthru
          _
        // Predicated region
        $region101: #{dual_attention_forward.3} parent=87 // pred_check
          %p2535 = pneg %p422
        $region102: #{dual_attention_forward.3} parent=87 // pred_check_branch
          %2537 = sbr.rel (%p2535) target = $region104
        $region103: #{dual_attention_forward.3} parent=87 // pred_region
          %s2538 = sand.u32 %s407, 1
          %s2539 = scalar_lea.sflag [#allocation10], %s2538
          %s2540 = sand.u32 %s407, 1
          %s2541 = scalar_lea.vmem [#allocation9], %s2540
          %2542 = dma.done %s2539, 16
        $region104: #{dual_attention_forward.3} parent=87 // pred_fallthru
          _
      $region88: #{dual_attention_forward.3} parent=5 // pred_fallthru
        _
    $region6: #{dual_attention_forward.3} parent=1 // loop_footer
      %s42 = sadd.s32 1, %s38
    $region7: #{dual_attention_forward.3} parent=1 // loop_footer_branch
      %37 = sbr.rel target = $region3
    $region8: #{dual_attention_forward.3} parent=1 // loop_exit
      _
    %2543 = vsyncpa [#allocation5], 1
    %s2544 = scalar_lea.sflag [#allocation5], 1
    %2545 = vsyncpa %s2544, 1
    %2546 = vsyncpa [#allocation7], 1
    %s2547 = scalar_lea.sflag [#allocation7], 1
    %2548 = vsyncpa %s2547, 1
    %2549 = vsyncpa [#allocation10], 1
    %s2550 = scalar_lea.sflag [#allocation10], 1
    %2551 = vsyncpa %s2550, 1

</llo_original>
